<compile_context>
chip_gen: v7x
topology: tpu7x:2x2x1
jax: 0.10.0
libtpu: 0.0.40
codegen_flags: <defaults>
</compile_context>

<pallas_src>
import jax
import jax.numpy as jnp
from jax import lax
from jax.experimental import pallas as pl
from jax.experimental.pallas import tpu as pltpu

# ----------------------------- model configuration -----------------------------
NUM_DIM = 2                      # configs['num_dim']
NUM_PER_DIM = [3, 4]             # configs['num_per_dim']
DIM_LABEL_EMB = 8                # configs['dim_label_emb']  (E)
ATT_EMB = 32                     # configs['att_emb']        (H)
NUM_FEATURE = 16                 # configs['num_feature']    (F)
BATCH = 2                        # batch size N


def get_mapping():
    mapping, inv = [], {}
    for i in range(NUM_DIM):
        inv[i] = {}
        for j in range(i, NUM_DIM):
            inv[i][j] = len(mapping)
            mapping.append((i, j))
    return mapping, inv


MAPPING, INV_MAPPING = get_mapping()
NUM_PAIRWISE_DIM = len(MAPPING)                   # 3: (0,0), (0,1), (1,1)
assert NUM_DIM == 2 and NUM_PAIRWISE_DIM == 3     # fused kernel specialized to 2 dims

# ------------------------------ layout constants ------------------------------
N_BLOCK = 8            # batch rows per grid step (sublane tile)
P_PAD = 8              # padded pairwise-dim rows fed to the attention net
LANES = 128            # lane-dense width for head logits / output slab

HEAD_WIDTHS = [NUM_PER_DIM[d0] if d0 == d1 else NUM_PER_DIM[d0] * NUM_PER_DIM[d1]
               for (d0, d1) in MAPPING]           # [3, 12, 4]
SEG = []
_off = 0
for _w in HEAD_WIDTHS:
    SEG.append((_off, _off + _w))
    _off += _w
assert _off <= LANES
C1 = NUM_PER_DIM[MAPPING[1][1]]                   # second factor of the cross head (4)


# ------------------------------- fused Pallas kernel -------------------------------
def _mynet_fused_kernel(x_ref, wf_ref, bf_ref, de_ref, wa_ref, ba_ref,
                        ws_ref, bs_ref, wh_ref, bh_ref, o_ref):
    f32 = jnp.float32
    nb = x_ref.shape[0]                 # batch rows in this block (8)
    assert nb & (nb - 1) == 0
    shift = nb.bit_length() - 1
    p = NUM_PAIRWISE_DIM
    pn = p * nb

    # --- DimensionSpecificModel.feature_net: relu(X @ Wf + bf) ------------------
    fea = jnp.maximum(
        jnp.dot(x_ref[...], wf_ref[...], preferred_element_type=f32) + bf_ref[...],
        0.0)                                                          # (nb, H)

    # --- attention_net: sigmoid(pairwise_dim_emb @ Wa + ba) ---------------------
    atten = jax.nn.sigmoid(
        jnp.dot(de_ref[...], wa_ref[...], preferred_element_type=f32) + ba_ref[...])  # (P_PAD, H)

    # --- dim_specific_net over a stacked (p*nb, H) slab (single matmul) ---------
    # atten row replication via a tiny selection matmul (avoids sub-tile slices).
    rr = lax.broadcasted_iota(jnp.int32, (pn, P_PAD), 0) >> shift     # row group id
    cc = lax.broadcasted_iota(jnp.int32, (pn, P_PAD), 1)
    rep = jnp.where(cc == rr, 1.0, 0.0)                               # (pn, P_PAD)
    atten_rep = jnp.dot(rep, atten, preferred_element_type=f32)       # (pn, H)
    fea_rep = jnp.concatenate([fea] * p, axis=0)                      # (pn, H)
    spec = fea_rep * atten_rep                                        # (pn, H)
    hid = jnp.maximum(
        jnp.dot(spec, ws_ref[...], preferred_element_type=f32) + bs_ref[...], 0.0)  # (pn, H)

    # --- all heads at once against the lane-concatenated head weights ----------
    logits = jnp.dot(hid, wh_ref[...], preferred_element_type=f32) + bh_ref[...]    # (pn, 128)

    # --- segmented softmax: group g of rows only over its head's lane segment ---
    ri = lax.broadcasted_iota(jnp.int32, (pn, LANES), 0)
    ci = lax.broadcasted_iota(jnp.int32, (pn, LANES), 1)
    g = ri >> shift
    seg_lo = jnp.where(g == 0, SEG[0][0], jnp.where(g == 1, SEG[1][0], SEG[2][0]))
    seg_hi = jnp.where(g == 0, SEG[0][1], jnp.where(g == 1, SEG[1][1], SEG[2][1]))
    mask = (ci >= seg_lo) & (ci < seg_hi)
    masked_logits = jnp.where(mask, logits, jnp.float32(-1e30))
    mx = jnp.max(masked_logits, axis=-1, keepdims=True)
    ex = jnp.exp(masked_logits - mx)                 # exactly 0 outside the segment
    denom = jnp.sum(ex, axis=-1, keepdims=True)
    probs = ex * pl.reciprocal(denom, approx=True)   # (pn, 128), zero off-segment

    # --- 'average' marginalization fused in-kernel ------------------------------
    # p0: head (0,0) probs at lanes SEG[0];  p1: head (0,1), flat index a*C1+b at
    # lanes SEG[1];  p2: head (1,1) at lanes SEG[2].  The two marginal sums of p1
    # target disjoint lane segments (SEG[0] and SEG[2]), so a single (128,128)
    # summation matrix / single MXU pass covers both.
    p0 = probs[0 * nb:1 * nb, :]
    p1 = probs[1 * nb:2 * nb, :]
    p2 = probs[2 * nb:3 * nb, :]

    kj = lax.broadcasted_iota(jnp.int32, (LANES, LANES), 0)   # source lane
    kk = lax.broadcasted_iota(jnp.int32, (LANES, LANES), 1)   # destination lane
    in_cross = (kj >= SEG[1][0]) & (kj < SEG[1][1])
    rel = kj - SEG[1][0]
    if C1 & (C1 - 1) == 0:
        a_idx = rel >> (C1.bit_length() - 1)
        b_idx = rel & (C1 - 1)
    else:
        a_idx = rel // C1
        b_idx = rel - a_idx * C1
    # sum over dim1 (b) -> lanes SEG[0];  sum over dim0 (a) -> lanes SEG[2]
    sum_mat = jnp.where(in_cross & ((kk == a_idx) | (kk == SEG[2][0] + b_idx)), 1.0, 0.0)

    # pred for dim0 occupies lanes SEG[0]; pred for dim1 occupies lanes SEG[2];
    # the segments are disjoint so both fit in one lane-dense (nb, 128) slab.
    o_ref[...] = p0 + p2 + jnp.dot(p1, sum_mat, preferred_element_type=f32)


def _fused_forward(x_pad, kp):
    """Single pallas_call over a batch grid; emits a lane-dense (n_pad, 128) slab."""
    n_pad = x_pad.shape[0]
    H, E, F = ATT_EMB, DIM_LABEL_EMB, NUM_FEATURE
    grid = (n_pad // N_BLOCK,)
    return pl.pallas_call(
        _mynet_fused_kernel,
        grid=grid,
        in_specs=[
            pl.BlockSpec((N_BLOCK, F), lambda b: (b, 0)),        # X (batch-blocked)
            pl.BlockSpec((F, H), lambda b: (0, 0)),              # w_feat
            pl.BlockSpec((1, H), lambda b: (0, 0)),              # b_feat
            pl.BlockSpec((P_PAD, E), lambda b: (0, 0)),          # pairwise_dim_emb (padded)
            pl.BlockSpec((E, H), lambda b: (0, 0)),              # w_att
            pl.BlockSpec((1, H), lambda b: (0, 0)),              # b_att
            pl.BlockSpec((H, H), lambda b: (0, 0)),              # w_spec
            pl.BlockSpec((1, H), lambda b: (0, 0)),              # b_spec
            pl.BlockSpec((H, LANES), lambda b: (0, 0)),          # concatenated head W
            pl.BlockSpec((1, LANES), lambda b: (0, 0)),          # concatenated head b
        ],
        out_specs=pl.BlockSpec((N_BLOCK, LANES), lambda b: (b, 0)),
        out_shape=jax.ShapeDtypeStruct((n_pad, LANES), jnp.float32),
        compiler_params=pltpu.CompilerParams(
            dimension_semantics=("parallel",)),  # batch axis -> both v7x TCs as batch grows
    )(x_pad, kp["w_feat"], kp["b_feat"], kp["dim_emb"], kp["w_att"], kp["b_att"],
      kp["w_spec"], kp["b_spec"], kp["w_head_cat"], kp["b_head_cat"])


# ------------------------------- parameter setup -------------------------------
def _xavier_uniform(key, fan_in, fan_out):
    bound = (6.0 / (fan_in + fan_out)) ** 0.5
    return jax.random.uniform(key, (fan_in, fan_out), jnp.float32, -bound, bound)


def init_params(key):
    keys = iter(jax.random.split(key, 32))
    params = {}

    # Encoders: label embeddings (torch.randn) + co-occurrence statistics.
    label_embs, coocs = [], []
    for (d0, d1) in MAPPING:
        c0, c1 = NUM_PER_DIM[d0], NUM_PER_DIM[d1]
        if d0 == d1:
            label_embs.append(jax.random.normal(next(keys), (DIM_LABEL_EMB, c0), jnp.float32))
            coocs.append(jax.random.uniform(next(keys), (c0, c0), jnp.float32))
        else:
            label_embs.append(jax.random.normal(next(keys), (DIM_LABEL_EMB * c0, c1), jnp.float32))
            coocs.append(jax.random.uniform(next(keys), (c0, c1), jnp.float32))
    params["label_emb"] = label_embs
    params["cooc"] = coocs

    # DimensionSpecificModel
    params["w_feat"] = _xavier_uniform(next(keys), NUM_FEATURE, ATT_EMB)
    params["b_feat"] = jnp.zeros((1, ATT_EMB), jnp.float32)
    params["w_att"] = 0.1 * jax.random.normal(next(keys), (DIM_LABEL_EMB, ATT_EMB), jnp.float32)
    params["b_att"] = jnp.zeros((1, ATT_EMB), jnp.float32)
    params["w_spec"] = _xavier_uniform(next(keys), ATT_EMB, ATT_EMB)
    params["b_spec"] = jnp.zeros((1, ATT_EMB), jnp.float32)

    # Per-pairwise-dim heads (Linear only: with_output_nonlineartity=False)
    w_heads, b_heads = [], []
    for (d0, d1) in MAPPING:
        cout = NUM_PER_DIM[d0] if d0 == d1 else NUM_PER_DIM[d0] * NUM_PER_DIM[d1]
        w_heads.append(_xavier_uniform(next(keys), ATT_EMB, cout))
        b_heads.append(jnp.zeros((1, cout), jnp.float32))
    params["w_head"] = w_heads
    params["b_head"] = b_heads
    return params


def pack_params(params):
    """Param-only precomputation (done ONCE, outside the per-X hot path)."""
    E, H = DIM_LABEL_EMB, ATT_EMB

    # Encoder pairwise dimension embeddings (eval mode, dropout = identity).
    rows = []
    for i, (d0, d1) in enumerate(MAPPING):
        emb, cooc = params["label_emb"][i], params["cooc"][i]
        if d0 == d1:
            # MonoEncoder: dim_emb = label_emb @ cooc.sum(0)
            rows.append(emb @ cooc.sum(axis=0))
        else:
            # PairwiseEncoder: sum_i sum_j cooc[i,j] * emb[i*E:(i+1)*E, j]
            c0, c1 = NUM_PER_DIM[d0], NUM_PER_DIM[d1]
            rows.append(jnp.einsum("iej,ij->e", emb.reshape(c0, E, c1), cooc))
    dim_emb = jnp.zeros((P_PAD, E), jnp.float32).at[:NUM_PAIRWISE_DIM, :].set(
        jnp.stack(rows, axis=0))                                      # (P_PAD, E)

    # Lane-concatenated, 128-lane-padded head weights/biases.
    w_head_cat = jnp.zeros((H, LANES), jnp.float32)
    b_head_cat = jnp.zeros((1, LANES), jnp.float32)
    for i, (lo, hi) in enumerate(SEG):
        w_head_cat = w_head_cat.at[:, lo:hi].set(params["w_head"][i])
        b_head_cat = b_head_cat.at[:, lo:hi].set(params["b_head"][i])

    return {
        "dim_emb": dim_emb,
        "w_feat": params["w_feat"], "b_feat": params["b_feat"],
        "w_att": params["w_att"], "b_att": params["b_att"],
        "w_spec": params["w_spec"], "b_spec": params["b_spec"],
        "w_head_cat": w_head_cat, "b_head_cat": b_head_cat,
        "pairwise_label_emb": [params["label_emb"][i]
                               for i, (d0, d1) in enumerate(MAPPING) if d0 != d1],
    }


# ------------------------------- forward (wrapper) -------------------------------
@jax.jit
def mynet_forward(packed, X):
    n = X.shape[0]
    n_pad = max(N_BLOCK, ((n + N_BLOCK - 1) // N_BLOCK) * N_BLOCK)
    x_pad = jnp.zeros((n_pad, NUM_FEATURE), jnp.float32).at[:n, :].set(X)

    out = _fused_forward(x_pad, packed)                    # (n_pad, 128)
    pred0 = out[:n, SEG[0][0]:SEG[0][1]]                   # (n, num_per_dim[0]) at lanes SEG[0]
    pred1 = out[:n, SEG[2][0]:SEG[2][1]]                   # (n, num_per_dim[1]) at lanes SEG[2]
    return packed["pairwise_label_emb"], [pred0, pred1]


# ---------------------------- plain-JAX reference ----------------------------
def mynet_reference(params, X):
    rows = []
    for i, (d0, d1) in enumerate(MAPPING):
        emb, cooc = params["label_emb"][i], params["cooc"][i]
        if d0 == d1:
            rows.append(emb @ cooc.sum(axis=0))
        else:
            c0, c1 = NUM_PER_DIM[d0], NUM_PER_DIM[d1]
            rows.append(jnp.einsum("iej,ij->e", emb.reshape(c0, DIM_LABEL_EMB, c1), cooc))
    dim_emb_T = jnp.stack(rows, axis=0)                                  # (P, E)

    fea = jax.nn.relu(X @ params["w_feat"] + params["b_feat"])           # (N, H)
    atten = jax.nn.sigmoid(dim_emb_T @ params["w_att"] + params["b_att"])  # (P, H)
    spec = fea[:, None, :] * atten[None, :, :]                           # (N, P, H)
    spec = jax.nn.relu(spec @ params["w_spec"] + params["b_spec"])       # (N, P, H)

    joint = []
    for i, (d0, d1) in enumerate(MAPPING):
        y = spec[:, i, :] @ params["w_head"][i] + params["b_head"][i]
        p = jax.nn.softmax(y, axis=1)
        if d0 != d1:
            p = p.reshape(-1, NUM_PER_DIM[d0], NUM_PER_DIM[d1])
        joint.append(p)

    preds = []
    for dim in range(NUM_DIM):
        acc = 0.0
        for cond in range(NUM_DIM):
            if cond == dim:
                m = joint[INV_MAPPING[dim][dim]]
            elif cond < dim:
                m = joint[INV_MAPPING[cond][dim]].sum(axis=1)
            else:
                m = joint[INV_MAPPING[dim][cond]].sum(axis=2)
            acc = acc + m
        preds.append(acc)
    return preds


# ------------------------------------- main -------------------------------------
if __name__ == "__main__":
    key = jax.random.PRNGKey(0)
    pkey, xkey = jax.random.split(key)
    params = init_params(pkey)
    X = jax.random.normal(xkey, (BATCH, NUM_FEATURE), jnp.float32)

    with jax.default_matmul_precision("float32"):
        packed = pack_params(params)
        pairwise_label_emb_list, pred_probs = mynet_forward(packed, X)
        jax.block_until_ready(pred_probs)

        # shape sanity checks vs. the PyTorch reference
        assert len(pairwise_label_emb_list) == 1
        assert pairwise_label_emb_list[0].shape == (DIM_LABEL_EMB * NUM_PER_DIM[0], NUM_PER_DIM[1])
        assert pred_probs[0].shape == (BATCH, NUM_PER_DIM[0])
        assert pred_probs[1].shape == (BATCH, NUM_PER_DIM[1])

        # numeric sanity vs. plain-JAX reference (loose tol: approx EUP reciprocal)
        ref_preds = mynet_reference(params, X)
        for got, want in zip(pred_probs, ref_preds):
            err = float(jnp.max(jnp.abs(got - want)))
            assert err < 2e-2, f"mismatch vs reference: max abs err {err}"

    print("KERNEL_OK")
</pallas_src>

<mosaic_0001>
module attributes {stable_mosaic.version = 11 : i64} {
  func.func @_mynet_fused_kernel(%arg0: i32, %arg1: memref<8x16xf32, #tpu.memory_space<vmem>>, %arg2: memref<16x32xf32, #tpu.memory_space<vmem>>, %arg3: memref<1x32xf32, #tpu.memory_space<vmem>>, %arg4: memref<8x8xf32, #tpu.memory_space<vmem>>, %arg5: memref<8x32xf32, #tpu.memory_space<vmem>>, %arg6: memref<1x32xf32, #tpu.memory_space<vmem>>, %arg7: memref<32x32xf32, #tpu.memory_space<vmem>>, %arg8: memref<1x32xf32, #tpu.memory_space<vmem>>, %arg9: memref<32x128xf32, #tpu.memory_space<vmem>>, %arg10: memref<1x128xf32, #tpu.memory_space<vmem>>, %arg11: memref<8x128xf32, #tpu.memory_space<vmem>>) attributes {dimension_semantics = [#tpu.dimension_semantics<parallel>], iteration_bounds = array<i64: 1>, scalar_prefetch = 0 : i64, scratch_operands = 0 : i64, tpu.core_type = #tpu.core_type<tc>, window_params = [{transform_indices = @transform_0, window_bounds = array<i64: 8, 16>}, {pipeline_mode = #tpu.pipeline_mode<synchronous>, transform_indices = @transform_1, window_bounds = array<i64: 16, 32>}, {pipeline_mode = #tpu.pipeline_mode<synchronous>, transform_indices = @transform_2, window_bounds = array<i64: 1, 32>}, {pipeline_mode = #tpu.pipeline_mode<synchronous>, transform_indices = @transform_3, window_bounds = array<i64: 8, 8>}, {pipeline_mode = #tpu.pipeline_mode<synchronous>, transform_indices = @transform_4, window_bounds = array<i64: 8, 32>}, {pipeline_mode = #tpu.pipeline_mode<synchronous>, transform_indices = @transform_5, window_bounds = array<i64: 1, 32>}, {pipeline_mode = #tpu.pipeline_mode<synchronous>, transform_indices = @transform_6, window_bounds = array<i64: 32, 32>}, {pipeline_mode = #tpu.pipeline_mode<synchronous>, transform_indices = @transform_7, window_bounds = array<i64: 1, 32>}, {pipeline_mode = #tpu.pipeline_mode<synchronous>, transform_indices = @transform_8, window_bounds = array<i64: 32, 128>}, {pipeline_mode = #tpu.pipeline_mode<synchronous>, transform_indices = @transform_9, window_bounds = array<i64: 1, 128>}, {transform_indices = @transform_10, window_bounds = array<i64: 8, 128>}]} {
    %c0 = arith.constant 0 : index
    %c0_0 = arith.constant 0 : index
    %0 = vector.load %arg1[%c0, %c0_0] : memref<8x16xf32, #tpu.memory_space<vmem>>, vector<8x16xf32>
    %c0_1 = arith.constant 0 : index
    %c0_2 = arith.constant 0 : index
    %1 = vector.load %arg2[%c0_1, %c0_2] : memref<16x32xf32, #tpu.memory_space<vmem>>, vector<16x32xf32>
    %cst = arith.constant dense<0.000000e+00> : vector<8x32xf32>
    %2 = tpu.matmul %0, %1, %cst {dimension_numbers = #tpu.dot_dimension_numbers<[1], [0], [0], [1], [0, 0, 1, 1], [], []>, precision = #tpu.contract_precision<fp32>} : vector<8x16xf32>, vector<16x32xf32>, vector<8x32xf32> -> vector<8x32xf32>
    %c0_3 = arith.constant 0 : index
    %c0_4 = arith.constant 0 : index
    %3 = vector.load %arg3[%c0_3, %c0_4] : memref<1x32xf32, #tpu.memory_space<vmem>>, vector<1x32xf32>
    %4 = vector.broadcast %3 : vector<1x32xf32> to vector<8x32xf32>
    %5 = arith.addf %2, %4 : vector<8x32xf32>
    %cst_5 = arith.constant 0.000000e+00 : f32
    %6 = vector.broadcast %cst_5 : f32 to vector<8x32xf32>
    %7 = arith.maximumf %5, %6 : vector<8x32xf32>
    %c0_6 = arith.constant 0 : index
    %c0_7 = arith.constant 0 : index
    %8 = vector.load %arg4[%c0_6, %c0_7] : memref<8x8xf32, #tpu.memory_space<vmem>>, vector<8x8xf32>
    %c0_8 = arith.constant 0 : index
    %c0_9 = arith.constant 0 : index
    %9 = vector.load %arg5[%c0_8, %c0_9] : memref<8x32xf32, #tpu.memory_space<vmem>>, vector<8x32xf32>
    %cst_10 = arith.constant dense<0.000000e+00> : vector<8x32xf32>
    %10 = tpu.matmul %8, %9, %cst_10 {dimension_numbers = #tpu.dot_dimension_numbers<[1], [0], [0], [1], [0, 0, 1, 1], [], []>, precision = #tpu.contract_precision<fp32>} : vector<8x8xf32>, vector<8x32xf32>, vector<8x32xf32> -> vector<8x32xf32>
    %c0_11 = arith.constant 0 : index
    %c0_12 = arith.constant 0 : index
    %11 = vector.load %arg6[%c0_11, %c0_12] : memref<1x32xf32, #tpu.memory_space<vmem>>, vector<1x32xf32>
    %12 = vector.broadcast %11 : vector<1x32xf32> to vector<8x32xf32>
    %13 = arith.addf %10, %12 : vector<8x32xf32>
    %14 = arith.negf %13 : vector<8x32xf32>
    %15 = math.exp %14 : vector<8x32xf32>
    %cst_13 = arith.constant 1.000000e+00 : f32
    %16 = vector.broadcast %cst_13 : f32 to vector<8x32xf32>
    %17 = arith.addf %16, %15 : vector<8x32xf32>
    %18 = arith.divf %16, %17 : vector<8x32xf32>
    %19 = tpu.iota {dimensions = array<i32: 0>} : vector<24x8xi32>
    %c3_i32 = arith.constant 3 : i32
    %20 = vector.broadcast %c3_i32 : i32 to vector<24x8xi32>
    %21 = arith.shrsi %19, %20 : vector<24x8xi32>
    %22 = tpu.iota {dimensions = array<i32: 1>} : vector<24x8xi32>
    %23 = arith.cmpi eq, %22, %21 : vector<24x8xi32>
    %cst_14 = arith.constant 1.000000e+00 : f32
    %cst_15 = arith.constant 0.000000e+00 : f32
    %24 = vector.broadcast %cst_14 : f32 to vector<24x8xf32>
    %25 = vector.broadcast %cst_15 : f32 to vector<24x8xf32>
    %26 = arith.select %23, %24, %25 : vector<24x8xi1>, vector<24x8xf32>
    %cst_16 = arith.constant dense<0.000000e+00> : vector<24x32xf32>
    %27 = tpu.matmul %26, %18, %cst_16 {dimension_numbers = #tpu.dot_dimension_numbers<[1], [0], [0], [1], [0, 0, 1, 1], [], []>, precision = #tpu.contract_precision<fp32>} : vector<24x8xf32>, vector<8x32xf32>, vector<24x32xf32> -> vector<24x32xf32>
    %28 = tpu.concatenate %7, %7, %7 in 0 : vector<8x32xf32>, vector<8x32xf32>, vector<8x32xf32> -> vector<24x32xf32>
    %29 = arith.mulf %28, %27 : vector<24x32xf32>
    %c0_17 = arith.constant 0 : index
    %c0_18 = arith.constant 0 : index
    %30 = vector.load %arg7[%c0_17, %c0_18] : memref<32x32xf32, #tpu.memory_space<vmem>>, vector<32x32xf32>
    %cst_19 = arith.constant dense<0.000000e+00> : vector<24x32xf32>
    %31 = tpu.matmul %29, %30, %cst_19 {dimension_numbers = #tpu.dot_dimension_numbers<[1], [0], [0], [1], [0, 0, 1, 1], [], []>, precision = #tpu.contract_precision<fp32>} : vector<24x32xf32>, vector<32x32xf32>, vector<24x32xf32> -> vector<24x32xf32>
    %c0_20 = arith.constant 0 : index
    %c0_21 = arith.constant 0 : index
    %32 = vector.load %arg8[%c0_20, %c0_21] : memref<1x32xf32, #tpu.memory_space<vmem>>, vector<1x32xf32>
    %33 = vector.broadcast %32 : vector<1x32xf32> to vector<24x32xf32>
    %34 = arith.addf %31, %33 : vector<24x32xf32>
    %cst_22 = arith.constant 0.000000e+00 : f32
    %35 = vector.broadcast %cst_22 : f32 to vector<24x32xf32>
    %36 = arith.maximumf %34, %35 : vector<24x32xf32>
    %c0_23 = arith.constant 0 : index
    %c0_24 = arith.constant 0 : index
    %37 = vector.load %arg9[%c0_23, %c0_24] : memref<32x128xf32, #tpu.memory_space<vmem>>, vector<32x128xf32>
    %cst_25 = arith.constant dense<0.000000e+00> : vector<24x128xf32>
    %38 = tpu.matmul %36, %37, %cst_25 {dimension_numbers = #tpu.dot_dimension_numbers<[1], [0], [0], [1], [0, 0, 1, 1], [], []>, precision = #tpu.contract_precision<fp32>} : vector<24x32xf32>, vector<32x128xf32>, vector<24x128xf32> -> vector<24x128xf32>
    %c0_26 = arith.constant 0 : index
    %c0_27 = arith.constant 0 : index
    %39 = vector.load %arg10[%c0_26, %c0_27] : memref<1x128xf32, #tpu.memory_space<vmem>>, vector<1x128xf32>
    %40 = vector.broadcast %39 : vector<1x128xf32> to vector<24x128xf32>
    %41 = arith.addf %38, %40 : vector<24x128xf32>
    %42 = tpu.iota {dimensions = array<i32: 0>} : vector<24x128xi32>
    %43 = tpu.iota {dimensions = array<i32: 1>} : vector<24x128xi32>
    %c3_i32_28 = arith.constant 3 : i32
    %44 = vector.broadcast %c3_i32_28 : i32 to vector<24x128xi32>
    %45 = arith.shrsi %42, %44 : vector<24x128xi32>
    %c0_i32 = arith.constant 0 : i32
    %46 = vector.broadcast %c0_i32 : i32 to vector<24x128xi32>
    %47 = arith.cmpi eq, %45, %46 : vector<24x128xi32>
    %c1_i32 = arith.constant 1 : i32
    %48 = vector.broadcast %c1_i32 : i32 to vector<24x128xi32>
    %49 = arith.cmpi eq, %45, %48 : vector<24x128xi32>
    %c3_i32_29 = arith.constant 3 : i32
    %c15_i32 = arith.constant 15 : i32
    %50 = vector.broadcast %c3_i32_29 : i32 to vector<24x128xi32>
    %51 = vector.broadcast %c15_i32 : i32 to vector<24x128xi32>
    %52 = arith.select %49, %50, %51 : vector<24x128xi1>, vector<24x128xi32>
    %c0_i32_30 = arith.constant 0 : i32
    %53 = vector.broadcast %c0_i32_30 : i32 to vector<24x128xi32>
    %54 = arith.select %47, %53, %52 : vector<24x128xi1>, vector<24x128xi32>
    %c0_i32_31 = arith.constant 0 : i32
    %55 = vector.broadcast %c0_i32_31 : i32 to vector<24x128xi32>
    %56 = arith.cmpi eq, %45, %55 : vector<24x128xi32>
    %c1_i32_32 = arith.constant 1 : i32
    %57 = vector.broadcast %c1_i32_32 : i32 to vector<24x128xi32>
    %58 = arith.cmpi eq, %45, %57 : vector<24x128xi32>
    %c15_i32_33 = arith.constant 15 : i32
    %c19_i32 = arith.constant 19 : i32
    %59 = vector.broadcast %c15_i32_33 : i32 to vector<24x128xi32>
    %60 = vector.broadcast %c19_i32 : i32 to vector<24x128xi32>
    %61 = arith.select %58, %59, %60 : vector<24x128xi1>, vector<24x128xi32>
    %c3_i32_34 = arith.constant 3 : i32
    %62 = vector.broadcast %c3_i32_34 : i32 to vector<24x128xi32>
    %63 = arith.select %56, %62, %61 : vector<24x128xi1>, vector<24x128xi32>
    %64 = arith.cmpi sge, %43, %54 : vector<24x128xi32>
    %65 = arith.cmpi slt, %43, %63 : vector<24x128xi32>
    %66 = arith.andi %64, %65 : vector<24x128xi1>
    %cst_35 = arith.constant -1.000000e+30 : f32
    %67 = vector.broadcast %cst_35 : f32 to vector<24x128xf32>
    %68 = arith.select %66, %41, %67 : vector<24x128xi1>, vector<24x128xf32>
    %cst_36 = arith.constant dense<0xFF800000> : vector<24xf32>
    %69 = vector.multi_reduction <maximumf>, %68, %cst_36 [1] : vector<24x128xf32> to vector<24xf32>
    %70 = vector.shape_cast %69 : vector<24xf32> to vector<24x1xf32>
    %71 = vector.broadcast %70 : vector<24x1xf32> to vector<24x128xf32>
    %72 = arith.subf %68, %71 : vector<24x128xf32>
    %73 = math.exp %72 : vector<24x128xf32>
    %cst_37 = arith.constant dense<0.000000e+00> : vector<24xf32>
    %74 = vector.multi_reduction <add>, %73, %cst_37 [1] : vector<24x128xf32> to vector<24xf32>
    %75 = vector.shape_cast %74 : vector<24xf32> to vector<24x1xf32>
    %76 = tpu.reciprocal %75 {approx = true} : vector<24x1xf32> -> vector<24x1xf32>
    %77 = vector.broadcast %76 : vector<24x1xf32> to vector<24x128xf32>
    %78 = arith.mulf %73, %77 : vector<24x128xf32>
    %79 = vector.extract_strided_slice %78 {offsets = [0, 0], sizes = [8, 128], strides = [1, 1]} : vector<24x128xf32> to vector<8x128xf32>
    %80 = vector.extract_strided_slice %78 {offsets = [8, 0], sizes = [8, 128], strides = [1, 1]} : vector<24x128xf32> to vector<8x128xf32>
    %81 = vector.extract_strided_slice %78 {offsets = [16, 0], sizes = [8, 128], strides = [1, 1]} : vector<24x128xf32> to vector<8x128xf32>
    %82 = tpu.iota {dimensions = array<i32: 0>} : vector<128x128xi32>
    %83 = tpu.iota {dimensions = array<i32: 1>} : vector<128x128xi32>
    %c3_i32_38 = arith.constant 3 : i32
    %84 = vector.broadcast %c3_i32_38 : i32 to vector<128x128xi32>
    %85 = arith.cmpi sge, %82, %84 : vector<128x128xi32>
    %c15_i32_39 = arith.constant 15 : i32
    %86 = vector.broadcast %c15_i32_39 : i32 to vector<128x128xi32>
    %87 = arith.cmpi slt, %82, %86 : vector<128x128xi32>
    %88 = arith.andi %85, %87 : vector<128x128xi1>
    %c3_i32_40 = arith.constant 3 : i32
    %89 = vector.broadcast %c3_i32_40 : i32 to vector<128x128xi32>
    %90 = arith.subi %82, %89 : vector<128x128xi32>
    %c2_i32 = arith.constant 2 : i32
    %91 = vector.broadcast %c2_i32 : i32 to vector<128x128xi32>
    %92 = arith.shrsi %90, %91 : vector<128x128xi32>
    %c3_i32_41 = arith.constant 3 : i32
    %93 = vector.broadcast %c3_i32_41 : i32 to vector<128x128xi32>
    %94 = arith.andi %90, %93 : vector<128x128xi32>
    %95 = arith.cmpi eq, %83, %92 : vector<128x128xi32>
    %c15_i32_42 = arith.constant 15 : i32
    %96 = vector.broadcast %c15_i32_42 : i32 to vector<128x128xi32>
    %97 = arith.addi %96, %94 : vector<128x128xi32>
    %98 = arith.cmpi eq, %83, %97 : vector<128x128xi32>
    %99 = arith.ori %95, %98 : vector<128x128xi1>
    %100 = arith.andi %88, %99 : vector<128x128xi1>
    %cst_43 = arith.constant 1.000000e+00 : f32
    %cst_44 = arith.constant 0.000000e+00 : f32
    %101 = vector.broadcast %cst_43 : f32 to vector<128x128xf32>
    %102 = vector.broadcast %cst_44 : f32 to vector<128x128xf32>
    %103 = arith.select %100, %101, %102 : vector<128x128xi1>, vector<128x128xf32>
    %104 = arith.addf %79, %81 : vector<8x128xf32>
    %cst_45 = arith.constant dense<0.000000e+00> : vector<8x128xf32>
    %105 = tpu.matmul %80, %103, %cst_45 {dimension_numbers = #tpu.dot_dimension_numbers<[1], [0], [0], [1], [0, 0, 1, 1], [], []>, precision = #tpu.contract_precision<fp32>} : vector<8x128xf32>, vector<128x128xf32>, vector<8x128xf32> -> vector<8x128xf32>
    %106 = arith.addf %104, %105 : vector<8x128xf32>
    %c0_46 = arith.constant 0 : index
    %c0_47 = arith.constant 0 : index
    %107 = vector.load %arg11[%c0_46, %c0_47] : memref<8x128xf32, #tpu.memory_space<vmem>>, vector<8x128xf32>
    tpu.vector_store %arg11[%c0_46, %c0_47], %106 {strides = array<i32>} : memref<8x128xf32, #tpu.memory_space<vmem>>, vector<8x128xf32>,
    return
  }
  func.func @transform_0(%arg0: i32) -> (i32, i32) {
    %c0_i32 = arith.constant 0 : i32
    %c0_i32_0 = arith.constant 0 : i32
    return %arg0, %c0_i32 : i32, i32
  }
  func.func @transform_1(%arg0: i32) -> (i32, i32) {
    %c0_i32 = arith.constant 0 : i32
    %c0_i32_0 = arith.constant 0 : i32
    %c0_i32_1 = arith.constant 0 : i32
    return %c0_i32, %c0_i32_0 : i32, i32
  }
  func.func @transform_2(%arg0: i32) -> (i32, i32) {
    %c0_i32 = arith.constant 0 : i32
    %c0_i32_0 = arith.constant 0 : i32
    %c0_i32_1 = arith.constant 0 : i32
    return %c0_i32, %c0_i32_0 : i32, i32
  }
  func.func @transform_3(%arg0: i32) -> (i32, i32) {
    %c0_i32 = arith.constant 0 : i32
    %c0_i32_0 = arith.constant 0 : i32
    %c0_i32_1 = arith.constant 0 : i32
    return %c0_i32, %c0_i32_0 : i32, i32
  }
  func.func @transform_4(%arg0: i32) -> (i32, i32) {
    %c0_i32 = arith.constant 0 : i32
    %c0_i32_0 = arith.constant 0 : i32
    %c0_i32_1 = arith.constant 0 : i32
    return %c0_i32, %c0_i32_0 : i32, i32
  }
  func.func @transform_5(%arg0: i32) -> (i32, i32) {
    %c0_i32 = arith.constant 0 : i32
    %c0_i32_0 = arith.constant 0 : i32
    %c0_i32_1 = arith.constant 0 : i32
    return %c0_i32, %c0_i32_0 : i32, i32
  }
  func.func @transform_6(%arg0: i32) -> (i32, i32) {
    %c0_i32 = arith.constant 0 : i32
    %c0_i32_0 = arith.constant 0 : i32
    %c0_i32_1 = arith.constant 0 : i32
    return %c0_i32, %c0_i32_0 : i32, i32
  }
  func.func @transform_7(%arg0: i32) -> (i32, i32) {
    %c0_i32 = arith.constant 0 : i32
    %c0_i32_0 = arith.constant 0 : i32
    %c0_i32_1 = arith.constant 0 : i32
    return %c0_i32, %c0_i32_0 : i32, i32
  }
  func.func @transform_8(%arg0: i32) -> (i32, i32) {
    %c0_i32 = arith.constant 0 : i32
    %c0_i32_0 = arith.constant 0 : i32
    %c0_i32_1 = arith.constant 0 : i32
    return %c0_i32, %c0_i32_0 : i32, i32
  }
  func.func @transform_9(%arg0: i32) -> (i32, i32) {
    %c0_i32 = arith.constant 0 : i32
    %c0_i32_0 = arith.constant 0 : i32
    %c0_i32_1 = arith.constant 0 : i32
    return %c0_i32, %c0_i32_0 : i32, i32
  }
  func.func @transform_10(%arg0: i32) -> (i32, i32) {
    %c0_i32 = arith.constant 0 : i32
    %c0_i32_0 = arith.constant 0 : i32
    return %arg0, %c0_i32 : i32, i32
  }
}

</mosaic_0001>

<llo_original>
// kernel: mynet_forward.1
$region0: #{mynet_forward.1}
  #allocation0 [shape = 'u32[]', space=smem, size = 0x4, offset = 0x4, fixed_abs, tag = 'smem constant byte address 0x4 - core index']
  #allocation1 [shape = 'u32[144,128]{1,0:T(1,128)}', space=vmem, size = 0x12000, scoped, tag = 'internal scratch']
  %s0 = inlined_call_operand.vmem [shape: f32[8,16], index: 0, kind: input, shape index: {}]
  %s1 = inlined_call_operand.vmem [shape: f32[16,32], index: 1, kind: input, shape index: {}]
  %s2 = inlined_call_operand.vmem [shape: f32[1,32], index: 2, kind: input, shape index: {}]
  %s3 = inlined_call_operand.vmem [shape: f32[8,8], index: 3, kind: input, shape index: {}]
  %s4 = inlined_call_operand.hbm [shape: f32[8,32], index: 4, kind: input, shape index: {}]
  %s5 = inlined_call_operand.vmem [shape: f32[1,32], index: 5, kind: input, shape index: {}]
  %s6 = inlined_call_operand.hbm [shape: f32[32,32], index: 6, kind: input, shape index: {}]
  %s7 = inlined_call_operand.vmem [shape: f32[1,32], index: 7, kind: input, shape index: {}]
  %s8 = inlined_call_operand.hbm [shape: f32[32,128], index: 8, kind: input, shape index: {}]
  %s9 = inlined_call_operand.vmem [shape: f32[1,128], index: 9, kind: input, shape index: {}]
  %s10 = inlined_call_operand.vmem [shape: f32[8,128], index: 10, kind: output, shape index: {}]
  %s11 = sld [smem:[#allocation0]]
  $region62: #{mynet_forward.1} parent=0
    _
  %s13 = ssub.s32 1, %s11
  %s14 = scalar_select 0, %s13, %s11
  $region1: #{mynet_forward.1} parent=0
    #allocation2 [shape = 'u8[4096]{0}', space=vmem, size = 0x1000, scoped, tag = 'input window, operand 4, single buffered']
    #allocation3 [shape = 's32[1]{0}', space=sflag, size = 0x4, scoped, tag = 'scoped memory for mynet_forward.1']
    #allocation4 [shape = 'u8[16384]{0}', space=vmem, size = 0x4000, scoped, tag = 'input window, operand 6, single buffered']
    #allocation5 [shape = 's32[1]{0}', space=sflag, size = 0x4, scoped, tag = 'scoped memory for mynet_forward.1']
    #allocation6 [shape = 'u8[16384]{0}', space=vmem, size = 0x4000, scoped, tag = 'input window, operand 8, single buffered']
    %15 = vsyncpa [#allocation3], 0
    %16 = vsyncpa [#allocation5], 0
    // Predicated region
    $region2: #{mynet_forward.1} parent=1 // pred_check
      _
    $region3: #{mynet_forward.1} parent=1 // pred_check_branch
      %18 = sbr.rel (0) target = $region5
    $region4: #{mynet_forward.1} parent=1 // pred_region
      _
    $region5: #{mynet_forward.1} parent=1 // pred_fallthru
      _
    // Predicated region
    $region6: #{mynet_forward.1} parent=1 // pred_check
      _
    $region7: #{mynet_forward.1} parent=1 // pred_check_branch
      %20 = sbr.rel (0) target = $region9
    $region8: #{mynet_forward.1} parent=1 // pred_region
      _
    $region9: #{mynet_forward.1} parent=1 // pred_fallthru
      _
    // Predicated region
    $region10: #{mynet_forward.1} parent=1 // pred_check
      _
    $region11: #{mynet_forward.1} parent=1 // pred_check_branch
      %22 = sbr.rel (0) target = $region13
    $region12: #{mynet_forward.1} parent=1 // pred_region
      _
    $region13: #{mynet_forward.1} parent=1 // pred_fallthru
      _
    // Predicated region
    $region14: #{mynet_forward.1} parent=1 // pred_check
      _
    $region15: #{mynet_forward.1} parent=1 // pred_check_branch
      %24 = sbr.rel (0) target = $region17
    $region16: #{mynet_forward.1} parent=1 // pred_region
      _
    $region17: #{mynet_forward.1} parent=1 // pred_fallthru
      _
    // Predicated region
    $region18: #{mynet_forward.1} parent=1 // pred_check
      _
    $region19: #{mynet_forward.1} parent=1 // pred_check_branch
      %26 = sbr.rel (0) target = $region21
    $region20: #{mynet_forward.1} parent=1 // pred_region
      %s28 = ssub.s32 128, 128
      %29 = vsyncadd [#allocation3], %s28
      %s31 = sshll.u32 [#allocation2], 4
      %s32 = int_to_ptr.vmem [resolvable:$true] %s31
      %34 = dma.hbm_to_vmem [thread:$0]  %s4, 128, %s32, [#allocation3]
    $region21: #{mynet_forward.1} parent=1 // pred_fallthru
      _
    // Predicated region
    $region22: #{mynet_forward.1} parent=1 // pred_check
      _
    $region23: #{mynet_forward.1} parent=1 // pred_check_branch
      %36 = sbr.rel (0) target = $region25
    $region24: #{mynet_forward.1} parent=1 // pred_region
      _
    $region25: #{mynet_forward.1} parent=1 // pred_fallthru
      _
    // Predicated region
    $region26: #{mynet_forward.1} parent=1 // pred_check
      _
    $region27: #{mynet_forward.1} parent=1 // pred_check_branch
      %38 = sbr.rel (0) target = $region29
    $region28: #{mynet_forward.1} parent=1 // pred_region
      %s40 = ssub.s32 512, 512
      %41 = vsyncadd [#allocation5], %s40
      %s42 = sshll.u32 [#allocation4], 4
      %s43 = int_to_ptr.vmem [resolvable:$true] %s42
      %48 = dma.hbm_to_vmem [thread:$0]  %s6, 512, %s43, [#allocation5], 128, 128, 8
    $region29: #{mynet_forward.1} parent=1 // pred_fallthru
      _
    // Predicated region
    $region30: #{mynet_forward.1} parent=1 // pred_check
      _
    $region31: #{mynet_forward.1} parent=1 // pred_check_branch
      %50 = sbr.rel (0) target = $region33
    $region32: #{mynet_forward.1} parent=1 // pred_region
      _
    $region33: #{mynet_forward.1} parent=1 // pred_fallthru
      _
    // Predicated region
    $region34: #{mynet_forward.1} parent=1 // pred_check
      _
    $region35: #{mynet_forward.1} parent=1 // pred_check_branch
      %52 = sbr.rel (0) target = $region37
    $region36: #{mynet_forward.1} parent=1 // pred_region
      %s54 = ssub.s32 512, 512
      %55 = vsyncadd [#allocation5], %s54
      %s56 = sshll.u32 [#allocation6], 4
      %s57 = int_to_ptr.vmem [resolvable:$true] %s56
      %62 = dma.hbm_to_vmem [thread:$0]  %s8, 512, %s57, [#allocation5], 128, 128, 8
    $region37: #{mynet_forward.1} parent=1 // pred_fallthru
      _
    // Predicated region
    $region38: #{mynet_forward.1} parent=1 // pred_check
      _
    $region39: #{mynet_forward.1} parent=1 // pred_check_branch
      %64 = sbr.rel (0) target = $region41
    $region40: #{mynet_forward.1} parent=1 // pred_region
      _
    $region41: #{mynet_forward.1} parent=1 // pred_fallthru
      _
    // Predicated region
    $region42: #{mynet_forward.1} parent=1 // pred_check
      _
    $region43: #{mynet_forward.1} parent=1 // pred_check_branch
      %66 = sbr.rel (0) target = $region45
    $region44: #{mynet_forward.1} parent=1 // pred_region
      %67 = dma.done [#allocation3], 128
    $region45: #{mynet_forward.1} parent=1 // pred_fallthru
      _
    // Predicated region
    $region46: #{mynet_forward.1} parent=1 // pred_check
      _
    $region47: #{mynet_forward.1} parent=1 // pred_check_branch
      %69 = sbr.rel (0) target = $region49
    $region48: #{mynet_forward.1} parent=1 // pred_region
      %70 = dma.done [#allocation5], 512
    $region49: #{mynet_forward.1} parent=1 // pred_fallthru
      _
    // Predicated region
    $region50: #{mynet_forward.1} parent=1 // pred_check
      _
    $region51: #{mynet_forward.1} parent=1 // pred_check_branch
      %72 = sbr.rel (0) target = $region53
    $region52: #{mynet_forward.1} parent=1 // pred_region
      %73 = dma.done [#allocation5], 512
    $region53: #{mynet_forward.1} parent=1 // pred_fallthru
      _
    %v74 = vld [vmem:[%s0] sm:$0xff]
    %v75 = vld [vmem:[%s1] sm:$0xff]
    %v76 = vld [vmem:[%s1 + $0x8] sm:$0xff]
    %v77 = vld [vmem:[%s2] sm:$0x1]
    %v79 = vlaneseq
    %v80 = vshrl.u32 %v79, 7
    %v81 = vsub.s32 0, %v80
    %v82 = vrot.slane %v77, %v81
    %vm84 = vcmask 130048
    %v86 = vsel %vm84, %v74, 0
    %88 = vmatprep.subr.mxu0 0.0
    %v89 = vand.u32 %v75, 4294901760
    %90 = vmatpush1.msra.mxu0 %v89
    %91 = vmatprep.subr.mxu0 0.0
    %v92 = vand.u32 %v76, 4294901760
    %93 = vmatpush1.msra.mxu0 %v92
    %94 = vmatprep.subr.mxu0 0.0
    %95 = vmatpush1.msra.mxu0 0.0
    %96 = vmatprep.subr.mxu0 0.0
    %97 = vmatpush1.msra.mxu0 0.0
    %98 = vmatprep.subr.mxu0 0.0
    %99 = vmatpush1.msra.mxu0 0.0
    %100 = vmatprep.subr.mxu0 0.0
    %101 = vmatpush1.msra.mxu0 0.0
    %102 = vmatprep.subr.mxu0 0.0
    %103 = vmatpush1.msra.mxu0 0.0
    %104 = vmatprep.subr.mxu0 0.0
    %105 = vmatpush1.msra.mxu0 0.0
    %106 = vmatprep.subr.mxu0 0.0
    %107 = vmatpush1.msra.mxu0 0.0
    %108 = vmatprep.subr.mxu0 0.0
    %109 = vmatpush1.msra.mxu0 0.0
    %110 = vmatprep.subr.mxu0 0.0
    %111 = vmatpush1.msra.mxu0 0.0
    %112 = vmatprep.subr.mxu0 0.0
    %113 = vmatpush1.msra.mxu0 0.0
    %114 = vmatprep.subr.mxu0 0.0
    %115 = vmatpush1.msra.mxu0 0.0
    %116 = vmatprep.subr.mxu0 0.0
    %117 = vmatpush1.msra.mxu0 0.0
    %118 = vmatprep.subr.mxu0 0.0
    %119 = vmatpush1.msra.mxu0 0.0
    %120 = vmatprep.subr.mxu0 0.0
    %121 = vmatpush1.msra.mxu0 0.0
    %122 = vmatprep.subr.mxu0 0.0
    %123 = vmatpush1.msra.mxu0 0.0
    %124 = vmatprep.subr.mxu0 0.0
    %125 = vmatpush1.msra.mxu0 0.0
    %126 = vmatprep.subr.mxu0 0.0
    %127 = vmatpush1.msra.mxu0 0.0
    %128 = vmatprep.subr.mxu0 0.0
    %129 = vmatpush1.msra.mxu0 0.0
    %130 = vmatprep.subr.mxu0 0.0
    %131 = vmatpush1.msra.mxu0 0.0
    %132 = vmatprep.subr.mxu0 0.0
    %133 = vmatpush1.msra.mxu0 0.0
    %134 = vmatprep.subr.mxu0 0.0
    %135 = vmatpush1.msra.mxu0 0.0
    %136 = vmatprep.subr.mxu0 0.0
    %137 = vmatpush1.msra.mxu0 0.0
    %138 = vmatprep.subr.mxu0 0.0
    %139 = vmatpush1.msra.mxu0 0.0
    %140 = vmatprep.subr.mxu0 0.0
    %141 = vmatpush1.msra.mxu0 0.0
    %142 = vmatprep.subr.mxu0 0.0
    %143 = vmatpush1.msra.mxu0 0.0
    %144 = vmatprep.subr.mxu0 0.0
    %145 = vmatpush1.msra.mxu0 0.0
    %146 = vmatprep.subr.mxu0 0.0
    %147 = vmatpush1.msra.mxu0 0.0
    %148 = vmatprep.subr.mxu0 0.0
    %149 = vmatpush1.msra.mxu0 0.0
    %150 = vmatprep.subr.mxu0 0.0
    %151 = vmatpush1.msra.mxu0 0.0
    %152 = vmatprep.subr.mxu0 0.0
    %153 = vmatpush1.msra.mxu0 0.0
    %154 = vmatprep.mubr.f32.mxu0 0.0
    %v155 = vand.u32 %v86, 4294901760
    %v156 = vsub.f32 %v86, %v155
    %v157 = vand.u32 %v156, 4294901760
    %v158 = vsub.f32 %v156, %v157
    %v159 = vand.u32 %v158, 4294901760
    %160 = vmatmul.mubr.f32.gmra.mrb[0].mxu0 %v159
    %v161 = vpop.f32.mrb[0].mxu0
    %v162 = vadd.f32 %v82, %v161
    %v163 = vpop.f32.mrb[0].mxu0
    %164 = vdwg.mxu0
    %165 = vmatprep.subr.mxu0 0.0
    %v166 = vand.u32 %v75, 4294901760
    %v167 = vsub.f32 %v75, %v166
    %v168 = vand.u32 %v167, 4294901760
    %v169 = vsub.f32 %v167, %v168
    %v170 = vand.u32 %v169, 4294901760
    %171 = vmatpush1.msra.mxu0 %v170
    %172 = vmatprep.subr.mxu0 0.0
    %v173 = vand.u32 %v76, 4294901760
    %v174 = vsub.f32 %v76, %v173
    %v175 = vand.u32 %v174, 4294901760
    %v176 = vsub.f32 %v174, %v175
    %v177 = vand.u32 %v176, 4294901760
    %178 = vmatpush1.msra.mxu0 %v177
    %179 = vmatprep.subr.mxu0 0.0
    %180 = vmatpush1.msra.mxu0 0.0
    %181 = vmatprep.subr.mxu0 0.0
    %182 = vmatpush1.msra.mxu0 0.0
    %183 = vmatprep.subr.mxu0 0.0
    %184 = vmatpush1.msra.mxu0 0.0
    %185 = vmatprep.subr.mxu0 0.0
    %186 = vmatpush1.msra.mxu0 0.0
    %187 = vmatprep.subr.mxu0 0.0
    %188 = vmatpush1.msra.mxu0 0.0
    %189 = vmatprep.subr.mxu0 0.0
    %190 = vmatpush1.msra.mxu0 0.0
    %191 = vmatprep.subr.mxu0 0.0
    %192 = vmatpush1.msra.mxu0 0.0
    %193 = vmatprep.subr.mxu0 0.0
    %194 = vmatpush1.msra.mxu0 0.0
    %195 = vmatprep.subr.mxu0 0.0
    %196 = vmatpush1.msra.mxu0 0.0
    %197 = vmatprep.subr.mxu0 0.0
    %198 = vmatpush1.msra.mxu0 0.0
    %199 = vmatprep.subr.mxu0 0.0
    %200 = vmatpush1.msra.mxu0 0.0
    %201 = vmatprep.subr.mxu0 0.0
    %202 = vmatpush1.msra.mxu0 0.0
    %203 = vmatprep.subr.mxu0 0.0
    %204 = vmatpush1.msra.mxu0 0.0
    %205 = vmatprep.subr.mxu0 0.0
    %206 = vmatpush1.msra.mxu0 0.0
    %207 = vmatprep.subr.mxu0 0.0
    %208 = vmatpush1.msra.mxu0 0.0
    %209 = vmatprep.subr.mxu0 0.0
    %210 = vmatpush1.msra.mxu0 0.0
    %211 = vmatprep.subr.mxu0 0.0
    %212 = vmatpush1.msra.mxu0 0.0
    %213 = vmatprep.subr.mxu0 0.0
    %214 = vmatpush1.msra.mxu0 0.0
    %215 = vmatprep.subr.mxu0 0.0
    %216 = vmatpush1.msra.mxu0 0.0
    %217 = vmatprep.subr.mxu0 0.0
    %218 = vmatpush1.msra.mxu0 0.0
    %219 = vmatprep.subr.mxu0 0.0
    %220 = vmatpush1.msra.mxu0 0.0
    %221 = vmatprep.subr.mxu0 0.0
    %222 = vmatpush1.msra.mxu0 0.0
    %223 = vmatprep.subr.mxu0 0.0
    %224 = vmatpush1.msra.mxu0 0.0
    %225 = vmatprep.subr.mxu0 0.0
    %226 = vmatpush1.msra.mxu0 0.0
    %227 = vmatprep.subr.mxu0 0.0
    %228 = vmatpush1.msra.mxu0 0.0
    %229 = vmatprep.subr.mxu0 0.0
    %230 = vmatpush1.msra.mxu0 0.0
    %231 = vmatprep.subr.mxu0 0.0
    %232 = vmatpush1.msra.mxu0 0.0
    %233 = vmatprep.subr.mxu0 0.0
    %234 = vmatpush1.msra.mxu0 0.0
    %235 = vmatprep.subr.mxu0 0.0
    %236 = vmatpush1.msra.mxu0 0.0
    %237 = vmatprep.subr.mxu0 0.0
    %238 = vmatpush1.msra.mxu0 0.0
    %239 = vmatprep.mubr.f32.mxu0 0.0
    %v240 = vand.u32 %v86, 4294901760
    %241 = vmatmul.mubr.f32.gmra.mrb[0].mxu0 %v240
    %v242 = vpop.f32.mrb[0].mxu0
    %v243 = vadd.f32 %v162, %v242
    %v244 = vpop.f32.mrb[0].mxu0
    %245 = vdwg.mxu0
    %246 = vmatprep.subr.mxu0 0.0
    %v247 = vand.u32 %v75, 4294901760
    %v248 = vsub.f32 %v75, %v247
    %249 = vmatpush1.msra.mxu0 %v248
    %250 = vmatprep.subr.mxu0 0.0
    %v251 = vand.u32 %v76, 4294901760
    %v252 = vsub.f32 %v76, %v251
    %253 = vmatpush1.msra.mxu0 %v252
    %254 = vmatprep.subr.mxu0 0.0
    %255 = vmatpush1.msra.mxu0 0.0
    %256 = vmatprep.subr.mxu0 0.0
    %257 = vmatpush1.msra.mxu0 0.0
    %258 = vmatprep.subr.mxu0 0.0
    %259 = vmatpush1.msra.mxu0 0.0
    %260 = vmatprep.subr.mxu0 0.0
    %261 = vmatpush1.msra.mxu0 0.0
    %262 = vmatprep.subr.mxu0 0.0
    %263 = vmatpush1.msra.mxu0 0.0
    %264 = vmatprep.subr.mxu0 0.0
    %265 = vmatpush1.msra.mxu0 0.0
    %266 = vmatprep.subr.mxu0 0.0
    %267 = vmatpush1.msra.mxu0 0.0
    %268 = vmatprep.subr.mxu0 0.0
    %269 = vmatpush1.msra.mxu0 0.0
    %270 = vmatprep.subr.mxu0 0.0
    %271 = vmatpush1.msra.mxu0 0.0
    %272 = vmatprep.subr.mxu0 0.0
    %273 = vmatpush1.msra.mxu0 0.0
    %274 = vmatprep.subr.mxu0 0.0
    %275 = vmatpush1.msra.mxu0 0.0
    %276 = vmatprep.subr.mxu0 0.0
    %277 = vmatpush1.msra.mxu0 0.0
    %278 = vmatprep.subr.mxu0 0.0
    %279 = vmatpush1.msra.mxu0 0.0
    %280 = vmatprep.subr.mxu0 0.0
    %281 = vmatpush1.msra.mxu0 0.0
    %282 = vmatprep.subr.mxu0 0.0
    %283 = vmatpush1.msra.mxu0 0.0
    %284 = vmatprep.subr.mxu0 0.0
    %285 = vmatpush1.msra.mxu0 0.0
    %286 = vmatprep.subr.mxu0 0.0
    %287 = vmatpush1.msra.mxu0 0.0
    %288 = vmatprep.subr.mxu0 0.0
    %289 = vmatpush1.msra.mxu0 0.0
    %290 = vmatprep.subr.mxu0 0.0
    %291 = vmatpush1.msra.mxu0 0.0
    %292 = vmatprep.subr.mxu0 0.0
    %293 = vmatpush1.msra.mxu0 0.0
    %294 = vmatprep.subr.mxu0 0.0
    %295 = vmatpush1.msra.mxu0 0.0
    %296 = vmatprep.subr.mxu0 0.0
    %297 = vmatpush1.msra.mxu0 0.0
    %298 = vmatprep.subr.mxu0 0.0
    %299 = vmatpush1.msra.mxu0 0.0
    %300 = vmatprep.subr.mxu0 0.0
    %301 = vmatpush1.msra.mxu0 0.0
    %302 = vmatprep.subr.mxu0 0.0
    %303 = vmatpush1.msra.mxu0 0.0
    %304 = vmatprep.subr.mxu0 0.0
    %305 = vmatpush1.msra.mxu0 0.0
    %306 = vmatprep.subr.mxu0 0.0
    %307 = vmatpush1.msra.mxu0 0.0
    %308 = vmatprep.subr.mxu0 0.0
    %309 = vmatpush1.msra.mxu0 0.0
    %310 = vmatprep.subr.mxu0 0.0
    %311 = vmatpush1.msra.mxu0 0.0
    %312 = vmatprep.subr.mxu0 0.0
    %313 = vmatpush1.msra.mxu0 0.0
    %314 = vmatprep.mubr.f32.mxu0 0.0
    %v315 = vand.u32 %v86, 4294901760
    %v316 = vsub.f32 %v86, %v315
    %317 = vmatmul.mubr.f32.gmra.mrb[0].mxu0 %v316
    %v318 = vpop.f32.mrb[0].mxu0
    %v319 = vadd.f32 %v243, %v318
    %v320 = vpop.f32.mrb[0].mxu0
    %321 = vdwg.mxu0
    %322 = vmatprep.subr.mxu0 0.0
    %v323 = vand.u32 %v75, 4294901760
    %324 = vmatpush1.msra.mxu0 %v323
    %325 = vmatprep.subr.mxu0 0.0
    %v326 = vand.u32 %v76, 4294901760
    %327 = vmatpush1.msra.mxu0 %v326
    %328 = vmatprep.subr.mxu0 0.0
    %329 = vmatpush1.msra.mxu0 0.0
    %330 = vmatprep.subr.mxu0 0.0
    %331 = vmatpush1.msra.mxu0 0.0
    %332 = vmatprep.subr.mxu0 0.0
    %333 = vmatpush1.msra.mxu0 0.0
    %334 = vmatprep.subr.mxu0 0.0
    %335 = vmatpush1.msra.mxu0 0.0
    %336 = vmatprep.subr.mxu0 0.0
    %337 = vmatpush1.msra.mxu0 0.0
    %338 = vmatprep.subr.mxu0 0.0
    %339 = vmatpush1.msra.mxu0 0.0
    %340 = vmatprep.subr.mxu0 0.0
    %341 = vmatpush1.msra.mxu0 0.0
    %342 = vmatprep.subr.mxu0 0.0
    %343 = vmatpush1.msra.mxu0 0.0
    %344 = vmatprep.subr.mxu0 0.0
    %345 = vmatpush1.msra.mxu0 0.0
    %346 = vmatprep.subr.mxu0 0.0
    %347 = vmatpush1.msra.mxu0 0.0
    %348 = vmatprep.subr.mxu0 0.0
    %349 = vmatpush1.msra.mxu0 0.0
    %350 = vmatprep.subr.mxu0 0.0
    %351 = vmatpush1.msra.mxu0 0.0
    %352 = vmatprep.subr.mxu0 0.0
    %353 = vmatpush1.msra.mxu0 0.0
    %354 = vmatprep.subr.mxu0 0.0
    %355 = vmatpush1.msra.mxu0 0.0
    %356 = vmatprep.subr.mxu0 0.0
    %357 = vmatpush1.msra.mxu0 0.0
    %358 = vmatprep.subr.mxu0 0.0
    %359 = vmatpush1.msra.mxu0 0.0
    %360 = vmatprep.subr.mxu0 0.0
    %361 = vmatpush1.msra.mxu0 0.0
    %362 = vmatprep.subr.mxu0 0.0
    %363 = vmatpush1.msra.mxu0 0.0
    %364 = vmatprep.subr.mxu0 0.0
    %365 = vmatpush1.msra.mxu0 0.0
    %366 = vmatprep.subr.mxu0 0.0
    %367 = vmatpush1.msra.mxu0 0.0
    %368 = vmatprep.subr.mxu0 0.0
    %369 = vmatpush1.msra.mxu0 0.0
    %370 = vmatprep.subr.mxu0 0.0
    %371 = vmatpush1.msra.mxu0 0.0
    %372 = vmatprep.subr.mxu0 0.0
    %373 = vmatpush1.msra.mxu0 0.0
    %374 = vmatprep.subr.mxu0 0.0
    %375 = vmatpush1.msra.mxu0 0.0
    %376 = vmatprep.subr.mxu0 0.0
    %377 = vmatpush1.msra.mxu0 0.0
    %378 = vmatprep.subr.mxu0 0.0
    %379 = vmatpush1.msra.mxu0 0.0
    %380 = vmatprep.subr.mxu0 0.0
    %381 = vmatpush1.msra.mxu0 0.0
    %382 = vmatprep.subr.mxu0 0.0
    %383 = vmatpush1.msra.mxu0 0.0
    %384 = vmatprep.subr.mxu0 0.0
    %385 = vmatpush1.msra.mxu0 0.0
    %386 = vmatprep.subr.mxu0 0.0
    %387 = vmatpush1.msra.mxu0 0.0
    %388 = vmatprep.mubr.f32.mxu0 0.0
    %v389 = vand.u32 %v86, 4294901760
    %v390 = vsub.f32 %v86, %v389
    %v391 = vand.u32 %v390, 4294901760
    %392 = vmatmul.mubr.f32.gmra.mrb[0].mxu0 %v391
    %v393 = vpop.f32.mrb[0].mxu0
    %v394 = vadd.f32 %v319, %v393
    %v395 = vpop.f32.mrb[0].mxu0
    %396 = vdwg.mxu0
    %397 = vmatprep.subr.mxu0 0.0
    %v398 = vand.u32 %v75, 4294901760
    %v399 = vsub.f32 %v75, %v398
    %v400 = vand.u32 %v399, 4294901760
    %401 = vmatpush1.msra.mxu0 %v400
    %402 = vmatprep.subr.mxu0 0.0
    %v403 = vand.u32 %v76, 4294901760
    %v404 = vsub.f32 %v76, %v403
    %v405 = vand.u32 %v404, 4294901760
    %406 = vmatpush1.msra.mxu0 %v405
    %407 = vmatprep.subr.mxu0 0.0
    %408 = vmatpush1.msra.mxu0 0.0
    %409 = vmatprep.subr.mxu0 0.0
    %410 = vmatpush1.msra.mxu0 0.0
    %411 = vmatprep.subr.mxu0 0.0
    %412 = vmatpush1.msra.mxu0 0.0
    %413 = vmatprep.subr.mxu0 0.0
    %414 = vmatpush1.msra.mxu0 0.0
    %415 = vmatprep.subr.mxu0 0.0
    %416 = vmatpush1.msra.mxu0 0.0
    %417 = vmatprep.subr.mxu0 0.0
    %418 = vmatpush1.msra.mxu0 0.0
    %419 = vmatprep.subr.mxu0 0.0
    %420 = vmatpush1.msra.mxu0 0.0
    %421 = vmatprep.subr.mxu0 0.0
    %422 = vmatpush1.msra.mxu0 0.0
    %423 = vmatprep.subr.mxu0 0.0
    %424 = vmatpush1.msra.mxu0 0.0
    %425 = vmatprep.subr.mxu0 0.0
    %426 = vmatpush1.msra.mxu0 0.0
    %427 = vmatprep.subr.mxu0 0.0
    %428 = vmatpush1.msra.mxu0 0.0
    %429 = vmatprep.subr.mxu0 0.0
    %430 = vmatpush1.msra.mxu0 0.0
    %431 = vmatprep.subr.mxu0 0.0
    %432 = vmatpush1.msra.mxu0 0.0
    %433 = vmatprep.subr.mxu0 0.0
    %434 = vmatpush1.msra.mxu0 0.0
    %435 = vmatprep.subr.mxu0 0.0
    %436 = vmatpush1.msra.mxu0 0.0
    %437 = vmatprep.subr.mxu0 0.0
    %438 = vmatpush1.msra.mxu0 0.0
    %439 = vmatprep.subr.mxu0 0.0
    %440 = vmatpush1.msra.mxu0 0.0
    %441 = vmatprep.subr.mxu0 0.0
    %442 = vmatpush1.msra.mxu0 0.0
    %443 = vmatprep.subr.mxu0 0.0
    %444 = vmatpush1.msra.mxu0 0.0
    %445 = vmatprep.subr.mxu0 0.0
    %446 = vmatpush1.msra.mxu0 0.0
    %447 = vmatprep.subr.mxu0 0.0
    %448 = vmatpush1.msra.mxu0 0.0
    %449 = vmatprep.subr.mxu0 0.0
    %450 = vmatpush1.msra.mxu0 0.0
    %451 = vmatprep.subr.mxu0 0.0
    %452 = vmatpush1.msra.mxu0 0.0
    %453 = vmatprep.subr.mxu0 0.0
    %454 = vmatpush1.msra.mxu0 0.0
    %455 = vmatprep.subr.mxu0 0.0
    %456 = vmatpush1.msra.mxu0 0.0
    %457 = vmatprep.subr.mxu0 0.0
    %458 = vmatpush1.msra.mxu0 0.0
    %459 = vmatprep.subr.mxu0 0.0
    %460 = vmatpush1.msra.mxu0 0.0
    %461 = vmatprep.subr.mxu0 0.0
    %462 = vmatpush1.msra.mxu0 0.0
    %463 = vmatprep.subr.mxu0 0.0
    %464 = vmatpush1.msra.mxu0 0.0
    %465 = vmatprep.subr.mxu0 0.0
    %466 = vmatpush1.msra.mxu0 0.0
    %467 = vmatprep.mubr.f32.mxu0 0.0
    %v468 = vand.u32 %v86, 4294901760
    %469 = vmatmul.mubr.f32.gmra.mrb[0].mxu0 %v468
    %v470 = vpop.f32.mrb[0].mxu0
    %v471 = vadd.f32 %v394, %v470
    %v472 = vpop.f32.mrb[0].mxu0
    %473 = vdwg.mxu0
    %474 = vmatprep.subr.mxu0 0.0
    %v475 = vand.u32 %v75, 4294901760
    %476 = vmatpush1.msra.mxu0 %v475
    %477 = vmatprep.subr.mxu0 0.0
    %v478 = vand.u32 %v76, 4294901760
    %479 = vmatpush1.msra.mxu0 %v478
    %480 = vmatprep.subr.mxu0 0.0
    %481 = vmatpush1.msra.mxu0 0.0
    %482 = vmatprep.subr.mxu0 0.0
    %483 = vmatpush1.msra.mxu0 0.0
    %484 = vmatprep.subr.mxu0 0.0
    %485 = vmatpush1.msra.mxu0 0.0
    %486 = vmatprep.subr.mxu0 0.0
    %487 = vmatpush1.msra.mxu0 0.0
    %488 = vmatprep.subr.mxu0 0.0
    %489 = vmatpush1.msra.mxu0 0.0
    %490 = vmatprep.subr.mxu0 0.0
    %491 = vmatpush1.msra.mxu0 0.0
    %492 = vmatprep.subr.mxu0 0.0
    %493 = vmatpush1.msra.mxu0 0.0
    %494 = vmatprep.subr.mxu0 0.0
    %495 = vmatpush1.msra.mxu0 0.0
    %496 = vmatprep.subr.mxu0 0.0
    %497 = vmatpush1.msra.mxu0 0.0
    %498 = vmatprep.subr.mxu0 0.0
    %499 = vmatpush1.msra.mxu0 0.0
    %500 = vmatprep.subr.mxu0 0.0
    %501 = vmatpush1.msra.mxu0 0.0
    %502 = vmatprep.subr.mxu0 0.0
    %503 = vmatpush1.msra.mxu0 0.0
    %504 = vmatprep.subr.mxu0 0.0
    %505 = vmatpush1.msra.mxu0 0.0
    %506 = vmatprep.subr.mxu0 0.0
    %507 = vmatpush1.msra.mxu0 0.0
    %508 = vmatprep.subr.mxu0 0.0
    %509 = vmatpush1.msra.mxu0 0.0
    %510 = vmatprep.subr.mxu0 0.0
    %511 = vmatpush1.msra.mxu0 0.0
    %512 = vmatprep.subr.mxu0 0.0
    %513 = vmatpush1.msra.mxu0 0.0
    %514 = vmatprep.subr.mxu0 0.0
    %515 = vmatpush1.msra.mxu0 0.0
    %516 = vmatprep.subr.mxu0 0.0
    %517 = vmatpush1.msra.mxu0 0.0
    %518 = vmatprep.subr.mxu0 0.0
    %519 = vmatpush1.msra.mxu0 0.0
    %520 = vmatprep.subr.mxu0 0.0
    %521 = vmatpush1.msra.mxu0 0.0
    %522 = vmatprep.subr.mxu0 0.0
    %523 = vmatpush1.msra.mxu0 0.0
    %524 = vmatprep.subr.mxu0 0.0
    %525 = vmatpush1.msra.mxu0 0.0
    %526 = vmatprep.subr.mxu0 0.0
    %527 = vmatpush1.msra.mxu0 0.0
    %528 = vmatprep.subr.mxu0 0.0
    %529 = vmatpush1.msra.mxu0 0.0
    %530 = vmatprep.subr.mxu0 0.0
    %531 = vmatpush1.msra.mxu0 0.0
    %532 = vmatprep.subr.mxu0 0.0
    %533 = vmatpush1.msra.mxu0 0.0
    %534 = vmatprep.subr.mxu0 0.0
    %535 = vmatpush1.msra.mxu0 0.0
    %536 = vmatprep.subr.mxu0 0.0
    %537 = vmatpush1.msra.mxu0 0.0
    %538 = vmatprep.subr.mxu0 0.0
    %539 = vmatpush1.msra.mxu0 0.0
    %540 = vmatprep.mubr.f32.mxu0 0.0
    %v541 = vand.u32 %v86, 4294901760
    %542 = vmatmul.mubr.f32.gmra.mrb[0].mxu0 %v541
    %v543 = vpop.f32.mrb[0].mxu0
    %v544 = vadd.f32 %v471, %v543
    %v545 = vpop.f32.mrb[0].mxu0
    %546 = vdwg.mxu0
    %v547 = vmax.f32 %v544, 0.0
    %v548 = vld [vmem:[%s3] sm:$0xff]
    %v549 = vld [vmem:[#allocation2] sm:$0xff]
    %v550 = vld [vmem:[%s5] sm:$0x1]
    %v552 = vlaneseq
    %v553 = vshrl.u32 %v552, 7
    %v554 = vsub.s32 0, %v553
    %v555 = vrot.slane %v550, %v554
    %vm557 = vcmask 64512
    %v559 = vsel %vm557, %v548, 0
    %561 = vmatprep.subr.mxu0 0.0
    %v562 = vand.u32 %v549, 4294901760
    %563 = vmatpush1.msra.mxu0 %v562
    %564 = vmatprep.subr.mxu0 0.0
    %565 = vmatpush1.msra.mxu0 0.0
    %566 = vmatprep.subr.mxu0 0.0
    %567 = vmatpush1.msra.mxu0 0.0
    %568 = vmatprep.subr.mxu0 0.0
    %569 = vmatpush1.msra.mxu0 0.0
    %570 = vmatprep.subr.mxu0 0.0
    %571 = vmatpush1.msra.mxu0 0.0
    %572 = vmatprep.subr.mxu0 0.0
    %573 = vmatpush1.msra.mxu0 0.0
    %574 = vmatprep.subr.mxu0 0.0
    %575 = vmatpush1.msra.mxu0 0.0
    %576 = vmatprep.subr.mxu0 0.0
    %577 = vmatpush1.msra.mxu0 0.0
    %578 = vmatprep.subr.mxu0 0.0
    %579 = vmatpush1.msra.mxu0 0.0
    %580 = vmatprep.subr.mxu0 0.0
    %581 = vmatpush1.msra.mxu0 0.0
    %582 = vmatprep.subr.mxu0 0.0
    %583 = vmatpush1.msra.mxu0 0.0
    %584 = vmatprep.subr.mxu0 0.0
    %585 = vmatpush1.msra.mxu0 0.0
    %586 = vmatprep.subr.mxu0 0.0
    %587 = vmatpush1.msra.mxu0 0.0
    %588 = vmatprep.subr.mxu0 0.0
    %589 = vmatpush1.msra.mxu0 0.0
    %590 = vmatprep.subr.mxu0 0.0
    %591 = vmatpush1.msra.mxu0 0.0
    %592 = vmatprep.subr.mxu0 0.0
    %593 = vmatpush1.msra.mxu0 0.0
    %594 = vmatprep.subr.mxu0 0.0
    %595 = vmatpush1.msra.mxu0 0.0
    %596 = vmatprep.subr.mxu0 0.0
    %597 = vmatpush1.msra.mxu0 0.0
    %598 = vmatprep.subr.mxu0 0.0
    %599 = vmatpush1.msra.mxu0 0.0
    %600 = vmatprep.subr.mxu0 0.0
    %601 = vmatpush1.msra.mxu0 0.0
    %602 = vmatprep.subr.mxu0 0.0
    %603 = vmatpush1.msra.mxu0 0.0
    %604 = vmatprep.subr.mxu0 0.0
    %605 = vmatpush1.msra.mxu0 0.0
    %606 = vmatprep.subr.mxu0 0.0
    %607 = vmatpush1.msra.mxu0 0.0
    %608 = vmatprep.subr.mxu0 0.0
    %609 = vmatpush1.msra.mxu0 0.0
    %610 = vmatprep.subr.mxu0 0.0
    %611 = vmatpush1.msra.mxu0 0.0
    %612 = vmatprep.subr.mxu0 0.0
    %613 = vmatpush1.msra.mxu0 0.0
    %614 = vmatprep.subr.mxu0 0.0
    %615 = vmatpush1.msra.mxu0 0.0
    %616 = vmatprep.subr.mxu0 0.0
    %617 = vmatpush1.msra.mxu0 0.0
    %618 = vmatprep.subr.mxu0 0.0
    %619 = vmatpush1.msra.mxu0 0.0
    %620 = vmatprep.subr.mxu0 0.0
    %621 = vmatpush1.msra.mxu0 0.0
    %622 = vmatprep.subr.mxu0 0.0
    %623 = vmatpush1.msra.mxu0 0.0
    %624 = vmatprep.subr.mxu0 0.0
    %625 = vmatpush1.msra.mxu0 0.0
    %626 = vmatprep.mubr.f32.mxu0 0.0
    %v627 = vand.u32 %v559, 4294901760
    %v628 = vsub.f32 %v559, %v627
    %v629 = vand.u32 %v628, 4294901760
    %v630 = vsub.f32 %v628, %v629
    %v631 = vand.u32 %v630, 4294901760
    %632 = vmatmul.mubr.f32.gmra.mrb[0].mxu0 %v631
    %v633 = vpop.f32.mrb[0].mxu0
    %v634 = vadd.f32 %v555, %v633
    %v635 = vpop.f32.mrb[0].mxu0
    %636 = vdwg.mxu0
    %637 = vmatprep.subr.mxu0 0.0
    %v638 = vand.u32 %v549, 4294901760
    %v639 = vsub.f32 %v549, %v638
    %v640 = vand.u32 %v639, 4294901760
    %v641 = vsub.f32 %v639, %v640
    %v642 = vand.u32 %v641, 4294901760
    %643 = vmatpush1.msra.mxu0 %v642
    %644 = vmatprep.subr.mxu0 0.0
    %645 = vmatpush1.msra.mxu0 0.0
    %646 = vmatprep.subr.mxu0 0.0
    %647 = vmatpush1.msra.mxu0 0.0
    %648 = vmatprep.subr.mxu0 0.0
    %649 = vmatpush1.msra.mxu0 0.0
    %650 = vmatprep.subr.mxu0 0.0
    %651 = vmatpush1.msra.mxu0 0.0
    %652 = vmatprep.subr.mxu0 0.0
    %653 = vmatpush1.msra.mxu0 0.0
    %654 = vmatprep.subr.mxu0 0.0
    %655 = vmatpush1.msra.mxu0 0.0
    %656 = vmatprep.subr.mxu0 0.0
    %657 = vmatpush1.msra.mxu0 0.0
    %658 = vmatprep.subr.mxu0 0.0
    %659 = vmatpush1.msra.mxu0 0.0
    %660 = vmatprep.subr.mxu0 0.0
    %661 = vmatpush1.msra.mxu0 0.0
    %662 = vmatprep.subr.mxu0 0.0
    %663 = vmatpush1.msra.mxu0 0.0
    %664 = vmatprep.subr.mxu0 0.0
    %665 = vmatpush1.msra.mxu0 0.0
    %666 = vmatprep.subr.mxu0 0.0
    %667 = vmatpush1.msra.mxu0 0.0
    %668 = vmatprep.subr.mxu0 0.0
    %669 = vmatpush1.msra.mxu0 0.0
    %670 = vmatprep.subr.mxu0 0.0
    %671 = vmatpush1.msra.mxu0 0.0
    %672 = vmatprep.subr.mxu0 0.0
    %673 = vmatpush1.msra.mxu0 0.0
    %674 = vmatprep.subr.mxu0 0.0
    %675 = vmatpush1.msra.mxu0 0.0
    %676 = vmatprep.subr.mxu0 0.0
    %677 = vmatpush1.msra.mxu0 0.0
    %678 = vmatprep.subr.mxu0 0.0
    %679 = vmatpush1.msra.mxu0 0.0
    %680 = vmatprep.subr.mxu0 0.0
    %681 = vmatpush1.msra.mxu0 0.0
    %682 = vmatprep.subr.mxu0 0.0
    %683 = vmatpush1.msra.mxu0 0.0
    %684 = vmatprep.subr.mxu0 0.0
    %685 = vmatpush1.msra.mxu0 0.0
    %686 = vmatprep.subr.mxu0 0.0
    %687 = vmatpush1.msra.mxu0 0.0
    %688 = vmatprep.subr.mxu0 0.0
    %689 = vmatpush1.msra.mxu0 0.0
    %690 = vmatprep.subr.mxu0 0.0
    %691 = vmatpush1.msra.mxu0 0.0
    %692 = vmatprep.subr.mxu0 0.0
    %693 = vmatpush1.msra.mxu0 0.0
    %694 = vmatprep.subr.mxu0 0.0
    %695 = vmatpush1.msra.mxu0 0.0
    %696 = vmatprep.subr.mxu0 0.0
    %697 = vmatpush1.msra.mxu0 0.0
    %698 = vmatprep.subr.mxu0 0.0
    %699 = vmatpush1.msra.mxu0 0.0
    %700 = vmatprep.subr.mxu0 0.0
    %701 = vmatpush1.msra.mxu0 0.0
    %702 = vmatprep.subr.mxu0 0.0
    %703 = vmatpush1.msra.mxu0 0.0
    %704 = vmatprep.subr.mxu0 0.0
    %705 = vmatpush1.msra.mxu0 0.0
    %706 = vmatprep.mubr.f32.mxu0 0.0
    %v707 = vand.u32 %v559, 4294901760
    %708 = vmatmul.mubr.f32.gmra.mrb[0].mxu0 %v707
    %v709 = vpop.f32.mrb[0].mxu0
    %v710 = vadd.f32 %v634, %v709
    %v711 = vpop.f32.mrb[0].mxu0
    %712 = vdwg.mxu0
    %713 = vmatprep.subr.mxu0 0.0
    %v714 = vand.u32 %v549, 4294901760
    %v715 = vsub.f32 %v549, %v714
    %716 = vmatpush1.msra.mxu0 %v715
    %717 = vmatprep.subr.mxu0 0.0
    %718 = vmatpush1.msra.mxu0 0.0
    %719 = vmatprep.subr.mxu0 0.0
    %720 = vmatpush1.msra.mxu0 0.0
    %721 = vmatprep.subr.mxu0 0.0
    %722 = vmatpush1.msra.mxu0 0.0
    %723 = vmatprep.subr.mxu0 0.0
    %724 = vmatpush1.msra.mxu0 0.0
    %725 = vmatprep.subr.mxu0 0.0
    %726 = vmatpush1.msra.mxu0 0.0
    %727 = vmatprep.subr.mxu0 0.0
    %728 = vmatpush1.msra.mxu0 0.0
    %729 = vmatprep.subr.mxu0 0.0
    %730 = vmatpush1.msra.mxu0 0.0
    %731 = vmatprep.subr.mxu0 0.0
    %732 = vmatpush1.msra.mxu0 0.0
    %733 = vmatprep.subr.mxu0 0.0
    %734 = vmatpush1.msra.mxu0 0.0
    %735 = vmatprep.subr.mxu0 0.0
    %736 = vmatpush1.msra.mxu0 0.0
    %737 = vmatprep.subr.mxu0 0.0
    %738 = vmatpush1.msra.mxu0 0.0
    %739 = vmatprep.subr.mxu0 0.0
    %740 = vmatpush1.msra.mxu0 0.0
    %741 = vmatprep.subr.mxu0 0.0
    %742 = vmatpush1.msra.mxu0 0.0
    %743 = vmatprep.subr.mxu0 0.0
    %744 = vmatpush1.msra.mxu0 0.0
    %745 = vmatprep.subr.mxu0 0.0
    %746 = vmatpush1.msra.mxu0 0.0
    %747 = vmatprep.subr.mxu0 0.0
    %748 = vmatpush1.msra.mxu0 0.0
    %749 = vmatprep.subr.mxu0 0.0
    %750 = vmatpush1.msra.mxu0 0.0
    %751 = vmatprep.subr.mxu0 0.0
    %752 = vmatpush1.msra.mxu0 0.0
    %753 = vmatprep.subr.mxu0 0.0
    %754 = vmatpush1.msra.mxu0 0.0
    %755 = vmatprep.subr.mxu0 0.0
    %756 = vmatpush1.msra.mxu0 0.0
    %757 = vmatprep.subr.mxu0 0.0
    %758 = vmatpush1.msra.mxu0 0.0
    %759 = vmatprep.subr.mxu0 0.0
    %760 = vmatpush1.msra.mxu0 0.0
    %761 = vmatprep.subr.mxu0 0.0
    %762 = vmatpush1.msra.mxu0 0.0
    %763 = vmatprep.subr.mxu0 0.0
    %764 = vmatpush1.msra.mxu0 0.0
    %765 = vmatprep.subr.mxu0 0.0
    %766 = vmatpush1.msra.mxu0 0.0
    %767 = vmatprep.subr.mxu0 0.0
    %768 = vmatpush1.msra.mxu0 0.0
    %769 = vmatprep.subr.mxu0 0.0
    %770 = vmatpush1.msra.mxu0 0.0
    %771 = vmatprep.subr.mxu0 0.0
    %772 = vmatpush1.msra.mxu0 0.0
    %773 = vmatprep.subr.mxu0 0.0
    %774 = vmatpush1.msra.mxu0 0.0
    %775 = vmatprep.subr.mxu0 0.0
    %776 = vmatpush1.msra.mxu0 0.0
    %777 = vmatprep.subr.mxu0 0.0
    %778 = vmatpush1.msra.mxu0 0.0
    %779 = vmatprep.mubr.f32.mxu0 0.0
    %v780 = vand.u32 %v559, 4294901760
    %v781 = vsub.f32 %v559, %v780
    %782 = vmatmul.mubr.f32.gmra.mrb[0].mxu0 %v781
    %v783 = vpop.f32.mrb[0].mxu0
    %v784 = vadd.f32 %v710, %v783
    %v785 = vpop.f32.mrb[0].mxu0
    %786 = vdwg.mxu0
    %787 = vmatprep.subr.mxu0 0.0
    %v788 = vand.u32 %v549, 4294901760
    %789 = vmatpush1.msra.mxu0 %v788
    %790 = vmatprep.subr.mxu0 0.0
    %791 = vmatpush1.msra.mxu0 0.0
    %792 = vmatprep.subr.mxu0 0.0
    %793 = vmatpush1.msra.mxu0 0.0
    %794 = vmatprep.subr.mxu0 0.0
    %795 = vmatpush1.msra.mxu0 0.0
    %796 = vmatprep.subr.mxu0 0.0
    %797 = vmatpush1.msra.mxu0 0.0
    %798 = vmatprep.subr.mxu0 0.0
    %799 = vmatpush1.msra.mxu0 0.0
    %800 = vmatprep.subr.mxu0 0.0
    %801 = vmatpush1.msra.mxu0 0.0
    %802 = vmatprep.subr.mxu0 0.0
    %803 = vmatpush1.msra.mxu0 0.0
    %804 = vmatprep.subr.mxu0 0.0
    %805 = vmatpush1.msra.mxu0 0.0
    %806 = vmatprep.subr.mxu0 0.0
    %807 = vmatpush1.msra.mxu0 0.0
    %808 = vmatprep.subr.mxu0 0.0
    %809 = vmatpush1.msra.mxu0 0.0
    %810 = vmatprep.subr.mxu0 0.0
    %811 = vmatpush1.msra.mxu0 0.0
    %812 = vmatprep.subr.mxu0 0.0
    %813 = vmatpush1.msra.mxu0 0.0
    %814 = vmatprep.subr.mxu0 0.0
    %815 = vmatpush1.msra.mxu0 0.0
    %816 = vmatprep.subr.mxu0 0.0
    %817 = vmatpush1.msra.mxu0 0.0
    %818 = vmatprep.subr.mxu0 0.0
    %819 = vmatpush1.msra.mxu0 0.0
    %820 = vmatprep.subr.mxu0 0.0
    %821 = vmatpush1.msra.mxu0 0.0
    %822 = vmatprep.subr.mxu0 0.0
    %823 = vmatpush1.msra.mxu0 0.0
    %824 = vmatprep.subr.mxu0 0.0
    %825 = vmatpush1.msra.mxu0 0.0
    %826 = vmatprep.subr.mxu0 0.0
    %827 = vmatpush1.msra.mxu0 0.0
    %828 = vmatprep.subr.mxu0 0.0
    %829 = vmatpush1.msra.mxu0 0.0
    %830 = vmatprep.subr.mxu0 0.0
    %831 = vmatpush1.msra.mxu0 0.0
    %832 = vmatprep.subr.mxu0 0.0
    %833 = vmatpush1.msra.mxu0 0.0
    %834 = vmatprep.subr.mxu0 0.0
    %835 = vmatpush1.msra.mxu0 0.0
    %836 = vmatprep.subr.mxu0 0.0
    %837 = vmatpush1.msra.mxu0 0.0
    %838 = vmatprep.subr.mxu0 0.0
    %839 = vmatpush1.msra.mxu0 0.0
    %840 = vmatprep.subr.mxu0 0.0
    %841 = vmatpush1.msra.mxu0 0.0
    %842 = vmatprep.subr.mxu0 0.0
    %843 = vmatpush1.msra.mxu0 0.0
    %844 = vmatprep.subr.mxu0 0.0
    %845 = vmatpush1.msra.mxu0 0.0
    %846 = vmatprep.subr.mxu0 0.0
    %847 = vmatpush1.msra.mxu0 0.0
    %848 = vmatprep.subr.mxu0 0.0
    %849 = vmatpush1.msra.mxu0 0.0
    %850 = vmatprep.subr.mxu0 0.0
    %851 = vmatpush1.msra.mxu0 0.0
    %852 = vmatprep.mubr.f32.mxu0 0.0
    %v853 = vand.u32 %v559, 4294901760
    %v854 = vsub.f32 %v559, %v853
    %v855 = vand.u32 %v854, 4294901760
    %856 = vmatmul.mubr.f32.gmra.mrb[0].mxu0 %v855
    %v857 = vpop.f32.mrb[0].mxu0
    %v858 = vadd.f32 %v784, %v857
    %v859 = vpop.f32.mrb[0].mxu0
    %860 = vdwg.mxu0
    %861 = vmatprep.subr.mxu0 0.0
    %v862 = vand.u32 %v549, 4294901760
    %v863 = vsub.f32 %v549, %v862
    %v864 = vand.u32 %v863, 4294901760
    %865 = vmatpush1.msra.mxu0 %v864
    %866 = vmatprep.subr.mxu0 0.0
    %867 = vmatpush1.msra.mxu0 0.0
    %868 = vmatprep.subr.mxu0 0.0
    %869 = vmatpush1.msra.mxu0 0.0
    %870 = vmatprep.subr.mxu0 0.0
    %871 = vmatpush1.msra.mxu0 0.0
    %872 = vmatprep.subr.mxu0 0.0
    %873 = vmatpush1.msra.mxu0 0.0
    %874 = vmatprep.subr.mxu0 0.0
    %875 = vmatpush1.msra.mxu0 0.0
    %876 = vmatprep.subr.mxu0 0.0
    %877 = vmatpush1.msra.mxu0 0.0
    %878 = vmatprep.subr.mxu0 0.0
    %879 = vmatpush1.msra.mxu0 0.0
    %880 = vmatprep.subr.mxu0 0.0
    %881 = vmatpush1.msra.mxu0 0.0
    %882 = vmatprep.subr.mxu0 0.0
    %883 = vmatpush1.msra.mxu0 0.0
    %884 = vmatprep.subr.mxu0 0.0
    %885 = vmatpush1.msra.mxu0 0.0
    %886 = vmatprep.subr.mxu0 0.0
    %887 = vmatpush1.msra.mxu0 0.0
    %888 = vmatprep.subr.mxu0 0.0
    %889 = vmatpush1.msra.mxu0 0.0
    %890 = vmatprep.subr.mxu0 0.0
    %891 = vmatpush1.msra.mxu0 0.0
    %892 = vmatprep.subr.mxu0 0.0
    %893 = vmatpush1.msra.mxu0 0.0
    %894 = vmatprep.subr.mxu0 0.0
    %895 = vmatpush1.msra.mxu0 0.0
    %896 = vmatprep.subr.mxu0 0.0
    %897 = vmatpush1.msra.mxu0 0.0
    %898 = vmatprep.subr.mxu0 0.0
    %899 = vmatpush1.msra.mxu0 0.0
    %900 = vmatprep.subr.mxu0 0.0
    %901 = vmatpush1.msra.mxu0 0.0
    %902 = vmatprep.subr.mxu0 0.0
    %903 = vmatpush1.msra.mxu0 0.0
    %904 = vmatprep.subr.mxu0 0.0
    %905 = vmatpush1.msra.mxu0 0.0
    %906 = vmatprep.subr.mxu0 0.0
    %907 = vmatpush1.msra.mxu0 0.0
    %908 = vmatprep.subr.mxu0 0.0
    %909 = vmatpush1.msra.mxu0 0.0
    %910 = vmatprep.subr.mxu0 0.0
    %911 = vmatpush1.msra.mxu0 0.0
    %912 = vmatprep.subr.mxu0 0.0
    %913 = vmatpush1.msra.mxu0 0.0
    %914 = vmatprep.subr.mxu0 0.0
    %915 = vmatpush1.msra.mxu0 0.0
    %916 = vmatprep.subr.mxu0 0.0
    %917 = vmatpush1.msra.mxu0 0.0
    %918 = vmatprep.subr.mxu0 0.0
    %919 = vmatpush1.msra.mxu0 0.0
    %920 = vmatprep.subr.mxu0 0.0
    %921 = vmatpush1.msra.mxu0 0.0
    %922 = vmatprep.subr.mxu0 0.0
    %923 = vmatpush1.msra.mxu0 0.0
    %924 = vmatprep.subr.mxu0 0.0
    %925 = vmatpush1.msra.mxu0 0.0
    %926 = vmatprep.subr.mxu0 0.0
    %927 = vmatpush1.msra.mxu0 0.0
    %928 = vmatprep.mubr.f32.mxu0 0.0
    %v929 = vand.u32 %v559, 4294901760
    %930 = vmatmul.mubr.f32.gmra.mrb[0].mxu0 %v929
    %v931 = vpop.f32.mrb[0].mxu0
    %v932 = vadd.f32 %v858, %v931
    %v933 = vpop.f32.mrb[0].mxu0
    %934 = vdwg.mxu0
    %935 = vmatprep.subr.mxu0 0.0
    %v936 = vand.u32 %v549, 4294901760
    %937 = vmatpush1.msra.mxu0 %v936
    %938 = vmatprep.subr.mxu0 0.0
    %939 = vmatpush1.msra.mxu0 0.0
    %940 = vmatprep.subr.mxu0 0.0
    %941 = vmatpush1.msra.mxu0 0.0
    %942 = vmatprep.subr.mxu0 0.0
    %943 = vmatpush1.msra.mxu0 0.0
    %944 = vmatprep.subr.mxu0 0.0
    %945 = vmatpush1.msra.mxu0 0.0
    %946 = vmatprep.subr.mxu0 0.0
    %947 = vmatpush1.msra.mxu0 0.0
    %948 = vmatprep.subr.mxu0 0.0
    %949 = vmatpush1.msra.mxu0 0.0
    %950 = vmatprep.subr.mxu0 0.0
    %951 = vmatpush1.msra.mxu0 0.0
    %952 = vmatprep.subr.mxu0 0.0
    %953 = vmatpush1.msra.mxu0 0.0
    %954 = vmatprep.subr.mxu0 0.0
    %955 = vmatpush1.msra.mxu0 0.0
    %956 = vmatprep.subr.mxu0 0.0
    %957 = vmatpush1.msra.mxu0 0.0
    %958 = vmatprep.subr.mxu0 0.0
    %959 = vmatpush1.msra.mxu0 0.0
    %960 = vmatprep.subr.mxu0 0.0
    %961 = vmatpush1.msra.mxu0 0.0
    %962 = vmatprep.subr.mxu0 0.0
    %963 = vmatpush1.msra.mxu0 0.0
    %964 = vmatprep.subr.mxu0 0.0
    %965 = vmatpush1.msra.mxu0 0.0
    %966 = vmatprep.subr.mxu0 0.0
    %967 = vmatpush1.msra.mxu0 0.0
    %968 = vmatprep.subr.mxu0 0.0
    %969 = vmatpush1.msra.mxu0 0.0
    %970 = vmatprep.subr.mxu0 0.0
    %971 = vmatpush1.msra.mxu0 0.0
    %972 = vmatprep.subr.mxu0 0.0
    %973 = vmatpush1.msra.mxu0 0.0
    %974 = vmatprep.subr.mxu0 0.0
    %975 = vmatpush1.msra.mxu0 0.0
    %976 = vmatprep.subr.mxu0 0.0
    %977 = vmatpush1.msra.mxu0 0.0
    %978 = vmatprep.subr.mxu0 0.0
    %979 = vmatpush1.msra.mxu0 0.0
    %980 = vmatprep.subr.mxu0 0.0
    %981 = vmatpush1.msra.mxu0 0.0
    %982 = vmatprep.subr.mxu0 0.0
    %983 = vmatpush1.msra.mxu0 0.0
    %984 = vmatprep.subr.mxu0 0.0
    %985 = vmatpush1.msra.mxu0 0.0
    %986 = vmatprep.subr.mxu0 0.0
    %987 = vmatpush1.msra.mxu0 0.0
    %988 = vmatprep.subr.mxu0 0.0
    %989 = vmatpush1.msra.mxu0 0.0
    %990 = vmatprep.subr.mxu0 0.0
    %991 = vmatpush1.msra.mxu0 0.0
    %992 = vmatprep.subr.mxu0 0.0
    %993 = vmatpush1.msra.mxu0 0.0
    %994 = vmatprep.subr.mxu0 0.0
    %995 = vmatpush1.msra.mxu0 0.0
    %996 = vmatprep.subr.mxu0 0.0
    %997 = vmatpush1.msra.mxu0 0.0
    %998 = vmatprep.subr.mxu0 0.0
    %999 = vmatpush1.msra.mxu0 0.0
    %1000 = vmatprep.mubr.f32.mxu0 0.0
    %v1001 = vand.u32 %v559, 4294901760
    %1002 = vmatmul.mubr.f32.gmra.mrb[0].mxu0 %v1001
    %v1003 = vpop.f32.mrb[0].mxu0
    %v1004 = vadd.f32 %v932, %v1003
    %v1005 = vpop.f32.mrb[0].mxu0
    %1006 = vdwg.mxu0
    %v1007 = vxor.u32 %v1004, 2147483648
    %v1008 = vmul.f32 %v1007, 1.442695
    %v1009 = vpow.pop %v1008
    %v1010 = vadd.f32 %v1009, 1.0
    %v1011 = vrcp.pop %v1010
    %v1012 = vmul.f32 1.0, %v1011
    %v1013 = vlaneseq
    %v1014 = vshrl.u32 %v1013, 7
    %v1015 = vadd.s32 %v1014, 8
    %v1016 = vadd.s32 %v1014, 16
    %v1017 = vshra.s32 %v1014, 3
    %v1018 = vshra.s32 %v1015, 3
    %v1019 = vshra.s32 %v1016, 3
    %v1020 = vlaneseq
    %v1021 = vand.u32 %v1020, 127
    %vm1022 = vcmp.eq.s32.totalorder %v1021, %v1017
    %vm1023 = vcmp.eq.s32.totalorder %v1021, %v1018
    %vm1024 = vcmp.eq.s32.totalorder %v1021, %v1019
    %v1025 = vsel %vm1022, 1.0, 0.0
    %v1026 = vsel %vm1023, 1.0, 0.0
    %v1027 = vsel %vm1024, 1.0, 0.0
    %v1029 = vsel %vm557, %v1025, 0
    %v1032 = vsel %vm557, %v1026, 0
    %v1035 = vsel %vm557, %v1027, 0
    %1037 = vmatprep.subr.mxu0 0.0
    %v1038 = vand.u32 %v1012, 4294901760
    %1039 = vmatpush1.msra.mxu0 %v1038
    %1040 = vmatprep.subr.mxu0 0.0
    %1041 = vmatpush1.msra.mxu0 0.0
    %1042 = vmatprep.subr.mxu0 0.0
    %1043 = vmatpush1.msra.mxu0 0.0
    %1044 = vmatprep.subr.mxu0 0.0
    %1045 = vmatpush1.msra.mxu0 0.0
    %1046 = vmatprep.subr.mxu0 0.0
    %1047 = vmatpush1.msra.mxu0 0.0
    %1048 = vmatprep.subr.mxu0 0.0
    %1049 = vmatpush1.msra.mxu0 0.0
    %1050 = vmatprep.subr.mxu0 0.0
    %1051 = vmatpush1.msra.mxu0 0.0
    %1052 = vmatprep.subr.mxu0 0.0
    %1053 = vmatpush1.msra.mxu0 0.0
    %1054 = vmatprep.subr.mxu0 0.0
    %1055 = vmatpush1.msra.mxu0 0.0
    %1056 = vmatprep.subr.mxu0 0.0
    %1057 = vmatpush1.msra.mxu0 0.0
    %1058 = vmatprep.subr.mxu0 0.0
    %1059 = vmatpush1.msra.mxu0 0.0
    %1060 = vmatprep.subr.mxu0 0.0
    %1061 = vmatpush1.msra.mxu0 0.0
    %1062 = vmatprep.subr.mxu0 0.0
    %1063 = vmatpush1.msra.mxu0 0.0
    %1064 = vmatprep.subr.mxu0 0.0
    %1065 = vmatpush1.msra.mxu0 0.0
    %1066 = vmatprep.subr.mxu0 0.0
    %1067 = vmatpush1.msra.mxu0 0.0
    %1068 = vmatprep.subr.mxu0 0.0
    %1069 = vmatpush1.msra.mxu0 0.0
    %1070 = vmatprep.subr.mxu0 0.0
    %1071 = vmatpush1.msra.mxu0 0.0
    %1072 = vmatprep.subr.mxu0 0.0
    %1073 = vmatpush1.msra.mxu0 0.0
    %1074 = vmatprep.subr.mxu0 0.0
    %1075 = vmatpush1.msra.mxu0 0.0
    %1076 = vmatprep.subr.mxu0 0.0
    %1077 = vmatpush1.msra.mxu0 0.0
    %1078 = vmatprep.subr.mxu0 0.0
    %1079 = vmatpush1.msra.mxu0 0.0
    %1080 = vmatprep.subr.mxu0 0.0
    %1081 = vmatpush1.msra.mxu0 0.0
    %1082 = vmatprep.subr.mxu0 0.0
    %1083 = vmatpush1.msra.mxu0 0.0
    %1084 = vmatprep.subr.mxu0 0.0
    %1085 = vmatpush1.msra.mxu0 0.0
    %1086 = vmatprep.subr.mxu0 0.0
    %1087 = vmatpush1.msra.mxu0 0.0
    %1088 = vmatprep.subr.mxu0 0.0
    %1089 = vmatpush1.msra.mxu0 0.0
    %1090 = vmatprep.subr.mxu0 0.0
    %1091 = vmatpush1.msra.mxu0 0.0
    %1092 = vmatprep.subr.mxu0 0.0
    %1093 = vmatpush1.msra.mxu0 0.0
    %1094 = vmatprep.subr.mxu0 0.0
    %1095 = vmatpush1.msra.mxu0 0.0
    %1096 = vmatprep.subr.mxu0 0.0
    %1097 = vmatpush1.msra.mxu0 0.0
    %1098 = vmatprep.subr.mxu0 0.0
    %1099 = vmatpush1.msra.mxu0 0.0
    %1100 = vmatprep.subr.mxu0 0.0
    %1101 = vmatpush1.msra.mxu0 0.0
    %1102 = vmatprep.mubr.f32.mxu0 0.0
    %v1103 = vand.u32 %v1029, 4294901760
    %v1104 = vsub.f32 %v1029, %v1103
    %v1105 = vand.u32 %v1104, 4294901760
    %v1106 = vsub.f32 %v1104, %v1105
    %v1107 = vand.u32 %v1106, 4294901760
    %1108 = vmatmul.mubr.f32.gmra.mrb[0].mxu0 %v1107
    %v1109 = vpop.f32.mrb[0].mxu0
    %v1110 = vadd.f32 0.0, %v1109
    %v1111 = vpop.f32.mrb[0].mxu0
    %1112 = vmatprep.mubr.f32.mxu0 0.0
    %v1113 = vand.u32 %v1032, 4294901760
    %v1114 = vsub.f32 %v1032, %v1113
    %v1115 = vand.u32 %v1114, 4294901760
    %v1116 = vsub.f32 %v1114, %v1115
    %v1117 = vand.u32 %v1116, 4294901760
    %1118 = vmatmul.mubr.f32.gmra.mrb[0].mxu0 %v1117
    %v1119 = vpop.f32.mrb[0].mxu0
    %v1120 = vadd.f32 0.0, %v1119
    %v1121 = vpop.f32.mrb[0].mxu0
    %1122 = vmatprep.mubr.f32.mxu0 0.0
    %v1123 = vand.u32 %v1035, 4294901760
    %v1124 = vsub.f32 %v1035, %v1123
    %v1125 = vand.u32 %v1124, 4294901760
    %v1126 = vsub.f32 %v1124, %v1125
    %v1127 = vand.u32 %v1126, 4294901760
    %1128 = vmatmul.mubr.f32.gmra.mrb[0].mxu0 %v1127
    %v1129 = vpop.f32.mrb[0].mxu0
    %v1130 = vadd.f32 0.0, %v1129
    %v1131 = vpop.f32.mrb[0].mxu0
    %1132 = vdwg.mxu0
    %1133 = vmatprep.subr.mxu0 0.0
    %v1134 = vand.u32 %v1012, 4294901760
    %v1135 = vsub.f32 %v1012, %v1134
    %v1136 = vand.u32 %v1135, 4294901760
    %v1137 = vsub.f32 %v1135, %v1136
    %v1138 = vand.u32 %v1137, 4294901760
    %1139 = vmatpush1.msra.mxu0 %v1138
    %1140 = vmatprep.subr.mxu0 0.0
    %1141 = vmatpush1.msra.mxu0 0.0
    %1142 = vmatprep.subr.mxu0 0.0
    %1143 = vmatpush1.msra.mxu0 0.0
    %1144 = vmatprep.subr.mxu0 0.0
    %1145 = vmatpush1.msra.mxu0 0.0
    %1146 = vmatprep.subr.mxu0 0.0
    %1147 = vmatpush1.msra.mxu0 0.0
    %1148 = vmatprep.subr.mxu0 0.0
    %1149 = vmatpush1.msra.mxu0 0.0
    %1150 = vmatprep.subr.mxu0 0.0
    %1151 = vmatpush1.msra.mxu0 0.0
    %1152 = vmatprep.subr.mxu0 0.0
    %1153 = vmatpush1.msra.mxu0 0.0
    %1154 = vmatprep.subr.mxu0 0.0
    %1155 = vmatpush1.msra.mxu0 0.0
    %1156 = vmatprep.subr.mxu0 0.0
    %1157 = vmatpush1.msra.mxu0 0.0
    %1158 = vmatprep.subr.mxu0 0.0
    %1159 = vmatpush1.msra.mxu0 0.0
    %1160 = vmatprep.subr.mxu0 0.0
    %1161 = vmatpush1.msra.mxu0 0.0
    %1162 = vmatprep.subr.mxu0 0.0
    %1163 = vmatpush1.msra.mxu0 0.0
    %1164 = vmatprep.subr.mxu0 0.0
    %1165 = vmatpush1.msra.mxu0 0.0
    %1166 = vmatprep.subr.mxu0 0.0
    %1167 = vmatpush1.msra.mxu0 0.0
    %1168 = vmatprep.subr.mxu0 0.0
    %1169 = vmatpush1.msra.mxu0 0.0
    %1170 = vmatprep.subr.mxu0 0.0
    %1171 = vmatpush1.msra.mxu0 0.0
    %1172 = vmatprep.subr.mxu0 0.0
    %1173 = vmatpush1.msra.mxu0 0.0
    %1174 = vmatprep.subr.mxu0 0.0
    %1175 = vmatpush1.msra.mxu0 0.0
    %1176 = vmatprep.subr.mxu0 0.0
    %1177 = vmatpush1.msra.mxu0 0.0
    %1178 = vmatprep.subr.mxu0 0.0
    %1179 = vmatpush1.msra.mxu0 0.0
    %1180 = vmatprep.subr.mxu0 0.0
    %1181 = vmatpush1.msra.mxu0 0.0
    %1182 = vmatprep.subr.mxu0 0.0
    %1183 = vmatpush1.msra.mxu0 0.0
    %1184 = vmatprep.subr.mxu0 0.0
    %1185 = vmatpush1.msra.mxu0 0.0
    %1186 = vmatprep.subr.mxu0 0.0
    %1187 = vmatpush1.msra.mxu0 0.0
    %1188 = vmatprep.subr.mxu0 0.0
    %1189 = vmatpush1.msra.mxu0 0.0
    %1190 = vmatprep.subr.mxu0 0.0
    %1191 = vmatpush1.msra.mxu0 0.0
    %1192 = vmatprep.subr.mxu0 0.0
    %1193 = vmatpush1.msra.mxu0 0.0
    %1194 = vmatprep.subr.mxu0 0.0
    %1195 = vmatpush1.msra.mxu0 0.0
    %1196 = vmatprep.subr.mxu0 0.0
    %1197 = vmatpush1.msra.mxu0 0.0
    %1198 = vmatprep.subr.mxu0 0.0
    %1199 = vmatpush1.msra.mxu0 0.0
    %1200 = vmatprep.subr.mxu0 0.0
    %1201 = vmatpush1.msra.mxu0 0.0
    %1202 = vmatprep.mubr.f32.mxu0 0.0
    %v1203 = vand.u32 %v1029, 4294901760
    %1204 = vmatmul.mubr.f32.gmra.mrb[0].mxu0 %v1203
    %v1205 = vpop.f32.mrb[0].mxu0
    %v1206 = vadd.f32 %v1110, %v1205
    %v1207 = vpop.f32.mrb[0].mxu0
    %1208 = vmatprep.mubr.f32.mxu0 0.0
    %v1209 = vand.u32 %v1032, 4294901760
    %1210 = vmatmul.mubr.f32.gmra.mrb[0].mxu0 %v1209
    %v1211 = vpop.f32.mrb[0].mxu0
    %v1212 = vadd.f32 %v1120, %v1211
    %v1213 = vpop.f32.mrb[0].mxu0
    %1214 = vmatprep.mubr.f32.mxu0 0.0
    %v1215 = vand.u32 %v1035, 4294901760
    %1216 = vmatmul.mubr.f32.gmra.mrb[0].mxu0 %v1215
    %v1217 = vpop.f32.mrb[0].mxu0
    %v1218 = vadd.f32 %v1130, %v1217
    %v1219 = vpop.f32.mrb[0].mxu0
    %1220 = vdwg.mxu0
    %1221 = vmatprep.subr.mxu0 0.0
    %v1222 = vand.u32 %v1012, 4294901760
    %v1223 = vsub.f32 %v1012, %v1222
    %1224 = vmatpush1.msra.mxu0 %v1223
    %1225 = vmatprep.subr.mxu0 0.0
    %1226 = vmatpush1.msra.mxu0 0.0
    %1227 = vmatprep.subr.mxu0 0.0
    %1228 = vmatpush1.msra.mxu0 0.0
    %1229 = vmatprep.subr.mxu0 0.0
    %1230 = vmatpush1.msra.mxu0 0.0
    %1231 = vmatprep.subr.mxu0 0.0
    %1232 = vmatpush1.msra.mxu0 0.0
    %1233 = vmatprep.subr.mxu0 0.0
    %1234 = vmatpush1.msra.mxu0 0.0
    %1235 = vmatprep.subr.mxu0 0.0
    %1236 = vmatpush1.msra.mxu0 0.0
    %1237 = vmatprep.subr.mxu0 0.0
    %1238 = vmatpush1.msra.mxu0 0.0
    %1239 = vmatprep.subr.mxu0 0.0
    %1240 = vmatpush1.msra.mxu0 0.0
    %1241 = vmatprep.subr.mxu0 0.0
    %1242 = vmatpush1.msra.mxu0 0.0
    %1243 = vmatprep.subr.mxu0 0.0
    %1244 = vmatpush1.msra.mxu0 0.0
    %1245 = vmatprep.subr.mxu0 0.0
    %1246 = vmatpush1.msra.mxu0 0.0
    %1247 = vmatprep.subr.mxu0 0.0
    %1248 = vmatpush1.msra.mxu0 0.0
    %1249 = vmatprep.subr.mxu0 0.0
    %1250 = vmatpush1.msra.mxu0 0.0
    %1251 = vmatprep.subr.mxu0 0.0
    %1252 = vmatpush1.msra.mxu0 0.0
    %1253 = vmatprep.subr.mxu0 0.0
    %1254 = vmatpush1.msra.mxu0 0.0
    %1255 = vmatprep.subr.mxu0 0.0
    %1256 = vmatpush1.msra.mxu0 0.0
    %1257 = vmatprep.subr.mxu0 0.0
    %1258 = vmatpush1.msra.mxu0 0.0
    %1259 = vmatprep.subr.mxu0 0.0
    %1260 = vmatpush1.msra.mxu0 0.0
    %1261 = vmatprep.subr.mxu0 0.0
    %1262 = vmatpush1.msra.mxu0 0.0
    %1263 = vmatprep.subr.mxu0 0.0
    %1264 = vmatpush1.msra.mxu0 0.0
    %1265 = vmatprep.subr.mxu0 0.0
    %1266 = vmatpush1.msra.mxu0 0.0
    %1267 = vmatprep.subr.mxu0 0.0
    %1268 = vmatpush1.msra.mxu0 0.0
    %1269 = vmatprep.subr.mxu0 0.0
    %1270 = vmatpush1.msra.mxu0 0.0
    %1271 = vmatprep.subr.mxu0 0.0
    %1272 = vmatpush1.msra.mxu0 0.0
    %1273 = vmatprep.subr.mxu0 0.0
    %1274 = vmatpush1.msra.mxu0 0.0
    %1275 = vmatprep.subr.mxu0 0.0
    %1276 = vmatpush1.msra.mxu0 0.0
    %1277 = vmatprep.subr.mxu0 0.0
    %1278 = vmatpush1.msra.mxu0 0.0
    %1279 = vmatprep.subr.mxu0 0.0
    %1280 = vmatpush1.msra.mxu0 0.0
    %1281 = vmatprep.subr.mxu0 0.0
    %1282 = vmatpush1.msra.mxu0 0.0
    %1283 = vmatprep.subr.mxu0 0.0
    %1284 = vmatpush1.msra.mxu0 0.0
    %1285 = vmatprep.subr.mxu0 0.0
    %1286 = vmatpush1.msra.mxu0 0.0
    %1287 = vmatprep.mubr.f32.mxu0 0.0
    %v1288 = vand.u32 %v1029, 4294901760
    %v1289 = vsub.f32 %v1029, %v1288
    %1290 = vmatmul.mubr.f32.gmra.mrb[0].mxu0 %v1289
    %v1291 = vpop.f32.mrb[0].mxu0
    %v1292 = vadd.f32 %v1206, %v1291
    %v1293 = vpop.f32.mrb[0].mxu0
    %1294 = vmatprep.mubr.f32.mxu0 0.0
    %v1295 = vand.u32 %v1032, 4294901760
    %v1296 = vsub.f32 %v1032, %v1295
    %1297 = vmatmul.mubr.f32.gmra.mrb[0].mxu0 %v1296
    %v1298 = vpop.f32.mrb[0].mxu0
    %v1299 = vadd.f32 %v1212, %v1298
    %v1300 = vpop.f32.mrb[0].mxu0
    %1301 = vmatprep.mubr.f32.mxu0 0.0
    %v1302 = vand.u32 %v1035, 4294901760
    %v1303 = vsub.f32 %v1035, %v1302
    %1304 = vmatmul.mubr.f32.gmra.mrb[0].mxu0 %v1303
    %v1305 = vpop.f32.mrb[0].mxu0
    %v1306 = vadd.f32 %v1218, %v1305
    %v1307 = vpop.f32.mrb[0].mxu0
    %1308 = vdwg.mxu0
    %1309 = vmatprep.subr.mxu0 0.0
    %v1310 = vand.u32 %v1012, 4294901760
    %1311 = vmatpush1.msra.mxu0 %v1310
    %1312 = vmatprep.subr.mxu0 0.0
    %1313 = vmatpush1.msra.mxu0 0.0
    %1314 = vmatprep.subr.mxu0 0.0
    %1315 = vmatpush1.msra.mxu0 0.0
    %1316 = vmatprep.subr.mxu0 0.0
    %1317 = vmatpush1.msra.mxu0 0.0
    %1318 = vmatprep.subr.mxu0 0.0
    %1319 = vmatpush1.msra.mxu0 0.0
    %1320 = vmatprep.subr.mxu0 0.0
    %1321 = vmatpush1.msra.mxu0 0.0
    %1322 = vmatprep.subr.mxu0 0.0
    %1323 = vmatpush1.msra.mxu0 0.0
    %1324 = vmatprep.subr.mxu0 0.0
    %1325 = vmatpush1.msra.mxu0 0.0
    %1326 = vmatprep.subr.mxu0 0.0
    %1327 = vmatpush1.msra.mxu0 0.0
    %1328 = vmatprep.subr.mxu0 0.0
    %1329 = vmatpush1.msra.mxu0 0.0
    %1330 = vmatprep.subr.mxu0 0.0
    %1331 = vmatpush1.msra.mxu0 0.0
    %1332 = vmatprep.subr.mxu0 0.0
    %1333 = vmatpush1.msra.mxu0 0.0
    %1334 = vmatprep.subr.mxu0 0.0
    %1335 = vmatpush1.msra.mxu0 0.0
    %1336 = vmatprep.subr.mxu0 0.0
    %1337 = vmatpush1.msra.mxu0 0.0
    %1338 = vmatprep.subr.mxu0 0.0
    %1339 = vmatpush1.msra.mxu0 0.0
    %1340 = vmatprep.subr.mxu0 0.0
    %1341 = vmatpush1.msra.mxu0 0.0
    %1342 = vmatprep.subr.mxu0 0.0
    %1343 = vmatpush1.msra.mxu0 0.0
    %1344 = vmatprep.subr.mxu0 0.0
    %1345 = vmatpush1.msra.mxu0 0.0
    %1346 = vmatprep.subr.mxu0 0.0
    %1347 = vmatpush1.msra.mxu0 0.0
    %1348 = vmatprep.subr.mxu0 0.0
    %1349 = vmatpush1.msra.mxu0 0.0
    %1350 = vmatprep.subr.mxu0 0.0
    %1351 = vmatpush1.msra.mxu0 0.0
    %1352 = vmatprep.subr.mxu0 0.0
    %1353 = vmatpush1.msra.mxu0 0.0
    %1354 = vmatprep.subr.mxu0 0.0
    %1355 = vmatpush1.msra.mxu0 0.0
    %1356 = vmatprep.subr.mxu0 0.0
    %1357 = vmatpush1.msra.mxu0 0.0
    %1358 = vmatprep.subr.mxu0 0.0
    %1359 = vmatpush1.msra.mxu0 0.0
    %1360 = vmatprep.subr.mxu0 0.0
    %1361 = vmatpush1.msra.mxu0 0.0
    %1362 = vmatprep.subr.mxu0 0.0
    %1363 = vmatpush1.msra.mxu0 0.0
    %1364 = vmatprep.subr.mxu0 0.0
    %1365 = vmatpush1.msra.mxu0 0.0
    %1366 = vmatprep.subr.mxu0 0.0
    %1367 = vmatpush1.msra.mxu0 0.0
    %1368 = vmatprep.subr.mxu0 0.0
    %1369 = vmatpush1.msra.mxu0 0.0
    %1370 = vmatprep.subr.mxu0 0.0
    %1371 = vmatpush1.msra.mxu0 0.0
    %1372 = vmatprep.subr.mxu0 0.0
    %1373 = vmatpush1.msra.mxu0 0.0
    %1374 = vmatprep.mubr.f32.mxu0 0.0
    %v1375 = vand.u32 %v1029, 4294901760
    %v1376 = vsub.f32 %v1029, %v1375
    %v1377 = vand.u32 %v1376, 4294901760
    %1378 = vmatmul.mubr.f32.gmra.mrb[0].mxu0 %v1377
    %v1379 = vpop.f32.mrb[0].mxu0
    %v1380 = vadd.f32 %v1292, %v1379
    %v1381 = vpop.f32.mrb[0].mxu0
    %1382 = vmatprep.mubr.f32.mxu0 0.0
    %v1383 = vand.u32 %v1032, 4294901760
    %v1384 = vsub.f32 %v1032, %v1383
    %v1385 = vand.u32 %v1384, 4294901760
    %1386 = vmatmul.mubr.f32.gmra.mrb[0].mxu0 %v1385
    %v1387 = vpop.f32.mrb[0].mxu0
    %v1388 = vadd.f32 %v1299, %v1387
    %v1389 = vpop.f32.mrb[0].mxu0
    %1390 = vmatprep.mubr.f32.mxu0 0.0
    %v1391 = vand.u32 %v1035, 4294901760
    %v1392 = vsub.f32 %v1035, %v1391
    %v1393 = vand.u32 %v1392, 4294901760
    %1394 = vmatmul.mubr.f32.gmra.mrb[0].mxu0 %v1393
    %v1395 = vpop.f32.mrb[0].mxu0
    %v1396 = vadd.f32 %v1306, %v1395
    %v1397 = vpop.f32.mrb[0].mxu0
    %1398 = vdwg.mxu0
    %1399 = vmatprep.subr.mxu0 0.0
    %v1400 = vand.u32 %v1012, 4294901760
    %v1401 = vsub.f32 %v1012, %v1400
    %v1402 = vand.u32 %v1401, 4294901760
    %1403 = vmatpush1.msra.mxu0 %v1402
    %1404 = vmatprep.subr.mxu0 0.0
    %1405 = vmatpush1.msra.mxu0 0.0
    %1406 = vmatprep.subr.mxu0 0.0
    %1407 = vmatpush1.msra.mxu0 0.0
    %1408 = vmatprep.subr.mxu0 0.0
    %1409 = vmatpush1.msra.mxu0 0.0
    %1410 = vmatprep.subr.mxu0 0.0
    %1411 = vmatpush1.msra.mxu0 0.0
    %1412 = vmatprep.subr.mxu0 0.0
    %1413 = vmatpush1.msra.mxu0 0.0
    %1414 = vmatprep.subr.mxu0 0.0
    %1415 = vmatpush1.msra.mxu0 0.0
    %1416 = vmatprep.subr.mxu0 0.0
    %1417 = vmatpush1.msra.mxu0 0.0
    %1418 = vmatprep.subr.mxu0 0.0
    %1419 = vmatpush1.msra.mxu0 0.0
    %1420 = vmatprep.subr.mxu0 0.0
    %1421 = vmatpush1.msra.mxu0 0.0
    %1422 = vmatprep.subr.mxu0 0.0
    %1423 = vmatpush1.msra.mxu0 0.0
    %1424 = vmatprep.subr.mxu0 0.0
    %1425 = vmatpush1.msra.mxu0 0.0
    %1426 = vmatprep.subr.mxu0 0.0
    %1427 = vmatpush1.msra.mxu0 0.0
    %1428 = vmatprep.subr.mxu0 0.0
    %1429 = vmatpush1.msra.mxu0 0.0
    %1430 = vmatprep.subr.mxu0 0.0
    %1431 = vmatpush1.msra.mxu0 0.0
    %1432 = vmatprep.subr.mxu0 0.0
    %1433 = vmatpush1.msra.mxu0 0.0
    %1434 = vmatprep.subr.mxu0 0.0
    %1435 = vmatpush1.msra.mxu0 0.0
    %1436 = vmatprep.subr.mxu0 0.0
    %1437 = vmatpush1.msra.mxu0 0.0
    %1438 = vmatprep.subr.mxu0 0.0
    %1439 = vmatpush1.msra.mxu0 0.0
    %1440 = vmatprep.subr.mxu0 0.0
    %1441 = vmatpush1.msra.mxu0 0.0
    %1442 = vmatprep.subr.mxu0 0.0
    %1443 = vmatpush1.msra.mxu0 0.0
    %1444 = vmatprep.subr.mxu0 0.0
    %1445 = vmatpush1.msra.mxu0 0.0
    %1446 = vmatprep.subr.mxu0 0.0
    %1447 = vmatpush1.msra.mxu0 0.0
    %1448 = vmatprep.subr.mxu0 0.0
    %1449 = vmatpush1.msra.mxu0 0.0
    %1450 = vmatprep.subr.mxu0 0.0
    %1451 = vmatpush1.msra.mxu0 0.0
    %1452 = vmatprep.subr.mxu0 0.0
    %1453 = vmatpush1.msra.mxu0 0.0
    %1454 = vmatprep.subr.mxu0 0.0
    %1455 = vmatpush1.msra.mxu0 0.0
    %1456 = vmatprep.subr.mxu0 0.0
    %1457 = vmatpush1.msra.mxu0 0.0
    %1458 = vmatprep.subr.mxu0 0.0
    %1459 = vmatpush1.msra.mxu0 0.0
    %1460 = vmatprep.subr.mxu0 0.0
    %1461 = vmatpush1.msra.mxu0 0.0
    %1462 = vmatprep.subr.mxu0 0.0
    %1463 = vmatpush1.msra.mxu0 0.0
    %1464 = vmatprep.subr.mxu0 0.0
    %1465 = vmatpush1.msra.mxu0 0.0
    %1466 = vmatprep.mubr.f32.mxu0 0.0
    %v1467 = vand.u32 %v1029, 4294901760
    %1468 = vmatmul.mubr.f32.gmra.mrb[0].mxu0 %v1467
    %v1469 = vpop.f32.mrb[0].mxu0
    %v1470 = vadd.f32 %v1380, %v1469
    %v1471 = vpop.f32.mrb[0].mxu0
    %1472 = vmatprep.mubr.f32.mxu0 0.0
    %v1473 = vand.u32 %v1032, 4294901760
    %1474 = vmatmul.mubr.f32.gmra.mrb[0].mxu0 %v1473
    %v1475 = vpop.f32.mrb[0].mxu0
    %v1476 = vadd.f32 %v1388, %v1475
    %v1477 = vpop.f32.mrb[0].mxu0
    %1478 = vmatprep.mubr.f32.mxu0 0.0
    %v1479 = vand.u32 %v1035, 4294901760
    %1480 = vmatmul.mubr.f32.gmra.mrb[0].mxu0 %v1479
    %v1481 = vpop.f32.mrb[0].mxu0
    %v1482 = vadd.f32 %v1396, %v1481
    %v1483 = vpop.f32.mrb[0].mxu0
    %1484 = vdwg.mxu0
    %1485 = vmatprep.subr.mxu0 0.0
    %v1486 = vand.u32 %v1012, 4294901760
    %1487 = vmatpush1.msra.mxu0 %v1486
    %1488 = vmatprep.subr.mxu0 0.0
    %1489 = vmatpush1.msra.mxu0 0.0
    %1490 = vmatprep.subr.mxu0 0.0
    %1491 = vmatpush1.msra.mxu0 0.0
    %1492 = vmatprep.subr.mxu0 0.0
    %1493 = vmatpush1.msra.mxu0 0.0
    %1494 = vmatprep.subr.mxu0 0.0
    %1495 = vmatpush1.msra.mxu0 0.0
    %1496 = vmatprep.subr.mxu0 0.0
    %1497 = vmatpush1.msra.mxu0 0.0
    %1498 = vmatprep.subr.mxu0 0.0
    %1499 = vmatpush1.msra.mxu0 0.0
    %1500 = vmatprep.subr.mxu0 0.0
    %1501 = vmatpush1.msra.mxu0 0.0
    %1502 = vmatprep.subr.mxu0 0.0
    %1503 = vmatpush1.msra.mxu0 0.0
    %1504 = vmatprep.subr.mxu0 0.0
    %1505 = vmatpush1.msra.mxu0 0.0
    %1506 = vmatprep.subr.mxu0 0.0
    %1507 = vmatpush1.msra.mxu0 0.0
    %1508 = vmatprep.subr.mxu0 0.0
    %1509 = vmatpush1.msra.mxu0 0.0
    %1510 = vmatprep.subr.mxu0 0.0
    %1511 = vmatpush1.msra.mxu0 0.0
    %1512 = vmatprep.subr.mxu0 0.0
    %1513 = vmatpush1.msra.mxu0 0.0
    %1514 = vmatprep.subr.mxu0 0.0
    %1515 = vmatpush1.msra.mxu0 0.0
    %1516 = vmatprep.subr.mxu0 0.0
    %1517 = vmatpush1.msra.mxu0 0.0
    %1518 = vmatprep.subr.mxu0 0.0
    %1519 = vmatpush1.msra.mxu0 0.0
    %1520 = vmatprep.subr.mxu0 0.0
    %1521 = vmatpush1.msra.mxu0 0.0
    %1522 = vmatprep.subr.mxu0 0.0
    %1523 = vmatpush1.msra.mxu0 0.0
    %1524 = vmatprep.subr.mxu0 0.0
    %1525 = vmatpush1.msra.mxu0 0.0
    %1526 = vmatprep.subr.mxu0 0.0
    %1527 = vmatpush1.msra.mxu0 0.0
    %1528 = vmatprep.subr.mxu0 0.0
    %1529 = vmatpush1.msra.mxu0 0.0
    %1530 = vmatprep.subr.mxu0 0.0
    %1531 = vmatpush1.msra.mxu0 0.0
    %1532 = vmatprep.subr.mxu0 0.0
    %1533 = vmatpush1.msra.mxu0 0.0
    %1534 = vmatprep.subr.mxu0 0.0
    %1535 = vmatpush1.msra.mxu0 0.0
    %1536 = vmatprep.subr.mxu0 0.0
    %1537 = vmatpush1.msra.mxu0 0.0
    %1538 = vmatprep.subr.mxu0 0.0
    %1539 = vmatpush1.msra.mxu0 0.0
    %1540 = vmatprep.subr.mxu0 0.0
    %1541 = vmatpush1.msra.mxu0 0.0
    %1542 = vmatprep.subr.mxu0 0.0
    %1543 = vmatpush1.msra.mxu0 0.0
    %1544 = vmatprep.subr.mxu0 0.0
    %1545 = vmatpush1.msra.mxu0 0.0
    %1546 = vmatprep.subr.mxu0 0.0
    %1547 = vmatpush1.msra.mxu0 0.0
    %1548 = vmatprep.subr.mxu0 0.0
    %1549 = vmatpush1.msra.mxu0 0.0
    %1550 = vmatprep.mubr.f32.mxu0 0.0
    %v1551 = vand.u32 %v1029, 4294901760
    %1552 = vmatmul.mubr.f32.gmra.mrb[0].mxu0 %v1551
    %v1553 = vpop.f32.mrb[0].mxu0
    %v1554 = vadd.f32 %v1470, %v1553
    %v1555 = vpop.f32.mrb[0].mxu0
    %1556 = vmatprep.mubr.f32.mxu0 0.0
    %v1557 = vand.u32 %v1032, 4294901760
    %1558 = vmatmul.mubr.f32.gmra.mrb[0].mxu0 %v1557
    %v1559 = vpop.f32.mrb[0].mxu0
    %v1560 = vadd.f32 %v1476, %v1559
    %v1561 = vpop.f32.mrb[0].mxu0
    %1562 = vmatprep.mubr.f32.mxu0 0.0
    %v1563 = vand.u32 %v1035, 4294901760
    %1564 = vmatmul.mubr.f32.gmra.mrb[0].mxu0 %v1563
    %v1565 = vpop.f32.mrb[0].mxu0
    %v1566 = vadd.f32 %v1482, %v1565
    %v1567 = vpop.f32.mrb[0].mxu0
    %1568 = vdwg.mxu0
    %v1569 = vmul.f32 %v547, %v1554
    %v1570 = vmul.f32 %v547, %v1560
    %v1571 = vmul.f32 %v547, %v1566
    %v1572 = vld [vmem:[#allocation4] sm:$0xff]
    %v1573 = vld [vmem:[#allocation4 + $0x8] sm:$0xff]
    %v1574 = vld [vmem:[#allocation4 + $0x10] sm:$0xff]
    %v1575 = vld [vmem:[#allocation4 + $0x18] sm:$0xff]
    %v1576 = vld [vmem:[%s7] sm:$0x1]
    %v1578 = vlaneseq
    %v1579 = vshrl.u32 %v1578, 7
    %v1580 = vsub.s32 0, %v1579
    %v1581 = vrot.slane %v1576, %v1580
    %vm1583 = vcmask 261120
    %v1585 = vsel %vm1583, %v1569, 0
    %v1588 = vsel %vm1583, %v1570, 0
    %v1591 = vsel %vm1583, %v1571, 0
    %1593 = vmatprep.subr.mxu0 0.0
    %v1594 = vand.u32 %v1572, 4294901760
    %1595 = vmatpush1.msra.mxu0 %v1594
    %1596 = vmatprep.subr.mxu0 0.0
    %v1597 = vand.u32 %v1573, 4294901760
    %1598 = vmatpush1.msra.mxu0 %v1597
    %1599 = vmatprep.subr.mxu0 0.0
    %v1600 = vand.u32 %v1574, 4294901760
    %1601 = vmatpush1.msra.mxu0 %v1600
    %1602 = vmatprep.subr.mxu0 0.0
    %v1603 = vand.u32 %v1575, 4294901760
    %1604 = vmatpush1.msra.mxu0 %v1603
    %1605 = vmatprep.subr.mxu0 0.0
    %1606 = vmatpush1.msra.mxu0 0.0
    %1607 = vmatprep.subr.mxu0 0.0
    %1608 = vmatpush1.msra.mxu0 0.0
    %1609 = vmatprep.subr.mxu0 0.0
    %1610 = vmatpush1.msra.mxu0 0.0
    %1611 = vmatprep.subr.mxu0 0.0
    %1612 = vmatpush1.msra.mxu0 0.0
    %1613 = vmatprep.subr.mxu0 0.0
    %1614 = vmatpush1.msra.mxu0 0.0
    %1615 = vmatprep.subr.mxu0 0.0
    %1616 = vmatpush1.msra.mxu0 0.0
    %1617 = vmatprep.subr.mxu0 0.0
    %1618 = vmatpush1.msra.mxu0 0.0
    %1619 = vmatprep.subr.mxu0 0.0
    %1620 = vmatpush1.msra.mxu0 0.0
    %1621 = vmatprep.subr.mxu0 0.0
    %1622 = vmatpush1.msra.mxu0 0.0
    %1623 = vmatprep.subr.mxu0 0.0
    %1624 = vmatpush1.msra.mxu0 0.0
    %1625 = vmatprep.subr.mxu0 0.0
    %1626 = vmatpush1.msra.mxu0 0.0
    %1627 = vmatprep.subr.mxu0 0.0
    %1628 = vmatpush1.msra.mxu0 0.0
    %1629 = vmatprep.subr.mxu0 0.0
    %1630 = vmatpush1.msra.mxu0 0.0
    %1631 = vmatprep.subr.mxu0 0.0
    %1632 = vmatpush1.msra.mxu0 0.0
    %1633 = vmatprep.subr.mxu0 0.0
    %1634 = vmatpush1.msra.mxu0 0.0
    %1635 = vmatprep.subr.mxu0 0.0
    %1636 = vmatpush1.msra.mxu0 0.0
    %1637 = vmatprep.subr.mxu0 0.0
    %1638 = vmatpush1.msra.mxu0 0.0
    %1639 = vmatprep.subr.mxu0 0.0
    %1640 = vmatpush1.msra.mxu0 0.0
    %1641 = vmatprep.subr.mxu0 0.0
    %1642 = vmatpush1.msra.mxu0 0.0
    %1643 = vmatprep.subr.mxu0 0.0
    %1644 = vmatpush1.msra.mxu0 0.0
    %1645 = vmatprep.subr.mxu0 0.0
    %1646 = vmatpush1.msra.mxu0 0.0
    %1647 = vmatprep.subr.mxu0 0.0
    %1648 = vmatpush1.msra.mxu0 0.0
    %1649 = vmatprep.subr.mxu0 0.0
    %1650 = vmatpush1.msra.mxu0 0.0
    %1651 = vmatprep.subr.mxu0 0.0
    %1652 = vmatpush1.msra.mxu0 0.0
    %1653 = vmatprep.subr.mxu0 0.0
    %1654 = vmatpush1.msra.mxu0 0.0
    %1655 = vmatprep.subr.mxu0 0.0
    %1656 = vmatpush1.msra.mxu0 0.0
    %1657 = vmatprep.subr.mxu0 0.0
    %1658 = vmatpush1.msra.mxu0 0.0
    %1659 = vmatprep.subr.mxu0 0.0
    %1660 = vmatpush1.msra.mxu0 0.0
    %1661 = vmatprep.mubr.f32.mxu0 0.0
    %v1662 = vand.u32 %v1585, 4294901760
    %v1663 = vsub.f32 %v1585, %v1662
    %v1664 = vand.u32 %v1663, 4294901760
    %v1665 = vsub.f32 %v1663, %v1664
    %v1666 = vand.u32 %v1665, 4294901760
    %1667 = vmatmul.mubr.f32.gmra.mrb[0].mxu0 %v1666
    %v1668 = vpop.f32.mrb[0].mxu0
    %v1669 = vadd.f32 %v1581, %v1668
    %v1670 = vpop.f32.mrb[0].mxu0
    %1671 = vmatprep.mubr.f32.mxu0 0.0
    %v1672 = vand.u32 %v1588, 4294901760
    %v1673 = vsub.f32 %v1588, %v1672
    %v1674 = vand.u32 %v1673, 4294901760
    %v1675 = vsub.f32 %v1673, %v1674
    %v1676 = vand.u32 %v1675, 4294901760
    %1677 = vmatmul.mubr.f32.gmra.mrb[0].mxu0 %v1676
    %v1678 = vpop.f32.mrb[0].mxu0
    %v1679 = vadd.f32 %v1581, %v1678
    %v1680 = vpop.f32.mrb[0].mxu0
    %1681 = vmatprep.mubr.f32.mxu0 0.0
    %v1682 = vand.u32 %v1591, 4294901760
    %v1683 = vsub.f32 %v1591, %v1682
    %v1684 = vand.u32 %v1683, 4294901760
    %v1685 = vsub.f32 %v1683, %v1684
    %v1686 = vand.u32 %v1685, 4294901760
    %1687 = vmatmul.mubr.f32.gmra.mrb[0].mxu0 %v1686
    %v1688 = vpop.f32.mrb[0].mxu0
    %v1689 = vadd.f32 %v1581, %v1688
    %v1690 = vpop.f32.mrb[0].mxu0
    %1691 = vdwg.mxu0
    %1692 = vmatprep.subr.mxu0 0.0
    %v1693 = vand.u32 %v1572, 4294901760
    %v1694 = vsub.f32 %v1572, %v1693
    %v1695 = vand.u32 %v1694, 4294901760
    %v1696 = vsub.f32 %v1694, %v1695
    %v1697 = vand.u32 %v1696, 4294901760
    %1698 = vmatpush1.msra.mxu0 %v1697
    %1699 = vmatprep.subr.mxu0 0.0
    %v1700 = vand.u32 %v1573, 4294901760
    %v1701 = vsub.f32 %v1573, %v1700
    %v1702 = vand.u32 %v1701, 4294901760
    %v1703 = vsub.f32 %v1701, %v1702
    %v1704 = vand.u32 %v1703, 4294901760
    %1705 = vmatpush1.msra.mxu0 %v1704
    %1706 = vmatprep.subr.mxu0 0.0
    %v1707 = vand.u32 %v1574, 4294901760
    %v1708 = vsub.f32 %v1574, %v1707
    %v1709 = vand.u32 %v1708, 4294901760
    %v1710 = vsub.f32 %v1708, %v1709
    %v1711 = vand.u32 %v1710, 4294901760
    %1712 = vmatpush1.msra.mxu0 %v1711
    %1713 = vmatprep.subr.mxu0 0.0
    %v1714 = vand.u32 %v1575, 4294901760
    %v1715 = vsub.f32 %v1575, %v1714
    %v1716 = vand.u32 %v1715, 4294901760
    %v1717 = vsub.f32 %v1715, %v1716
    %v1718 = vand.u32 %v1717, 4294901760
    %1719 = vmatpush1.msra.mxu0 %v1718
    %1720 = vmatprep.subr.mxu0 0.0
    %1721 = vmatpush1.msra.mxu0 0.0
    %1722 = vmatprep.subr.mxu0 0.0
    %1723 = vmatpush1.msra.mxu0 0.0
    %1724 = vmatprep.subr.mxu0 0.0
    %1725 = vmatpush1.msra.mxu0 0.0
    %1726 = vmatprep.subr.mxu0 0.0
    %1727 = vmatpush1.msra.mxu0 0.0
    %1728 = vmatprep.subr.mxu0 0.0
    %1729 = vmatpush1.msra.mxu0 0.0
    %1730 = vmatprep.subr.mxu0 0.0
    %1731 = vmatpush1.msra.mxu0 0.0
    %1732 = vmatprep.subr.mxu0 0.0
    %1733 = vmatpush1.msra.mxu0 0.0
    %1734 = vmatprep.subr.mxu0 0.0
    %1735 = vmatpush1.msra.mxu0 0.0
    %1736 = vmatprep.subr.mxu0 0.0
    %1737 = vmatpush1.msra.mxu0 0.0
    %1738 = vmatprep.subr.mxu0 0.0
    %1739 = vmatpush1.msra.mxu0 0.0
    %1740 = vmatprep.subr.mxu0 0.0
    %1741 = vmatpush1.msra.mxu0 0.0
    %1742 = vmatprep.subr.mxu0 0.0
    %1743 = vmatpush1.msra.mxu0 0.0
    %1744 = vmatprep.subr.mxu0 0.0
    %1745 = vmatpush1.msra.mxu0 0.0
    %1746 = vmatprep.subr.mxu0 0.0
    %1747 = vmatpush1.msra.mxu0 0.0
    %1748 = vmatprep.subr.mxu0 0.0
    %1749 = vmatpush1.msra.mxu0 0.0
    %1750 = vmatprep.subr.mxu0 0.0
    %1751 = vmatpush1.msra.mxu0 0.0
    %1752 = vmatprep.subr.mxu0 0.0
    %1753 = vmatpush1.msra.mxu0 0.0
    %1754 = vmatprep.subr.mxu0 0.0
    %1755 = vmatpush1.msra.mxu0 0.0
    %1756 = vmatprep.subr.mxu0 0.0
    %1757 = vmatpush1.msra.mxu0 0.0
    %1758 = vmatprep.subr.mxu0 0.0
    %1759 = vmatpush1.msra.mxu0 0.0
    %1760 = vmatprep.subr.mxu0 0.0
    %1761 = vmatpush1.msra.mxu0 0.0
    %1762 = vmatprep.subr.mxu0 0.0
    %1763 = vmatpush1.msra.mxu0 0.0
    %1764 = vmatprep.subr.mxu0 0.0
    %1765 = vmatpush1.msra.mxu0 0.0
    %1766 = vmatprep.subr.mxu0 0.0
    %1767 = vmatpush1.msra.mxu0 0.0
    %1768 = vmatprep.subr.mxu0 0.0
    %1769 = vmatpush1.msra.mxu0 0.0
    %1770 = vmatprep.subr.mxu0 0.0
    %1771 = vmatpush1.msra.mxu0 0.0
    %1772 = vmatprep.subr.mxu0 0.0
    %1773 = vmatpush1.msra.mxu0 0.0
    %1774 = vmatprep.subr.mxu0 0.0
    %1775 = vmatpush1.msra.mxu0 0.0
    %1776 = vmatprep.mubr.f32.mxu0 0.0
    %v1777 = vand.u32 %v1585, 4294901760
    %1778 = vmatmul.mubr.f32.gmra.mrb[0].mxu0 %v1777
    %v1779 = vpop.f32.mrb[0].mxu0
    %v1780 = vadd.f32 %v1669, %v1779
    %v1781 = vpop.f32.mrb[0].mxu0
    %1782 = vmatprep.mubr.f32.mxu0 0.0
    %v1783 = vand.u32 %v1588, 4294901760
    %1784 = vmatmul.mubr.f32.gmra.mrb[0].mxu0 %v1783
    %v1785 = vpop.f32.mrb[0].mxu0
    %v1786 = vadd.f32 %v1679, %v1785
    %v1787 = vpop.f32.mrb[0].mxu0
    %1788 = vmatprep.mubr.f32.mxu0 0.0
    %v1789 = vand.u32 %v1591, 4294901760
    %1790 = vmatmul.mubr.f32.gmra.mrb[0].mxu0 %v1789
    %v1791 = vpop.f32.mrb[0].mxu0
    %v1792 = vadd.f32 %v1689, %v1791
    %v1793 = vpop.f32.mrb[0].mxu0
    %1794 = vdwg.mxu0
    %1795 = vmatprep.subr.mxu0 0.0
    %v1796 = vand.u32 %v1572, 4294901760
    %v1797 = vsub.f32 %v1572, %v1796
    %1798 = vmatpush1.msra.mxu0 %v1797
    %1799 = vmatprep.subr.mxu0 0.0
    %v1800 = vand.u32 %v1573, 4294901760
    %v1801 = vsub.f32 %v1573, %v1800
    %1802 = vmatpush1.msra.mxu0 %v1801
    %1803 = vmatprep.subr.mxu0 0.0
    %v1804 = vand.u32 %v1574, 4294901760
    %v1805 = vsub.f32 %v1574, %v1804
    %1806 = vmatpush1.msra.mxu0 %v1805
    %1807 = vmatprep.subr.mxu0 0.0
    %v1808 = vand.u32 %v1575, 4294901760
    %v1809 = vsub.f32 %v1575, %v1808
    %1810 = vmatpush1.msra.mxu0 %v1809
    %1811 = vmatprep.subr.mxu0 0.0
    %1812 = vmatpush1.msra.mxu0 0.0
    %1813 = vmatprep.subr.mxu0 0.0
    %1814 = vmatpush1.msra.mxu0 0.0
    %1815 = vmatprep.subr.mxu0 0.0
    %1816 = vmatpush1.msra.mxu0 0.0
    %1817 = vmatprep.subr.mxu0 0.0
    %1818 = vmatpush1.msra.mxu0 0.0
    %1819 = vmatprep.subr.mxu0 0.0
    %1820 = vmatpush1.msra.mxu0 0.0
    %1821 = vmatprep.subr.mxu0 0.0
    %1822 = vmatpush1.msra.mxu0 0.0
    %1823 = vmatprep.subr.mxu0 0.0
    %1824 = vmatpush1.msra.mxu0 0.0
    %1825 = vmatprep.subr.mxu0 0.0
    %1826 = vmatpush1.msra.mxu0 0.0
    %1827 = vmatprep.subr.mxu0 0.0
    %1828 = vmatpush1.msra.mxu0 0.0
    %1829 = vmatprep.subr.mxu0 0.0
    %1830 = vmatpush1.msra.mxu0 0.0
    %1831 = vmatprep.subr.mxu0 0.0
    %1832 = vmatpush1.msra.mxu0 0.0
    %1833 = vmatprep.subr.mxu0 0.0
    %1834 = vmatpush1.msra.mxu0 0.0
    %1835 = vmatprep.subr.mxu0 0.0
    %1836 = vmatpush1.msra.mxu0 0.0
    %1837 = vmatprep.subr.mxu0 0.0
    %1838 = vmatpush1.msra.mxu0 0.0
    %1839 = vmatprep.subr.mxu0 0.0
    %1840 = vmatpush1.msra.mxu0 0.0
    %1841 = vmatprep.subr.mxu0 0.0
    %1842 = vmatpush1.msra.mxu0 0.0
    %1843 = vmatprep.subr.mxu0 0.0
    %1844 = vmatpush1.msra.mxu0 0.0
    %1845 = vmatprep.subr.mxu0 0.0
    %1846 = vmatpush1.msra.mxu0 0.0
    %1847 = vmatprep.subr.mxu0 0.0
    %1848 = vmatpush1.msra.mxu0 0.0
    %1849 = vmatprep.subr.mxu0 0.0
    %1850 = vmatpush1.msra.mxu0 0.0
    %1851 = vmatprep.subr.mxu0 0.0
    %1852 = vmatpush1.msra.mxu0 0.0
    %1853 = vmatprep.subr.mxu0 0.0
    %1854 = vmatpush1.msra.mxu0 0.0
    %1855 = vmatprep.subr.mxu0 0.0
    %1856 = vmatpush1.msra.mxu0 0.0
    %1857 = vmatprep.subr.mxu0 0.0
    %1858 = vmatpush1.msra.mxu0 0.0
    %1859 = vmatprep.subr.mxu0 0.0
    %1860 = vmatpush1.msra.mxu0 0.0
    %1861 = vmatprep.subr.mxu0 0.0
    %1862 = vmatpush1.msra.mxu0 0.0
    %1863 = vmatprep.subr.mxu0 0.0
    %1864 = vmatpush1.msra.mxu0 0.0
    %1865 = vmatprep.subr.mxu0 0.0
    %1866 = vmatpush1.msra.mxu0 0.0
    %1867 = vmatprep.mubr.f32.mxu0 0.0
    %v1868 = vand.u32 %v1585, 4294901760
    %v1869 = vsub.f32 %v1585, %v1868
    %1870 = vmatmul.mubr.f32.gmra.mrb[0].mxu0 %v1869
    %v1871 = vpop.f32.mrb[0].mxu0
    %v1872 = vadd.f32 %v1780, %v1871
    %v1873 = vpop.f32.mrb[0].mxu0
    %1874 = vmatprep.mubr.f32.mxu0 0.0
    %v1875 = vand.u32 %v1588, 4294901760
    %v1876 = vsub.f32 %v1588, %v1875
    %1877 = vmatmul.mubr.f32.gmra.mrb[0].mxu0 %v1876
    %v1878 = vpop.f32.mrb[0].mxu0
    %v1879 = vadd.f32 %v1786, %v1878
    %v1880 = vpop.f32.mrb[0].mxu0
    %1881 = vmatprep.mubr.f32.mxu0 0.0
    %v1882 = vand.u32 %v1591, 4294901760
    %v1883 = vsub.f32 %v1591, %v1882
    %1884 = vmatmul.mubr.f32.gmra.mrb[0].mxu0 %v1883
    %v1885 = vpop.f32.mrb[0].mxu0
    %v1886 = vadd.f32 %v1792, %v1885
    %v1887 = vpop.f32.mrb[0].mxu0
    %1888 = vdwg.mxu0
    %1889 = vmatprep.subr.mxu0 0.0
    %v1890 = vand.u32 %v1572, 4294901760
    %1891 = vmatpush1.msra.mxu0 %v1890
    %1892 = vmatprep.subr.mxu0 0.0
    %v1893 = vand.u32 %v1573, 4294901760
    %1894 = vmatpush1.msra.mxu0 %v1893
    %1895 = vmatprep.subr.mxu0 0.0
    %v1896 = vand.u32 %v1574, 4294901760
    %1897 = vmatpush1.msra.mxu0 %v1896
    %1898 = vmatprep.subr.mxu0 0.0
    %v1899 = vand.u32 %v1575, 4294901760
    %1900 = vmatpush1.msra.mxu0 %v1899
    %1901 = vmatprep.subr.mxu0 0.0
    %1902 = vmatpush1.msra.mxu0 0.0
    %1903 = vmatprep.subr.mxu0 0.0
    %1904 = vmatpush1.msra.mxu0 0.0
    %1905 = vmatprep.subr.mxu0 0.0
    %1906 = vmatpush1.msra.mxu0 0.0
    %1907 = vmatprep.subr.mxu0 0.0
    %1908 = vmatpush1.msra.mxu0 0.0
    %1909 = vmatprep.subr.mxu0 0.0
    %1910 = vmatpush1.msra.mxu0 0.0
    %1911 = vmatprep.subr.mxu0 0.0
    %1912 = vmatpush1.msra.mxu0 0.0
    %1913 = vmatprep.subr.mxu0 0.0
    %1914 = vmatpush1.msra.mxu0 0.0
    %1915 = vmatprep.subr.mxu0 0.0
    %1916 = vmatpush1.msra.mxu0 0.0
    %1917 = vmatprep.subr.mxu0 0.0
    %1918 = vmatpush1.msra.mxu0 0.0
    %1919 = vmatprep.subr.mxu0 0.0
    %1920 = vmatpush1.msra.mxu0 0.0
    %1921 = vmatprep.subr.mxu0 0.0
    %1922 = vmatpush1.msra.mxu0 0.0
    %1923 = vmatprep.subr.mxu0 0.0
    %1924 = vmatpush1.msra.mxu0 0.0
    %1925 = vmatprep.subr.mxu0 0.0
    %1926 = vmatpush1.msra.mxu0 0.0
    %1927 = vmatprep.subr.mxu0 0.0
    %1928 = vmatpush1.msra.mxu0 0.0
    %1929 = vmatprep.subr.mxu0 0.0
    %1930 = vmatpush1.msra.mxu0 0.0
    %1931 = vmatprep.subr.mxu0 0.0
    %1932 = vmatpush1.msra.mxu0 0.0
    %1933 = vmatprep.subr.mxu0 0.0
    %1934 = vmatpush1.msra.mxu0 0.0
    %1935 = vmatprep.subr.mxu0 0.0
    %1936 = vmatpush1.msra.mxu0 0.0
    %1937 = vmatprep.subr.mxu0 0.0
    %1938 = vmatpush1.msra.mxu0 0.0
    %1939 = vmatprep.subr.mxu0 0.0
    %1940 = vmatpush1.msra.mxu0 0.0
    %1941 = vmatprep.subr.mxu0 0.0
    %1942 = vmatpush1.msra.mxu0 0.0
    %1943 = vmatprep.subr.mxu0 0.0
    %1944 = vmatpush1.msra.mxu0 0.0
    %1945 = vmatprep.subr.mxu0 0.0
    %1946 = vmatpush1.msra.mxu0 0.0
    %1947 = vmatprep.subr.mxu0 0.0
    %1948 = vmatpush1.msra.mxu0 0.0
    %1949 = vmatprep.subr.mxu0 0.0
    %1950 = vmatpush1.msra.mxu0 0.0
    %1951 = vmatprep.subr.mxu0 0.0
    %1952 = vmatpush1.msra.mxu0 0.0
    %1953 = vmatprep.subr.mxu0 0.0
    %1954 = vmatpush1.msra.mxu0 0.0
    %1955 = vmatprep.subr.mxu0 0.0
    %1956 = vmatpush1.msra.mxu0 0.0
    %1957 = vmatprep.mubr.f32.mxu0 0.0
    %v1958 = vand.u32 %v1585, 4294901760
    %v1959 = vsub.f32 %v1585, %v1958
    %v1960 = vand.u32 %v1959, 4294901760
    %1961 = vmatmul.mubr.f32.gmra.mrb[0].mxu0 %v1960
    %v1962 = vpop.f32.mrb[0].mxu0
    %v1963 = vadd.f32 %v1872, %v1962
    %v1964 = vpop.f32.mrb[0].mxu0
    %1965 = vmatprep.mubr.f32.mxu0 0.0
    %v1966 = vand.u32 %v1588, 4294901760
    %v1967 = vsub.f32 %v1588, %v1966
    %v1968 = vand.u32 %v1967, 4294901760
    %1969 = vmatmul.mubr.f32.gmra.mrb[0].mxu0 %v1968
    %v1970 = vpop.f32.mrb[0].mxu0
    %v1971 = vadd.f32 %v1879, %v1970
    %v1972 = vpop.f32.mrb[0].mxu0
    %1973 = vmatprep.mubr.f32.mxu0 0.0
    %v1974 = vand.u32 %v1591, 4294901760
    %v1975 = vsub.f32 %v1591, %v1974
    %v1976 = vand.u32 %v1975, 4294901760
    %1977 = vmatmul.mubr.f32.gmra.mrb[0].mxu0 %v1976
    %v1978 = vpop.f32.mrb[0].mxu0
    %v1979 = vadd.f32 %v1886, %v1978
    %v1980 = vpop.f32.mrb[0].mxu0
    %1981 = vdwg.mxu0
    %1982 = vmatprep.subr.mxu0 0.0
    %v1983 = vand.u32 %v1572, 4294901760
    %v1984 = vsub.f32 %v1572, %v1983
    %v1985 = vand.u32 %v1984, 4294901760
    %1986 = vmatpush1.msra.mxu0 %v1985
    %1987 = vmatprep.subr.mxu0 0.0
    %v1988 = vand.u32 %v1573, 4294901760
    %v1989 = vsub.f32 %v1573, %v1988
    %v1990 = vand.u32 %v1989, 4294901760
    %1991 = vmatpush1.msra.mxu0 %v1990
    %1992 = vmatprep.subr.mxu0 0.0
    %v1993 = vand.u32 %v1574, 4294901760
    %v1994 = vsub.f32 %v1574, %v1993
    %v1995 = vand.u32 %v1994, 4294901760
    %1996 = vmatpush1.msra.mxu0 %v1995
    %1997 = vmatprep.subr.mxu0 0.0
    %v1998 = vand.u32 %v1575, 4294901760
    %v1999 = vsub.f32 %v1575, %v1998
    %v2000 = vand.u32 %v1999, 4294901760
    %2001 = vmatpush1.msra.mxu0 %v2000
    %2002 = vmatprep.subr.mxu0 0.0
    %2003 = vmatpush1.msra.mxu0 0.0
    %2004 = vmatprep.subr.mxu0 0.0
    %2005 = vmatpush1.msra.mxu0 0.0
    %2006 = vmatprep.subr.mxu0 0.0
    %2007 = vmatpush1.msra.mxu0 0.0
    %2008 = vmatprep.subr.mxu0 0.0
    %2009 = vmatpush1.msra.mxu0 0.0
    %2010 = vmatprep.subr.mxu0 0.0
    %2011 = vmatpush1.msra.mxu0 0.0
    %2012 = vmatprep.subr.mxu0 0.0
    %2013 = vmatpush1.msra.mxu0 0.0
    %2014 = vmatprep.subr.mxu0 0.0
    %2015 = vmatpush1.msra.mxu0 0.0
    %2016 = vmatprep.subr.mxu0 0.0
    %2017 = vmatpush1.msra.mxu0 0.0
    %2018 = vmatprep.subr.mxu0 0.0
    %2019 = vmatpush1.msra.mxu0 0.0
    %2020 = vmatprep.subr.mxu0 0.0
    %2021 = vmatpush1.msra.mxu0 0.0
    %2022 = vmatprep.subr.mxu0 0.0
    %2023 = vmatpush1.msra.mxu0 0.0
    %2024 = vmatprep.subr.mxu0 0.0
    %2025 = vmatpush1.msra.mxu0 0.0
    %2026 = vmatprep.subr.mxu0 0.0
    %2027 = vmatpush1.msra.mxu0 0.0
    %2028 = vmatprep.subr.mxu0 0.0
    %2029 = vmatpush1.msra.mxu0 0.0
    %2030 = vmatprep.subr.mxu0 0.0
    %2031 = vmatpush1.msra.mxu0 0.0
    %2032 = vmatprep.subr.mxu0 0.0
    %2033 = vmatpush1.msra.mxu0 0.0
    %2034 = vmatprep.subr.mxu0 0.0
    %2035 = vmatpush1.msra.mxu0 0.0
    %2036 = vmatprep.subr.mxu0 0.0
    %2037 = vmatpush1.msra.mxu0 0.0
    %2038 = vmatprep.subr.mxu0 0.0
    %2039 = vmatpush1.msra.mxu0 0.0
    %2040 = vmatprep.subr.mxu0 0.0
    %2041 = vmatpush1.msra.mxu0 0.0
    %2042 = vmatprep.subr.mxu0 0.0
    %2043 = vmatpush1.msra.mxu0 0.0
    %2044 = vmatprep.subr.mxu0 0.0
    %2045 = vmatpush1.msra.mxu0 0.0
    %2046 = vmatprep.subr.mxu0 0.0
    %2047 = vmatpush1.msra.mxu0 0.0
    %2048 = vmatprep.subr.mxu0 0.0
    %2049 = vmatpush1.msra.mxu0 0.0
    %2050 = vmatprep.subr.mxu0 0.0
    %2051 = vmatpush1.msra.mxu0 0.0
    %2052 = vmatprep.subr.mxu0 0.0
    %2053 = vmatpush1.msra.mxu0 0.0
    %2054 = vmatprep.subr.mxu0 0.0
    %2055 = vmatpush1.msra.mxu0 0.0
    %2056 = vmatprep.subr.mxu0 0.0
    %2057 = vmatpush1.msra.mxu0 0.0
    %2058 = vmatprep.mubr.f32.mxu0 0.0
    %v2059 = vand.u32 %v1585, 4294901760
    %2060 = vmatmul.mubr.f32.gmra.mrb[0].mxu0 %v2059
    %v2061 = vpop.f32.mrb[0].mxu0
    %v2062 = vadd.f32 %v1963, %v2061
    %v2063 = vpop.f32.mrb[0].mxu0
    %2064 = vmatprep.mubr.f32.mxu0 0.0
    %v2065 = vand.u32 %v1588, 4294901760
    %2066 = vmatmul.mubr.f32.gmra.mrb[0].mxu0 %v2065
    %v2067 = vpop.f32.mrb[0].mxu0
    %v2068 = vadd.f32 %v1971, %v2067
    %v2069 = vpop.f32.mrb[0].mxu0
    %2070 = vmatprep.mubr.f32.mxu0 0.0
    %v2071 = vand.u32 %v1591, 4294901760
    %2072 = vmatmul.mubr.f32.gmra.mrb[0].mxu0 %v2071
    %v2073 = vpop.f32.mrb[0].mxu0
    %v2074 = vadd.f32 %v1979, %v2073
    %v2075 = vpop.f32.mrb[0].mxu0
    %2076 = vdwg.mxu0
    %2077 = vmatprep.subr.mxu0 0.0
    %v2078 = vand.u32 %v1572, 4294901760
    %2079 = vmatpush1.msra.mxu0 %v2078
    %2080 = vmatprep.subr.mxu0 0.0
    %v2081 = vand.u32 %v1573, 4294901760
    %2082 = vmatpush1.msra.mxu0 %v2081
    %2083 = vmatprep.subr.mxu0 0.0
    %v2084 = vand.u32 %v1574, 4294901760
    %2085 = vmatpush1.msra.mxu0 %v2084
    %2086 = vmatprep.subr.mxu0 0.0
    %v2087 = vand.u32 %v1575, 4294901760
    %2088 = vmatpush1.msra.mxu0 %v2087
    %2089 = vmatprep.subr.mxu0 0.0
    %2090 = vmatpush1.msra.mxu0 0.0
    %2091 = vmatprep.subr.mxu0 0.0
    %2092 = vmatpush1.msra.mxu0 0.0
    %2093 = vmatprep.subr.mxu0 0.0
    %2094 = vmatpush1.msra.mxu0 0.0
    %2095 = vmatprep.subr.mxu0 0.0
    %2096 = vmatpush1.msra.mxu0 0.0
    %2097 = vmatprep.subr.mxu0 0.0
    %2098 = vmatpush1.msra.mxu0 0.0
    %2099 = vmatprep.subr.mxu0 0.0
    %2100 = vmatpush1.msra.mxu0 0.0
    %2101 = vmatprep.subr.mxu0 0.0
    %2102 = vmatpush1.msra.mxu0 0.0
    %2103 = vmatprep.subr.mxu0 0.0
    %2104 = vmatpush1.msra.mxu0 0.0
    %2105 = vmatprep.subr.mxu0 0.0
    %2106 = vmatpush1.msra.mxu0 0.0
    %2107 = vmatprep.subr.mxu0 0.0
    %2108 = vmatpush1.msra.mxu0 0.0
    %2109 = vmatprep.subr.mxu0 0.0
    %2110 = vmatpush1.msra.mxu0 0.0
    %2111 = vmatprep.subr.mxu0 0.0
    %2112 = vmatpush1.msra.mxu0 0.0
    %2113 = vmatprep.subr.mxu0 0.0
    %2114 = vmatpush1.msra.mxu0 0.0
    %2115 = vmatprep.subr.mxu0 0.0
    %2116 = vmatpush1.msra.mxu0 0.0
    %2117 = vmatprep.subr.mxu0 0.0
    %2118 = vmatpush1.msra.mxu0 0.0
    %2119 = vmatprep.subr.mxu0 0.0
    %2120 = vmatpush1.msra.mxu0 0.0
    %2121 = vmatprep.subr.mxu0 0.0
    %2122 = vmatpush1.msra.mxu0 0.0
    %2123 = vmatprep.subr.mxu0 0.0
    %2124 = vmatpush1.msra.mxu0 0.0
    %2125 = vmatprep.subr.mxu0 0.0
    %2126 = vmatpush1.msra.mxu0 0.0
    %2127 = vmatprep.subr.mxu0 0.0
    %2128 = vmatpush1.msra.mxu0 0.0
    %2129 = vmatprep.subr.mxu0 0.0
    %2130 = vmatpush1.msra.mxu0 0.0
    %2131 = vmatprep.subr.mxu0 0.0
    %2132 = vmatpush1.msra.mxu0 0.0
    %2133 = vmatprep.subr.mxu0 0.0
    %2134 = vmatpush1.msra.mxu0 0.0
    %2135 = vmatprep.subr.mxu0 0.0
    %2136 = vmatpush1.msra.mxu0 0.0
    %2137 = vmatprep.subr.mxu0 0.0
    %2138 = vmatpush1.msra.mxu0 0.0
    %2139 = vmatprep.subr.mxu0 0.0
    %2140 = vmatpush1.msra.mxu0 0.0
    %2141 = vmatprep.subr.mxu0 0.0
    %2142 = vmatpush1.msra.mxu0 0.0
    %2143 = vmatprep.subr.mxu0 0.0
    %2144 = vmatpush1.msra.mxu0 0.0
    %2145 = vmatprep.mubr.f32.mxu0 0.0
    %v2146 = vand.u32 %v1585, 4294901760
    %2147 = vmatmul.mubr.f32.gmra.mrb[0].mxu0 %v2146
    %v2148 = vpop.f32.mrb[0].mxu0
    %v2149 = vadd.f32 %v2062, %v2148
    %v2150 = vpop.f32.mrb[0].mxu0
    %2151 = vmatprep.mubr.f32.mxu0 0.0
    %v2152 = vand.u32 %v1588, 4294901760
    %2153 = vmatmul.mubr.f32.gmra.mrb[0].mxu0 %v2152
    %v2154 = vpop.f32.mrb[0].mxu0
    %v2155 = vadd.f32 %v2068, %v2154
    %v2156 = vpop.f32.mrb[0].mxu0
    %2157 = vmatprep.mubr.f32.mxu0 0.0
    %v2158 = vand.u32 %v1591, 4294901760
    %2159 = vmatmul.mubr.f32.gmra.mrb[0].mxu0 %v2158
    %v2160 = vpop.f32.mrb[0].mxu0
    %v2161 = vadd.f32 %v2074, %v2160
    %v2162 = vpop.f32.mrb[0].mxu0
    %2163 = vdwg.mxu0
    %v2164 = vmax.f32 %v2149, 0.0
    %v2165 = vmax.f32 %v2155, 0.0
    %v2166 = vmax.f32 %v2161, 0.0
    %v2167 = vld [vmem:[#allocation6] sm:$0xff]
    %v2168 = vld [vmem:[#allocation6 + $0x8] sm:$0xff]
    %v2169 = vld [vmem:[#allocation6 + $0x10] sm:$0xff]
    %v2170 = vld [vmem:[#allocation6 + $0x18] sm:$0xff]
    %v2171 = vld [vmem:[%s9] sm:$0x1]
    %v2173 = vlaneseq
    %v2174 = vshrl.u32 %v2173, 7
    %v2175 = vsub.s32 0, %v2174
    %v2176 = vrot.slane %v2171, %v2175
    %v2179 = vsel %vm1583, %v2164, 0
    %v2182 = vsel %vm1583, %v2165, 0
    %v2185 = vsel %vm1583, %v2166, 0
    %2187 = vmatprep.subr.mxu0 0.0
    %v2188 = vand.u32 %v2167, 4294901760
    %2189 = vmatpush1.msra.mxu0 %v2188
    %2190 = vmatprep.subr.mxu0 0.0
    %v2191 = vand.u32 %v2168, 4294901760
    %2192 = vmatpush1.msra.mxu0 %v2191
    %2193 = vmatprep.subr.mxu0 0.0
    %v2194 = vand.u32 %v2169, 4294901760
    %2195 = vmatpush1.msra.mxu0 %v2194
    %2196 = vmatprep.subr.mxu0 0.0
    %v2197 = vand.u32 %v2170, 4294901760
    %2198 = vmatpush1.msra.mxu0 %v2197
    %2199 = vmatprep.subr.mxu0 0.0
    %2200 = vmatpush1.msra.mxu0 0.0
    %2201 = vmatprep.subr.mxu0 0.0
    %2202 = vmatpush1.msra.mxu0 0.0
    %2203 = vmatprep.subr.mxu0 0.0
    %2204 = vmatpush1.msra.mxu0 0.0
    %2205 = vmatprep.subr.mxu0 0.0
    %2206 = vmatpush1.msra.mxu0 0.0
    %2207 = vmatprep.subr.mxu0 0.0
    %2208 = vmatpush1.msra.mxu0 0.0
    %2209 = vmatprep.subr.mxu0 0.0
    %2210 = vmatpush1.msra.mxu0 0.0
    %2211 = vmatprep.subr.mxu0 0.0
    %2212 = vmatpush1.msra.mxu0 0.0
    %2213 = vmatprep.subr.mxu0 0.0
    %2214 = vmatpush1.msra.mxu0 0.0
    %2215 = vmatprep.subr.mxu0 0.0
    %2216 = vmatpush1.msra.mxu0 0.0
    %2217 = vmatprep.subr.mxu0 0.0
    %2218 = vmatpush1.msra.mxu0 0.0
    %2219 = vmatprep.subr.mxu0 0.0
    %2220 = vmatpush1.msra.mxu0 0.0
    %2221 = vmatprep.subr.mxu0 0.0
    %2222 = vmatpush1.msra.mxu0 0.0
    %2223 = vmatprep.subr.mxu0 0.0
    %2224 = vmatpush1.msra.mxu0 0.0
    %2225 = vmatprep.subr.mxu0 0.0
    %2226 = vmatpush1.msra.mxu0 0.0
    %2227 = vmatprep.subr.mxu0 0.0
    %2228 = vmatpush1.msra.mxu0 0.0
    %2229 = vmatprep.subr.mxu0 0.0
    %2230 = vmatpush1.msra.mxu0 0.0
    %2231 = vmatprep.subr.mxu0 0.0
    %2232 = vmatpush1.msra.mxu0 0.0
    %2233 = vmatprep.subr.mxu0 0.0
    %2234 = vmatpush1.msra.mxu0 0.0
    %2235 = vmatprep.subr.mxu0 0.0
    %2236 = vmatpush1.msra.mxu0 0.0
    %2237 = vmatprep.subr.mxu0 0.0
    %2238 = vmatpush1.msra.mxu0 0.0
    %2239 = vmatprep.subr.mxu0 0.0
    %2240 = vmatpush1.msra.mxu0 0.0
    %2241 = vmatprep.subr.mxu0 0.0
    %2242 = vmatpush1.msra.mxu0 0.0
    %2243 = vmatprep.subr.mxu0 0.0
    %2244 = vmatpush1.msra.mxu0 0.0
    %2245 = vmatprep.subr.mxu0 0.0
    %2246 = vmatpush1.msra.mxu0 0.0
    %2247 = vmatprep.subr.mxu0 0.0
    %2248 = vmatpush1.msra.mxu0 0.0
    %2249 = vmatprep.subr.mxu0 0.0
    %2250 = vmatpush1.msra.mxu0 0.0
    %2251 = vmatprep.subr.mxu0 0.0
    %2252 = vmatpush1.msra.mxu0 0.0
    %2253 = vmatprep.subr.mxu0 0.0
    %2254 = vmatpush1.msra.mxu0 0.0
    %2255 = vmatprep.mubr.f32.mxu0 0.0
    %v2256 = vand.u32 %v2179, 4294901760
    %v2257 = vsub.f32 %v2179, %v2256
    %v2258 = vand.u32 %v2257, 4294901760
    %v2259 = vsub.f32 %v2257, %v2258
    %v2260 = vand.u32 %v2259, 4294901760
    %2261 = vmatmul.mubr.f32.gmra.mrb[0].mxu0 %v2260
    %v2262 = vpop.f32.mrb[0].mxu0
    %v2263 = vadd.f32 %v2176, %v2262
    %v2264 = vpop.f32.mrb[0].mxu0
    %2265 = vmatprep.mubr.f32.mxu0 0.0
    %v2266 = vand.u32 %v2182, 4294901760
    %v2267 = vsub.f32 %v2182, %v2266
    %v2268 = vand.u32 %v2267, 4294901760
    %v2269 = vsub.f32 %v2267, %v2268
    %v2270 = vand.u32 %v2269, 4294901760
    %2271 = vmatmul.mubr.f32.gmra.mrb[0].mxu0 %v2270
    %v2272 = vpop.f32.mrb[0].mxu0
    %v2273 = vadd.f32 %v2176, %v2272
    %v2274 = vpop.f32.mrb[0].mxu0
    %2275 = vmatprep.mubr.f32.mxu0 0.0
    %v2276 = vand.u32 %v2185, 4294901760
    %v2277 = vsub.f32 %v2185, %v2276
    %v2278 = vand.u32 %v2277, 4294901760
    %v2279 = vsub.f32 %v2277, %v2278
    %v2280 = vand.u32 %v2279, 4294901760
    %2281 = vmatmul.mubr.f32.gmra.mrb[0].mxu0 %v2280
    %v2282 = vpop.f32.mrb[0].mxu0
    %v2283 = vadd.f32 %v2176, %v2282
    %v2284 = vpop.f32.mrb[0].mxu0
    %2285 = vdwg.mxu0
    %2286 = vmatprep.subr.mxu0 0.0
    %v2287 = vand.u32 %v2167, 4294901760
    %v2288 = vsub.f32 %v2167, %v2287
    %v2289 = vand.u32 %v2288, 4294901760
    %v2290 = vsub.f32 %v2288, %v2289
    %v2291 = vand.u32 %v2290, 4294901760
    %2292 = vmatpush1.msra.mxu0 %v2291
    %2293 = vmatprep.subr.mxu0 0.0
    %v2294 = vand.u32 %v2168, 4294901760
    %v2295 = vsub.f32 %v2168, %v2294
    %v2296 = vand.u32 %v2295, 4294901760
    %v2297 = vsub.f32 %v2295, %v2296
    %v2298 = vand.u32 %v2297, 4294901760
    %2299 = vmatpush1.msra.mxu0 %v2298
    %2300 = vmatprep.subr.mxu0 0.0
    %v2301 = vand.u32 %v2169, 4294901760
    %v2302 = vsub.f32 %v2169, %v2301
    %v2303 = vand.u32 %v2302, 4294901760
    %v2304 = vsub.f32 %v2302, %v2303
    %v2305 = vand.u32 %v2304, 4294901760
    %2306 = vmatpush1.msra.mxu0 %v2305
    %2307 = vmatprep.subr.mxu0 0.0
    %v2308 = vand.u32 %v2170, 4294901760
    %v2309 = vsub.f32 %v2170, %v2308
    %v2310 = vand.u32 %v2309, 4294901760
    %v2311 = vsub.f32 %v2309, %v2310
    %v2312 = vand.u32 %v2311, 4294901760
    %2313 = vmatpush1.msra.mxu0 %v2312
    %2314 = vmatprep.subr.mxu0 0.0
    %2315 = vmatpush1.msra.mxu0 0.0
    %2316 = vmatprep.subr.mxu0 0.0
    %2317 = vmatpush1.msra.mxu0 0.0
    %2318 = vmatprep.subr.mxu0 0.0
    %2319 = vmatpush1.msra.mxu0 0.0
    %2320 = vmatprep.subr.mxu0 0.0
    %2321 = vmatpush1.msra.mxu0 0.0
    %2322 = vmatprep.subr.mxu0 0.0
    %2323 = vmatpush1.msra.mxu0 0.0
    %2324 = vmatprep.subr.mxu0 0.0
    %2325 = vmatpush1.msra.mxu0 0.0
    %2326 = vmatprep.subr.mxu0 0.0
    %2327 = vmatpush1.msra.mxu0 0.0
    %2328 = vmatprep.subr.mxu0 0.0
    %2329 = vmatpush1.msra.mxu0 0.0
    %2330 = vmatprep.subr.mxu0 0.0
    %2331 = vmatpush1.msra.mxu0 0.0
    %2332 = vmatprep.subr.mxu0 0.0
    %2333 = vmatpush1.msra.mxu0 0.0
    %2334 = vmatprep.subr.mxu0 0.0
    %2335 = vmatpush1.msra.mxu0 0.0
    %2336 = vmatprep.subr.mxu0 0.0
    %2337 = vmatpush1.msra.mxu0 0.0
    %2338 = vmatprep.subr.mxu0 0.0
    %2339 = vmatpush1.msra.mxu0 0.0
    %2340 = vmatprep.subr.mxu0 0.0
    %2341 = vmatpush1.msra.mxu0 0.0
    %2342 = vmatprep.subr.mxu0 0.0
    %2343 = vmatpush1.msra.mxu0 0.0
    %2344 = vmatprep.subr.mxu0 0.0
    %2345 = vmatpush1.msra.mxu0 0.0
    %2346 = vmatprep.subr.mxu0 0.0
    %2347 = vmatpush1.msra.mxu0 0.0
    %2348 = vmatprep.subr.mxu0 0.0
    %2349 = vmatpush1.msra.mxu0 0.0
    %2350 = vmatprep.subr.mxu0 0.0
    %2351 = vmatpush1.msra.mxu0 0.0
    %2352 = vmatprep.subr.mxu0 0.0
    %2353 = vmatpush1.msra.mxu0 0.0
    %2354 = vmatprep.subr.mxu0 0.0
    %2355 = vmatpush1.msra.mxu0 0.0
    %2356 = vmatprep.subr.mxu0 0.0
    %2357 = vmatpush1.msra.mxu0 0.0
    %2358 = vmatprep.subr.mxu0 0.0
    %2359 = vmatpush1.msra.mxu0 0.0
    %2360 = vmatprep.subr.mxu0 0.0
    %2361 = vmatpush1.msra.mxu0 0.0
    %2362 = vmatprep.subr.mxu0 0.0
    %2363 = vmatpush1.msra.mxu0 0.0
    %2364 = vmatprep.subr.mxu0 0.0
    %2365 = vmatpush1.msra.mxu0 0.0
    %2366 = vmatprep.subr.mxu0 0.0
    %2367 = vmatpush1.msra.mxu0 0.0
    %2368 = vmatprep.subr.mxu0 0.0
    %2369 = vmatpush1.msra.mxu0 0.0
    %2370 = vmatprep.mubr.f32.mxu0 0.0
    %v2371 = vand.u32 %v2179, 4294901760
    %2372 = vmatmul.mubr.f32.gmra.mrb[0].mxu0 %v2371
    %v2373 = vpop.f32.mrb[0].mxu0
    %v2374 = vadd.f32 %v2263, %v2373
    %v2375 = vpop.f32.mrb[0].mxu0
    %2376 = vmatprep.mubr.f32.mxu0 0.0
    %v2377 = vand.u32 %v2182, 4294901760
    %2378 = vmatmul.mubr.f32.gmra.mrb[0].mxu0 %v2377
    %v2379 = vpop.f32.mrb[0].mxu0
    %v2380 = vadd.f32 %v2273, %v2379
    %v2381 = vpop.f32.mrb[0].mxu0
    %2382 = vmatprep.mubr.f32.mxu0 0.0
    %v2383 = vand.u32 %v2185, 4294901760
    %2384 = vmatmul.mubr.f32.gmra.mrb[0].mxu0 %v2383
    %v2385 = vpop.f32.mrb[0].mxu0
    %v2386 = vadd.f32 %v2283, %v2385
    %v2387 = vpop.f32.mrb[0].mxu0
    %2388 = vdwg.mxu0
    %2389 = vmatprep.subr.mxu0 0.0
    %v2390 = vand.u32 %v2167, 4294901760
    %v2391 = vsub.f32 %v2167, %v2390
    %2392 = vmatpush1.msra.mxu0 %v2391
    %2393 = vmatprep.subr.mxu0 0.0
    %v2394 = vand.u32 %v2168, 4294901760
    %v2395 = vsub.f32 %v2168, %v2394
    %2396 = vmatpush1.msra.mxu0 %v2395
    %2397 = vmatprep.subr.mxu0 0.0
    %v2398 = vand.u32 %v2169, 4294901760
    %v2399 = vsub.f32 %v2169, %v2398
    %2400 = vmatpush1.msra.mxu0 %v2399
    %2401 = vmatprep.subr.mxu0 0.0
    %v2402 = vand.u32 %v2170, 4294901760
    %v2403 = vsub.f32 %v2170, %v2402
    %2404 = vmatpush1.msra.mxu0 %v2403
    %2405 = vmatprep.subr.mxu0 0.0
    %2406 = vmatpush1.msra.mxu0 0.0
    %2407 = vmatprep.subr.mxu0 0.0
    %2408 = vmatpush1.msra.mxu0 0.0
    %2409 = vmatprep.subr.mxu0 0.0
    %2410 = vmatpush1.msra.mxu0 0.0
    %2411 = vmatprep.subr.mxu0 0.0
    %2412 = vmatpush1.msra.mxu0 0.0
    %2413 = vmatprep.subr.mxu0 0.0
    %2414 = vmatpush1.msra.mxu0 0.0
    %2415 = vmatprep.subr.mxu0 0.0
    %2416 = vmatpush1.msra.mxu0 0.0
    %2417 = vmatprep.subr.mxu0 0.0
    %2418 = vmatpush1.msra.mxu0 0.0
    %2419 = vmatprep.subr.mxu0 0.0
    %2420 = vmatpush1.msra.mxu0 0.0
    %2421 = vmatprep.subr.mxu0 0.0
    %2422 = vmatpush1.msra.mxu0 0.0
    %2423 = vmatprep.subr.mxu0 0.0
    %2424 = vmatpush1.msra.mxu0 0.0
    %2425 = vmatprep.subr.mxu0 0.0
    %2426 = vmatpush1.msra.mxu0 0.0
    %2427 = vmatprep.subr.mxu0 0.0
    %2428 = vmatpush1.msra.mxu0 0.0
    %2429 = vmatprep.subr.mxu0 0.0
    %2430 = vmatpush1.msra.mxu0 0.0
    %2431 = vmatprep.subr.mxu0 0.0
    %2432 = vmatpush1.msra.mxu0 0.0
    %2433 = vmatprep.subr.mxu0 0.0
    %2434 = vmatpush1.msra.mxu0 0.0
    %2435 = vmatprep.subr.mxu0 0.0
    %2436 = vmatpush1.msra.mxu0 0.0
    %2437 = vmatprep.subr.mxu0 0.0
    %2438 = vmatpush1.msra.mxu0 0.0
    %2439 = vmatprep.subr.mxu0 0.0
    %2440 = vmatpush1.msra.mxu0 0.0
    %2441 = vmatprep.subr.mxu0 0.0
    %2442 = vmatpush1.msra.mxu0 0.0
    %2443 = vmatprep.subr.mxu0 0.0
    %2444 = vmatpush1.msra.mxu0 0.0
    %2445 = vmatprep.subr.mxu0 0.0
    %2446 = vmatpush1.msra.mxu0 0.0
    %2447 = vmatprep.subr.mxu0 0.0
    %2448 = vmatpush1.msra.mxu0 0.0
    %2449 = vmatprep.subr.mxu0 0.0
    %2450 = vmatpush1.msra.mxu0 0.0
    %2451 = vmatprep.subr.mxu0 0.0
    %2452 = vmatpush1.msra.mxu0 0.0
    %2453 = vmatprep.subr.mxu0 0.0
    %2454 = vmatpush1.msra.mxu0 0.0
    %2455 = vmatprep.subr.mxu0 0.0
    %2456 = vmatpush1.msra.mxu0 0.0
    %2457 = vmatprep.subr.mxu0 0.0
    %2458 = vmatpush1.msra.mxu0 0.0
    %2459 = vmatprep.subr.mxu0 0.0
    %2460 = vmatpush1.msra.mxu0 0.0
    %2461 = vmatprep.mubr.f32.mxu0 0.0
    %v2462 = vand.u32 %v2179, 4294901760
    %v2463 = vsub.f32 %v2179, %v2462
    %2464 = vmatmul.mubr.f32.gmra.mrb[0].mxu0 %v2463
    %v2465 = vpop.f32.mrb[0].mxu0
    %v2466 = vadd.f32 %v2374, %v2465
    %v2467 = vpop.f32.mrb[0].mxu0
    %2468 = vmatprep.mubr.f32.mxu0 0.0
    %v2469 = vand.u32 %v2182, 4294901760
    %v2470 = vsub.f32 %v2182, %v2469
    %2471 = vmatmul.mubr.f32.gmra.mrb[0].mxu0 %v2470
    %v2472 = vpop.f32.mrb[0].mxu0
    %v2473 = vadd.f32 %v2380, %v2472
    %v2474 = vpop.f32.mrb[0].mxu0
    %2475 = vmatprep.mubr.f32.mxu0 0.0
    %v2476 = vand.u32 %v2185, 4294901760
    %v2477 = vsub.f32 %v2185, %v2476
    %2478 = vmatmul.mubr.f32.gmra.mrb[0].mxu0 %v2477
    %v2479 = vpop.f32.mrb[0].mxu0
    %v2480 = vadd.f32 %v2386, %v2479
    %v2481 = vpop.f32.mrb[0].mxu0
    %2482 = vdwg.mxu0
    %2483 = vmatprep.subr.mxu0 0.0
    %v2484 = vand.u32 %v2167, 4294901760
    %2485 = vmatpush1.msra.mxu0 %v2484
    %2486 = vmatprep.subr.mxu0 0.0
    %v2487 = vand.u32 %v2168, 4294901760
    %2488 = vmatpush1.msra.mxu0 %v2487
    %2489 = vmatprep.subr.mxu0 0.0
    %v2490 = vand.u32 %v2169, 4294901760
    %2491 = vmatpush1.msra.mxu0 %v2490
    %2492 = vmatprep.subr.mxu0 0.0
    %v2493 = vand.u32 %v2170, 4294901760
    %2494 = vmatpush1.msra.mxu0 %v2493
    %2495 = vmatprep.subr.mxu0 0.0
    %2496 = vmatpush1.msra.mxu0 0.0
    %2497 = vmatprep.subr.mxu0 0.0
    %2498 = vmatpush1.msra.mxu0 0.0
    %2499 = vmatprep.subr.mxu0 0.0
    %2500 = vmatpush1.msra.mxu0 0.0
    %2501 = vmatprep.subr.mxu0 0.0
    %2502 = vmatpush1.msra.mxu0 0.0
    %2503 = vmatprep.subr.mxu0 0.0
    %2504 = vmatpush1.msra.mxu0 0.0
    %2505 = vmatprep.subr.mxu0 0.0
    %2506 = vmatpush1.msra.mxu0 0.0
    %2507 = vmatprep.subr.mxu0 0.0
    %2508 = vmatpush1.msra.mxu0 0.0
    %2509 = vmatprep.subr.mxu0 0.0
    %2510 = vmatpush1.msra.mxu0 0.0
    %2511 = vmatprep.subr.mxu0 0.0
    %2512 = vmatpush1.msra.mxu0 0.0
    %2513 = vmatprep.subr.mxu0 0.0
    %2514 = vmatpush1.msra.mxu0 0.0
    %2515 = vmatprep.subr.mxu0 0.0
    %2516 = vmatpush1.msra.mxu0 0.0
    %2517 = vmatprep.subr.mxu0 0.0
    %2518 = vmatpush1.msra.mxu0 0.0
    %2519 = vmatprep.subr.mxu0 0.0
    %2520 = vmatpush1.msra.mxu0 0.0
    %2521 = vmatprep.subr.mxu0 0.0
    %2522 = vmatpush1.msra.mxu0 0.0
    %2523 = vmatprep.subr.mxu0 0.0
    %2524 = vmatpush1.msra.mxu0 0.0
    %2525 = vmatprep.subr.mxu0 0.0
    %2526 = vmatpush1.msra.mxu0 0.0
    %2527 = vmatprep.subr.mxu0 0.0
    %2528 = vmatpush1.msra.mxu0 0.0
    %2529 = vmatprep.subr.mxu0 0.0
    %2530 = vmatpush1.msra.mxu0 0.0
    %2531 = vmatprep.subr.mxu0 0.0
    %2532 = vmatpush1.msra.mxu0 0.0
    %2533 = vmatprep.subr.mxu0 0.0
    %2534 = vmatpush1.msra.mxu0 0.0
    %2535 = vmatprep.subr.mxu0 0.0
    %2536 = vmatpush1.msra.mxu0 0.0
    %2537 = vmatprep.subr.mxu0 0.0
    %2538 = vmatpush1.msra.mxu0 0.0
    %2539 = vmatprep.subr.mxu0 0.0
    %2540 = vmatpush1.msra.mxu0 0.0
    %2541 = vmatprep.subr.mxu0 0.0
    %2542 = vmatpush1.msra.mxu0 0.0
    %2543 = vmatprep.subr.mxu0 0.0
    %2544 = vmatpush1.msra.mxu0 0.0
    %2545 = vmatprep.subr.mxu0 0.0
    %2546 = vmatpush1.msra.mxu0 0.0
    %2547 = vmatprep.subr.mxu0 0.0
    %2548 = vmatpush1.msra.mxu0 0.0
    %2549 = vmatprep.subr.mxu0 0.0
    %2550 = vmatpush1.msra.mxu0 0.0
    %2551 = vmatprep.mubr.f32.mxu0 0.0
    %v2552 = vand.u32 %v2179, 4294901760
    %v2553 = vsub.f32 %v2179, %v2552
    %v2554 = vand.u32 %v2553, 4294901760
    %2555 = vmatmul.mubr.f32.gmra.mrb[0].mxu0 %v2554
    %v2556 = vpop.f32.mrb[0].mxu0
    %v2557 = vadd.f32 %v2466, %v2556
    %v2558 = vpop.f32.mrb[0].mxu0
    %2559 = vmatprep.mubr.f32.mxu0 0.0
    %v2560 = vand.u32 %v2182, 4294901760
    %v2561 = vsub.f32 %v2182, %v2560
    %v2562 = vand.u32 %v2561, 4294901760
    %2563 = vmatmul.mubr.f32.gmra.mrb[0].mxu0 %v2562
    %v2564 = vpop.f32.mrb[0].mxu0
    %v2565 = vadd.f32 %v2473, %v2564
    %v2566 = vpop.f32.mrb[0].mxu0
    %2567 = vmatprep.mubr.f32.mxu0 0.0
    %v2568 = vand.u32 %v2185, 4294901760
    %v2569 = vsub.f32 %v2185, %v2568
    %v2570 = vand.u32 %v2569, 4294901760
    %2571 = vmatmul.mubr.f32.gmra.mrb[0].mxu0 %v2570
    %v2572 = vpop.f32.mrb[0].mxu0
    %v2573 = vadd.f32 %v2480, %v2572
    %v2574 = vpop.f32.mrb[0].mxu0
    %2575 = vdwg.mxu0
    %2576 = vmatprep.subr.mxu0 0.0
    %v2577 = vand.u32 %v2167, 4294901760
    %v2578 = vsub.f32 %v2167, %v2577
    %v2579 = vand.u32 %v2578, 4294901760
    %2580 = vmatpush1.msra.mxu0 %v2579
    %2581 = vmatprep.subr.mxu0 0.0
    %v2582 = vand.u32 %v2168, 4294901760
    %v2583 = vsub.f32 %v2168, %v2582
    %v2584 = vand.u32 %v2583, 4294901760
    %2585 = vmatpush1.msra.mxu0 %v2584
    %2586 = vmatprep.subr.mxu0 0.0
    %v2587 = vand.u32 %v2169, 4294901760
    %v2588 = vsub.f32 %v2169, %v2587
    %v2589 = vand.u32 %v2588, 4294901760
    %2590 = vmatpush1.msra.mxu0 %v2589
    %2591 = vmatprep.subr.mxu0 0.0
    %v2592 = vand.u32 %v2170, 4294901760
    %v2593 = vsub.f32 %v2170, %v2592
    %v2594 = vand.u32 %v2593, 4294901760
    %2595 = vmatpush1.msra.mxu0 %v2594
    %2596 = vmatprep.subr.mxu0 0.0
    %2597 = vmatpush1.msra.mxu0 0.0
    %2598 = vmatprep.subr.mxu0 0.0
    %2599 = vmatpush1.msra.mxu0 0.0
    %2600 = vmatprep.subr.mxu0 0.0
    %2601 = vmatpush1.msra.mxu0 0.0
    %2602 = vmatprep.subr.mxu0 0.0
    %2603 = vmatpush1.msra.mxu0 0.0
    %2604 = vmatprep.subr.mxu0 0.0
    %2605 = vmatpush1.msra.mxu0 0.0
    %2606 = vmatprep.subr.mxu0 0.0
    %2607 = vmatpush1.msra.mxu0 0.0
    %2608 = vmatprep.subr.mxu0 0.0
    %2609 = vmatpush1.msra.mxu0 0.0
    %2610 = vmatprep.subr.mxu0 0.0
    %2611 = vmatpush1.msra.mxu0 0.0
    %2612 = vmatprep.subr.mxu0 0.0
    %2613 = vmatpush1.msra.mxu0 0.0
    %2614 = vmatprep.subr.mxu0 0.0
    %2615 = vmatpush1.msra.mxu0 0.0
    %2616 = vmatprep.subr.mxu0 0.0
    %2617 = vmatpush1.msra.mxu0 0.0
    %2618 = vmatprep.subr.mxu0 0.0
    %2619 = vmatpush1.msra.mxu0 0.0
    %2620 = vmatprep.subr.mxu0 0.0
    %2621 = vmatpush1.msra.mxu0 0.0
    %2622 = vmatprep.subr.mxu0 0.0
    %2623 = vmatpush1.msra.mxu0 0.0
    %2624 = vmatprep.subr.mxu0 0.0
    %2625 = vmatpush1.msra.mxu0 0.0
    %2626 = vmatprep.subr.mxu0 0.0
    %2627 = vmatpush1.msra.mxu0 0.0
    %2628 = vmatprep.subr.mxu0 0.0
    %2629 = vmatpush1.msra.mxu0 0.0
    %2630 = vmatprep.subr.mxu0 0.0
    %2631 = vmatpush1.msra.mxu0 0.0
    %2632 = vmatprep.subr.mxu0 0.0
    %2633 = vmatpush1.msra.mxu0 0.0
    %2634 = vmatprep.subr.mxu0 0.0
    %2635 = vmatpush1.msra.mxu0 0.0
    %2636 = vmatprep.subr.mxu0 0.0
    %2637 = vmatpush1.msra.mxu0 0.0
    %2638 = vmatprep.subr.mxu0 0.0
    %2639 = vmatpush1.msra.mxu0 0.0
    %2640 = vmatprep.subr.mxu0 0.0
    %2641 = vmatpush1.msra.mxu0 0.0
    %2642 = vmatprep.subr.mxu0 0.0
    %2643 = vmatpush1.msra.mxu0 0.0
    %2644 = vmatprep.subr.mxu0 0.0
    %2645 = vmatpush1.msra.mxu0 0.0
    %2646 = vmatprep.subr.mxu0 0.0
    %2647 = vmatpush1.msra.mxu0 0.0
    %2648 = vmatprep.subr.mxu0 0.0
    %2649 = vmatpush1.msra.mxu0 0.0
    %2650 = vmatprep.subr.mxu0 0.0
    %2651 = vmatpush1.msra.mxu0 0.0
    %2652 = vmatprep.mubr.f32.mxu0 0.0
    %v2653 = vand.u32 %v2179, 4294901760
    %2654 = vmatmul.mubr.f32.gmra.mrb[0].mxu0 %v2653
    %v2655 = vpop.f32.mrb[0].mxu0
    %v2656 = vadd.f32 %v2557, %v2655
    %v2657 = vpop.f32.mrb[0].mxu0
    %2658 = vmatprep.mubr.f32.mxu0 0.0
    %v2659 = vand.u32 %v2182, 4294901760
    %2660 = vmatmul.mubr.f32.gmra.mrb[0].mxu0 %v2659
    %v2661 = vpop.f32.mrb[0].mxu0
    %v2662 = vadd.f32 %v2565, %v2661
    %v2663 = vpop.f32.mrb[0].mxu0
    %2664 = vmatprep.mubr.f32.mxu0 0.0
    %v2665 = vand.u32 %v2185, 4294901760
    %2666 = vmatmul.mubr.f32.gmra.mrb[0].mxu0 %v2665
    %v2667 = vpop.f32.mrb[0].mxu0
    %v2668 = vadd.f32 %v2573, %v2667
    %v2669 = vpop.f32.mrb[0].mxu0
    %2670 = vdwg.mxu0
    %2671 = vmatprep.subr.mxu0 0.0
    %v2672 = vand.u32 %v2167, 4294901760
    %2673 = vmatpush1.msra.mxu0 %v2672
    %2674 = vmatprep.subr.mxu0 0.0
    %v2675 = vand.u32 %v2168, 4294901760
    %2676 = vmatpush1.msra.mxu0 %v2675
    %2677 = vmatprep.subr.mxu0 0.0
    %v2678 = vand.u32 %v2169, 4294901760
    %2679 = vmatpush1.msra.mxu0 %v2678
    %2680 = vmatprep.subr.mxu0 0.0
    %v2681 = vand.u32 %v2170, 4294901760
    %2682 = vmatpush1.msra.mxu0 %v2681
    %2683 = vmatprep.subr.mxu0 0.0
    %2684 = vmatpush1.msra.mxu0 0.0
    %2685 = vmatprep.subr.mxu0 0.0
    %2686 = vmatpush1.msra.mxu0 0.0
    %2687 = vmatprep.subr.mxu0 0.0
    %2688 = vmatpush1.msra.mxu0 0.0
    %2689 = vmatprep.subr.mxu0 0.0
    %2690 = vmatpush1.msra.mxu0 0.0
    %2691 = vmatprep.subr.mxu0 0.0
    %2692 = vmatpush1.msra.mxu0 0.0
    %2693 = vmatprep.subr.mxu0 0.0
    %2694 = vmatpush1.msra.mxu0 0.0
    %2695 = vmatprep.subr.mxu0 0.0
    %2696 = vmatpush1.msra.mxu0 0.0
    %2697 = vmatprep.subr.mxu0 0.0
    %2698 = vmatpush1.msra.mxu0 0.0
    %2699 = vmatprep.subr.mxu0 0.0
    %2700 = vmatpush1.msra.mxu0 0.0
    %2701 = vmatprep.subr.mxu0 0.0
    %2702 = vmatpush1.msra.mxu0 0.0
    %2703 = vmatprep.subr.mxu0 0.0
    %2704 = vmatpush1.msra.mxu0 0.0
    %2705 = vmatprep.subr.mxu0 0.0
    %2706 = vmatpush1.msra.mxu0 0.0
    %2707 = vmatprep.subr.mxu0 0.0
    %2708 = vmatpush1.msra.mxu0 0.0
    %2709 = vmatprep.subr.mxu0 0.0
    %2710 = vmatpush1.msra.mxu0 0.0
    %2711 = vmatprep.subr.mxu0 0.0
    %2712 = vmatpush1.msra.mxu0 0.0
    %2713 = vmatprep.subr.mxu0 0.0
    %2714 = vmatpush1.msra.mxu0 0.0
    %2715 = vmatprep.subr.mxu0 0.0
    %2716 = vmatpush1.msra.mxu0 0.0
    %2717 = vmatprep.subr.mxu0 0.0
    %2718 = vmatpush1.msra.mxu0 0.0
    %2719 = vmatprep.subr.mxu0 0.0
    %2720 = vmatpush1.msra.mxu0 0.0
    %2721 = vmatprep.subr.mxu0 0.0
    %2722 = vmatpush1.msra.mxu0 0.0
    %2723 = vmatprep.subr.mxu0 0.0
    %2724 = vmatpush1.msra.mxu0 0.0
    %2725 = vmatprep.subr.mxu0 0.0
    %2726 = vmatpush1.msra.mxu0 0.0
    %2727 = vmatprep.subr.mxu0 0.0
    %2728 = vmatpush1.msra.mxu0 0.0
    %2729 = vmatprep.subr.mxu0 0.0
    %2730 = vmatpush1.msra.mxu0 0.0
    %2731 = vmatprep.subr.mxu0 0.0
    %2732 = vmatpush1.msra.mxu0 0.0
    %2733 = vmatprep.subr.mxu0 0.0
    %2734 = vmatpush1.msra.mxu0 0.0
    %2735 = vmatprep.subr.mxu0 0.0
    %2736 = vmatpush1.msra.mxu0 0.0
    %2737 = vmatprep.subr.mxu0 0.0
    %2738 = vmatpush1.msra.mxu0 0.0
    %2739 = vmatprep.mubr.f32.mxu0 0.0
    %v2740 = vand.u32 %v2179, 4294901760
    %2741 = vmatmul.mubr.f32.gmra.mrb[0].mxu0 %v2740
    %v2742 = vpop.f32.mrb[0].mxu0
    %v2743 = vadd.f32 %v2656, %v2742
    %v2744 = vpop.f32.mrb[0].mxu0
    %2745 = vmatprep.mubr.f32.mxu0 0.0
    %v2746 = vand.u32 %v2182, 4294901760
    %2747 = vmatmul.mubr.f32.gmra.mrb[0].mxu0 %v2746
    %v2748 = vpop.f32.mrb[0].mxu0
    %v2749 = vadd.f32 %v2662, %v2748
    %v2750 = vpop.f32.mrb[0].mxu0
    %2751 = vmatprep.mubr.f32.mxu0 0.0
    %v2752 = vand.u32 %v2185, 4294901760
    %2753 = vmatmul.mubr.f32.gmra.mrb[0].mxu0 %v2752
    %v2754 = vpop.f32.mrb[0].mxu0
    %v2755 = vadd.f32 %v2668, %v2754
    %v2756 = vpop.f32.mrb[0].mxu0
    %2757 = vdwg.mxu0
    %vm2758 = vcmp.eq.s32.totalorder %v1017, 0
    %vm2759 = vcmp.eq.s32.totalorder %v1018, 0
    %vm2760 = vcmp.eq.s32.totalorder %v1019, 0
    %vm2761 = vcmp.eq.s32.totalorder %v1017, 1
    %vm2762 = vcmp.eq.s32.totalorder %v1018, 1
    %vm2763 = vcmp.eq.s32.totalorder %v1019, 1
    %v2764 = vsel %vm2761, 3, 15
    %v2765 = vsel %vm2762, 3, 15
    %v2766 = vsel %vm2763, 3, 15
    %v2767 = vsel %vm2758, 0, %v2764
    %v2768 = vsel %vm2759, 0, %v2765
    %v2769 = vsel %vm2760, 0, %v2766
    %v2770 = vsel %vm2761, 15, 19
    %v2771 = vsel %vm2762, 15, 19
    %v2772 = vsel %vm2763, 15, 19
    %v2773 = vsel %vm2758, 3, %v2770
    %v2774 = vsel %vm2759, 3, %v2771
    %v2775 = vsel %vm2760, 3, %v2772
    %vm2776 = vcmp.ge.s32.totalorder %v1021, %v2767
    %vm2777 = vcmp.ge.s32.totalorder %v1021, %v2768
    %vm2778 = vcmp.ge.s32.totalorder %v1021, %v2769
    %vm2779 = vcmp.lt.s32.totalorder %v1021, %v2773
    %vm2780 = vcmp.lt.s32.totalorder %v1021, %v2774
    %vm2781 = vcmp.lt.s32.totalorder %v1021, %v2775
    %vm2782 = vmand %vm2776, %vm2779
    %vm2783 = vmand %vm2777, %vm2780
    %vm2784 = vmand %vm2778, %vm2781
    %v2785 = vsel %vm2782, %v2743, -1e+30
    %v2786 = vsel %vm2783, %v2749, -1e+30
    %v2787 = vsel %vm2784, %v2755, -1e+30
    %2788 = vmax.xlane.f32.xlu0 %v2785
    %v2789 = vpop.xlane.xlu0 %2788
    %2790 = vmax.xlane.f32.xlu0 %v2786
    %v2791 = vpop.xlane.xlu0 %2790
    %2792 = vmax.xlane.f32.xlu0 %v2787
    %v2793 = vpop.xlane.xlu0 %2792
    %v2794 = vsub.f32 %v2785, %v2789
    %v2795 = vsub.f32 %v2786, %v2791
    %v2796 = vsub.f32 %v2787, %v2793
    %v2797 = vmul.f32 %v2794, 1.442695
    %v2798 = vpow.pop %v2797
    %v2799 = vmul.f32 %v2795, 1.442695
    %v2800 = vpow.pop %v2799
    %v2801 = vmul.f32 %v2796, 1.442695
    %v2802 = vpow.pop %v2801
    %2803 = vadd.xlane.f32.xlu0 %v2798
    %v2804 = vpop.xlane.xlu0 %2803
    %2805 = vadd.xlane.f32.xlu0 %v2800
    %v2806 = vpop.xlane.xlu0 %2805
    %2807 = vadd.xlane.f32.xlu0 %v2802
    %v2808 = vpop.xlane.xlu0 %2807
    %v2809 = vrcp.pop %v2804
    %v2810 = vrcp.pop %v2806
    %v2811 = vrcp.pop %v2808
    %v2812 = vmul.f32 %v2798, %v2809
    %v2813 = vmul.f32 %v2800, %v2810
    %v2814 = vmul.f32 %v2802, %v2811
    %v2815 = vadd.s32 %v1014, 24
    %v2816 = vadd.s32 %v1014, 32
    %v2817 = vadd.s32 %v1014, 40
    %v2818 = vadd.s32 %v1014, 48
    %v2819 = vadd.s32 %v1014, 56
    %v2820 = vadd.s32 %v1014, 64
    %v2821 = vadd.s32 %v1014, 72
    %v2822 = vadd.s32 %v1014, 80
    %v2823 = vadd.s32 %v1014, 88
    %v2824 = vadd.s32 %v1014, 96
    %v2825 = vadd.s32 %v1014, 104
    %v2826 = vadd.s32 %v1014, 112
    %v2827 = vadd.s32 %v1014, 120
    %vm2828 = vcmp.ge.s32.totalorder %v1014, 3
    %vm2829 = vcmp.ge.s32.totalorder %v1015, 3
    %vm2830 = vcmp.ge.s32.totalorder %v1016, 3
    %vm2831 = vcmp.ge.s32.totalorder %v2815, 3
    %vm2832 = vcmp.ge.s32.totalorder %v2816, 3
    %vm2833 = vcmp.ge.s32.totalorder %v2817, 3
    %vm2834 = vcmp.ge.s32.totalorder %v2818, 3
    %vm2835 = vcmp.ge.s32.totalorder %v2819, 3
    %vm2836 = vcmp.ge.s32.totalorder %v2820, 3
    %vm2837 = vcmp.ge.s32.totalorder %v2821, 3
    %vm2838 = vcmp.ge.s32.totalorder %v2822, 3
    %vm2839 = vcmp.ge.s32.totalorder %v2823, 3
    %vm2840 = vcmp.ge.s32.totalorder %v2824, 3
    %vm2841 = vcmp.ge.s32.totalorder %v2825, 3
    %vm2842 = vcmp.ge.s32.totalorder %v2826, 3
    %vm2843 = vcmp.ge.s32.totalorder %v2827, 3
    %vm2844 = vcmp.lt.s32.totalorder %v1014, 15
    %vm2845 = vcmp.lt.s32.totalorder %v1015, 15
    %vm2846 = vcmp.lt.s32.totalorder %v1016, 15
    %vm2847 = vcmp.lt.s32.totalorder %v2815, 15
    %vm2848 = vcmp.lt.s32.totalorder %v2816, 15
    %vm2849 = vcmp.lt.s32.totalorder %v2817, 15
    %vm2850 = vcmp.lt.s32.totalorder %v2818, 15
    %vm2851 = vcmp.lt.s32.totalorder %v2819, 15
    %vm2852 = vcmp.lt.s32.totalorder %v2820, 15
    %vm2853 = vcmp.lt.s32.totalorder %v2821, 15
    %vm2854 = vcmp.lt.s32.totalorder %v2822, 15
    %vm2855 = vcmp.lt.s32.totalorder %v2823, 15
    %vm2856 = vcmp.lt.s32.totalorder %v2824, 15
    %vm2857 = vcmp.lt.s32.totalorder %v2825, 15
    %vm2858 = vcmp.lt.s32.totalorder %v2826, 15
    %vm2859 = vcmp.lt.s32.totalorder %v2827, 15
    %vm2860 = vmand %vm2828, %vm2844
    %vm2861 = vmand %vm2829, %vm2845
    %vm2862 = vmand %vm2830, %vm2846
    %vm2863 = vmand %vm2831, %vm2847
    %vm2864 = vmand %vm2832, %vm2848
    %vm2865 = vmand %vm2833, %vm2849
    %vm2866 = vmand %vm2834, %vm2850
    %vm2867 = vmand %vm2835, %vm2851
    %vm2868 = vmand %vm2836, %vm2852
    %vm2869 = vmand %vm2837, %vm2853
    %vm2870 = vmand %vm2838, %vm2854
    %vm2871 = vmand %vm2839, %vm2855
    %vm2872 = vmand %vm2840, %vm2856
    %vm2873 = vmand %vm2841, %vm2857
    %vm2874 = vmand %vm2842, %vm2858
    %vm2875 = vmand %vm2843, %vm2859
    %v2876 = vsub.s32 %v1014, 3
    %v2877 = vsub.s32 %v1015, 3
    %v2878 = vsub.s32 %v1016, 3
    %v2879 = vsub.s32 %v2815, 3
    %v2880 = vsub.s32 %v2816, 3
    %v2881 = vsub.s32 %v2817, 3
    %v2882 = vsub.s32 %v2818, 3
    %v2883 = vsub.s32 %v2819, 3
    %v2884 = vsub.s32 %v2820, 3
    %v2885 = vsub.s32 %v2821, 3
    %v2886 = vsub.s32 %v2822, 3
    %v2887 = vsub.s32 %v2823, 3
    %v2888 = vsub.s32 %v2824, 3
    %v2889 = vsub.s32 %v2825, 3
    %v2890 = vsub.s32 %v2826, 3
    %v2891 = vsub.s32 %v2827, 3
    %v2892 = vshra.s32 %v2876, 2
    %v2893 = vshra.s32 %v2877, 2
    %v2894 = vshra.s32 %v2878, 2
    %v2895 = vshra.s32 %v2879, 2
    %v2896 = vshra.s32 %v2880, 2
    %v2897 = vshra.s32 %v2881, 2
    %v2898 = vshra.s32 %v2882, 2
    %v2899 = vshra.s32 %v2883, 2
    %v2900 = vshra.s32 %v2884, 2
    %v2901 = vshra.s32 %v2885, 2
    %v2902 = vshra.s32 %v2886, 2
    %v2903 = vshra.s32 %v2887, 2
    %v2904 = vshra.s32 %v2888, 2
    %v2905 = vshra.s32 %v2889, 2
    %v2906 = vshra.s32 %v2890, 2
    %v2907 = vshra.s32 %v2891, 2
    %v2908 = vand.u32 %v2876, 3
    %v2909 = vand.u32 %v2877, 3
    %v2910 = vand.u32 %v2878, 3
    %v2911 = vand.u32 %v2879, 3
    %v2912 = vand.u32 %v2880, 3
    %v2913 = vand.u32 %v2881, 3
    %v2914 = vand.u32 %v2882, 3
    %v2915 = vand.u32 %v2883, 3
    %v2916 = vand.u32 %v2884, 3
    %v2917 = vand.u32 %v2885, 3
    %v2918 = vand.u32 %v2886, 3
    %v2919 = vand.u32 %v2887, 3
    %v2920 = vand.u32 %v2888, 3
    %v2921 = vand.u32 %v2889, 3
    %v2922 = vand.u32 %v2890, 3
    %v2923 = vand.u32 %v2891, 3
    %vm2924 = vcmp.eq.s32.totalorder %v1021, %v2892
    %vm2925 = vcmp.eq.s32.totalorder %v1021, %v2893
    %vm2926 = vcmp.eq.s32.totalorder %v1021, %v2894
    %vm2927 = vcmp.eq.s32.totalorder %v1021, %v2895
    %vm2928 = vcmp.eq.s32.totalorder %v1021, %v2896
    %vm2929 = vcmp.eq.s32.totalorder %v1021, %v2897
    %vm2930 = vcmp.eq.s32.totalorder %v1021, %v2898
    %vm2931 = vcmp.eq.s32.totalorder %v1021, %v2899
    %vm2932 = vcmp.eq.s32.totalorder %v1021, %v2900
    %vm2933 = vcmp.eq.s32.totalorder %v1021, %v2901
    %vm2934 = vcmp.eq.s32.totalorder %v1021, %v2902
    %vm2935 = vcmp.eq.s32.totalorder %v1021, %v2903
    %vm2936 = vcmp.eq.s32.totalorder %v1021, %v2904
    %vm2937 = vcmp.eq.s32.totalorder %v1021, %v2905
    %vm2938 = vcmp.eq.s32.totalorder %v1021, %v2906
    %vm2939 = vcmp.eq.s32.totalorder %v1021, %v2907
    %v2940 = vadd.s32 %v2908, 15
    %v2941 = vadd.s32 %v2909, 15
    %v2942 = vadd.s32 %v2910, 15
    %v2943 = vadd.s32 %v2911, 15
    %v2944 = vadd.s32 %v2912, 15
    %v2945 = vadd.s32 %v2913, 15
    %v2946 = vadd.s32 %v2914, 15
    %v2947 = vadd.s32 %v2915, 15
    %v2948 = vadd.s32 %v2916, 15
    %v2949 = vadd.s32 %v2917, 15
    %v2950 = vadd.s32 %v2918, 15
    %v2951 = vadd.s32 %v2919, 15
    %v2952 = vadd.s32 %v2920, 15
    %v2953 = vadd.s32 %v2921, 15
    %v2954 = vadd.s32 %v2922, 15
    %v2955 = vadd.s32 %v2923, 15
    %vm2956 = vcmp.eq.s32.totalorder %v1021, %v2940
    %vm2957 = vcmp.eq.s32.totalorder %v1021, %v2941
    %vm2958 = vcmp.eq.s32.totalorder %v1021, %v2942
    %vm2959 = vcmp.eq.s32.totalorder %v1021, %v2943
    %vm2960 = vcmp.eq.s32.totalorder %v1021, %v2944
    %vm2961 = vcmp.eq.s32.totalorder %v1021, %v2945
    %vm2962 = vcmp.eq.s32.totalorder %v1021, %v2946
    %vm2963 = vcmp.eq.s32.totalorder %v1021, %v2947
    %vm2964 = vcmp.eq.s32.totalorder %v1021, %v2948
    %vm2965 = vcmp.eq.s32.totalorder %v1021, %v2949
    %vm2966 = vcmp.eq.s32.totalorder %v1021, %v2950
    %vm2967 = vcmp.eq.s32.totalorder %v1021, %v2951
    %vm2968 = vcmp.eq.s32.totalorder %v1021, %v2952
    %vm2969 = vcmp.eq.s32.totalorder %v1021, %v2953
    %vm2970 = vcmp.eq.s32.totalorder %v1021, %v2954
    %vm2971 = vcmp.eq.s32.totalorder %v1021, %v2955
    %vm2972 = vmor %vm2924, %vm2956
    %vm2973 = vmor %vm2925, %vm2957
    %vm2974 = vmor %vm2926, %vm2958
    %vm2975 = vmor %vm2927, %vm2959
    %vm2976 = vmor %vm2928, %vm2960
    %vm2977 = vmor %vm2929, %vm2961
    %vm2978 = vmor %vm2930, %vm2962
    %vm2979 = vmor %vm2931, %vm2963
    %vm2980 = vmor %vm2932, %vm2964
    %vm2981 = vmor %vm2933, %vm2965
    %vm2982 = vmor %vm2934, %vm2966
    %vm2983 = vmor %vm2935, %vm2967
    %vm2984 = vmor %vm2936, %vm2968
    %vm2985 = vmor %vm2937, %vm2969
    %vm2986 = vmor %vm2938, %vm2970
    %vm2987 = vmor %vm2939, %vm2971
    %vm2988 = vmand %vm2860, %vm2972
    %vm2989 = vmand %vm2861, %vm2973
    %vm2990 = vmand %vm2862, %vm2974
    %vm2991 = vmand %vm2863, %vm2975
    %vm2992 = vmand %vm2864, %vm2976
    %vm2993 = vmand %vm2865, %vm2977
    %vm2994 = vmand %vm2866, %vm2978
    %vm2995 = vmand %vm2867, %vm2979
    %vm2996 = vmand %vm2868, %vm2980
    %vm2997 = vmand %vm2869, %vm2981
    %vm2998 = vmand %vm2870, %vm2982
    %vm2999 = vmand %vm2871, %vm2983
    %vm3000 = vmand %vm2872, %vm2984
    %vm3001 = vmand %vm2873, %vm2985
    %vm3002 = vmand %vm2874, %vm2986
    %vm3003 = vmand %vm2875, %vm2987
    %v3004 = vsel %vm2988, 1.0, 0.0
    %v3005 = vsel %vm2989, 1.0, 0.0
    %v3006 = vsel %vm2990, 1.0, 0.0
    %v3007 = vsel %vm2991, 1.0, 0.0
    %v3008 = vsel %vm2992, 1.0, 0.0
    %v3009 = vsel %vm2993, 1.0, 0.0
    %v3010 = vsel %vm2994, 1.0, 0.0
    %v3011 = vsel %vm2995, 1.0, 0.0
    %v3012 = vsel %vm2996, 1.0, 0.0
    %v3013 = vsel %vm2997, 1.0, 0.0
    %v3014 = vsel %vm2998, 1.0, 0.0
    %v3015 = vsel %vm2999, 1.0, 0.0
    %v3016 = vsel %vm3000, 1.0, 0.0
    %v3017 = vsel %vm3001, 1.0, 0.0
    %v3018 = vsel %vm3002, 1.0, 0.0
    %v3019 = vsel %vm3003, 1.0, 0.0
    %v3020 = vadd.f32 %v2812, %v2814
    %3021 = vmatprep.subr.mxu0 0.0
    %3022 = vmatpush1.msra.mxu0 %v3004
    %3023 = vmatprep.subr.mxu0 0.0
    %3024 = vmatpush1.msra.mxu0 %v3005
    %3025 = vmatprep.subr.mxu0 0.0
    %3026 = vmatpush1.msra.mxu0 %v3006
    %3027 = vmatprep.subr.mxu0 0.0
    %3028 = vmatpush1.msra.mxu0 %v3007
    %3029 = vmatprep.subr.mxu0 0.0
    %3030 = vmatpush1.msra.mxu0 %v3008
    %3031 = vmatprep.subr.mxu0 0.0
    %3032 = vmatpush1.msra.mxu0 %v3009
    %3033 = vmatprep.subr.mxu0 0.0
    %3034 = vmatpush1.msra.mxu0 %v3010
    %3035 = vmatprep.subr.mxu0 0.0
    %3036 = vmatpush1.msra.mxu0 %v3011
    %3037 = vmatprep.subr.mxu0 0.0
    %3038 = vmatpush1.msra.mxu0 %v3012
    %3039 = vmatprep.subr.mxu0 0.0
    %3040 = vmatpush1.msra.mxu0 %v3013
    %3041 = vmatprep.subr.mxu0 0.0
    %3042 = vmatpush1.msra.mxu0 %v3014
    %3043 = vmatprep.subr.mxu0 0.0
    %3044 = vmatpush1.msra.mxu0 %v3015
    %3045 = vmatprep.subr.mxu0 0.0
    %3046 = vmatpush1.msra.mxu0 %v3016
    %3047 = vmatprep.subr.mxu0 0.0
    %3048 = vmatpush1.msra.mxu0 %v3017
    %3049 = vmatprep.subr.mxu0 0.0
    %3050 = vmatpush1.msra.mxu0 %v3018
    %3051 = vmatprep.subr.mxu0 0.0
    %3052 = vmatpush1.msra.mxu0 %v3019
    %3053 = vmatprep.subr.mxu0 0.0
    %3054 = vmatpush1.msra.mxu0 0.0
    %3055 = vmatprep.subr.mxu0 0.0
    %3056 = vmatpush1.msra.mxu0 0.0
    %3057 = vmatprep.subr.mxu0 0.0
    %3058 = vmatpush1.msra.mxu0 0.0
    %3059 = vmatprep.subr.mxu0 0.0
    %3060 = vmatpush1.msra.mxu0 0.0
    %3061 = vmatprep.subr.mxu0 0.0
    %3062 = vmatpush1.msra.mxu0 0.0
    %3063 = vmatprep.subr.mxu0 0.0
    %3064 = vmatpush1.msra.mxu0 0.0
    %3065 = vmatprep.subr.mxu0 0.0
    %3066 = vmatpush1.msra.mxu0 0.0
    %3067 = vmatprep.subr.mxu0 0.0
    %3068 = vmatpush1.msra.mxu0 0.0
    %3069 = vmatprep.subr.mxu0 0.0
    %3070 = vmatpush1.msra.mxu0 0.0
    %3071 = vmatprep.subr.mxu0 0.0
    %3072 = vmatpush1.msra.mxu0 0.0
    %3073 = vmatprep.subr.mxu0 0.0
    %3074 = vmatpush1.msra.mxu0 0.0
    %3075 = vmatprep.subr.mxu0 0.0
    %3076 = vmatpush1.msra.mxu0 0.0
    %3077 = vmatprep.subr.mxu0 0.0
    %3078 = vmatpush1.msra.mxu0 0.0
    %3079 = vmatprep.subr.mxu0 0.0
    %3080 = vmatpush1.msra.mxu0 0.0
    %3081 = vmatprep.subr.mxu0 0.0
    %3082 = vmatpush1.msra.mxu0 0.0
    %3083 = vmatprep.subr.mxu0 0.0
    %3084 = vmatpush1.msra.mxu0 0.0
    %3085 = vmatprep.mubr.f32.mxu0 0.0
    %v3086 = vand.u32 %v2813, 4294901760
    %v3087 = vsub.f32 %v2813, %v3086
    %v3088 = vand.u32 %v3087, 4294901760
    %v3089 = vsub.f32 %v3087, %v3088
    %v3090 = vand.u32 %v3089, 4294901760
    %3091 = vmatmul.mubr.f32.gmra.mrb[0].mxu0 %v3090
    %v3092 = vpop.f32.mrb[0].mxu0
    %v3093 = vadd.f32 0.0, %v3092
    %v3094 = vpop.f32.mrb[0].mxu0
    %3095 = vdwg.mxu0
    %3096 = vmatprep.subr.mxu0 0.0
    %v3097 = vsub.f32 %v3004, %v3004
    %v3098 = vand.u32 %v3097, 4294901760
    %v3099 = vsub.f32 %v3097, %v3098
    %v3100 = vand.u32 %v3099, 4294901760
    %3101 = vmatpush1.msra.mxu0 %v3100
    %3102 = vmatprep.subr.mxu0 0.0
    %v3103 = vsub.f32 %v3005, %v3005
    %v3104 = vand.u32 %v3103, 4294901760
    %v3105 = vsub.f32 %v3103, %v3104
    %v3106 = vand.u32 %v3105, 4294901760
    %3107 = vmatpush1.msra.mxu0 %v3106
    %3108 = vmatprep.subr.mxu0 0.0
    %v3109 = vsub.f32 %v3006, %v3006
    %v3110 = vand.u32 %v3109, 4294901760
    %v3111 = vsub.f32 %v3109, %v3110
    %v3112 = vand.u32 %v3111, 4294901760
    %3113 = vmatpush1.msra.mxu0 %v3112
    %3114 = vmatprep.subr.mxu0 0.0
    %v3115 = vsub.f32 %v3007, %v3007
    %v3116 = vand.u32 %v3115, 4294901760
    %v3117 = vsub.f32 %v3115, %v3116
    %v3118 = vand.u32 %v3117, 4294901760
    %3119 = vmatpush1.msra.mxu0 %v3118
    %3120 = vmatprep.subr.mxu0 0.0
    %v3121 = vsub.f32 %v3008, %v3008
    %v3122 = vand.u32 %v3121, 4294901760
    %v3123 = vsub.f32 %v3121, %v3122
    %v3124 = vand.u32 %v3123, 4294901760
    %3125 = vmatpush1.msra.mxu0 %v3124
    %3126 = vmatprep.subr.mxu0 0.0
    %v3127 = vsub.f32 %v3009, %v3009
    %v3128 = vand.u32 %v3127, 4294901760
    %v3129 = vsub.f32 %v3127, %v3128
    %v3130 = vand.u32 %v3129, 4294901760
    %3131 = vmatpush1.msra.mxu0 %v3130
    %3132 = vmatprep.subr.mxu0 0.0
    %v3133 = vsub.f32 %v3010, %v3010
    %v3134 = vand.u32 %v3133, 4294901760
    %v3135 = vsub.f32 %v3133, %v3134
    %v3136 = vand.u32 %v3135, 4294901760
    %3137 = vmatpush1.msra.mxu0 %v3136
    %3138 = vmatprep.subr.mxu0 0.0
    %v3139 = vsub.f32 %v3011, %v3011
    %v3140 = vand.u32 %v3139, 4294901760
    %v3141 = vsub.f32 %v3139, %v3140
    %v3142 = vand.u32 %v3141, 4294901760
    %3143 = vmatpush1.msra.mxu0 %v3142
    %3144 = vmatprep.subr.mxu0 0.0
    %v3145 = vsub.f32 %v3012, %v3012
    %v3146 = vand.u32 %v3145, 4294901760
    %v3147 = vsub.f32 %v3145, %v3146
    %v3148 = vand.u32 %v3147, 4294901760
    %3149 = vmatpush1.msra.mxu0 %v3148
    %3150 = vmatprep.subr.mxu0 0.0
    %v3151 = vsub.f32 %v3013, %v3013
    %v3152 = vand.u32 %v3151, 4294901760
    %v3153 = vsub.f32 %v3151, %v3152
    %v3154 = vand.u32 %v3153, 4294901760
    %3155 = vmatpush1.msra.mxu0 %v3154
    %3156 = vmatprep.subr.mxu0 0.0
    %v3157 = vsub.f32 %v3014, %v3014
    %v3158 = vand.u32 %v3157, 4294901760
    %v3159 = vsub.f32 %v3157, %v3158
    %v3160 = vand.u32 %v3159, 4294901760
    %3161 = vmatpush1.msra.mxu0 %v3160
    %3162 = vmatprep.subr.mxu0 0.0
    %v3163 = vsub.f32 %v3015, %v3015
    %v3164 = vand.u32 %v3163, 4294901760
    %v3165 = vsub.f32 %v3163, %v3164
    %v3166 = vand.u32 %v3165, 4294901760
    %3167 = vmatpush1.msra.mxu0 %v3166
    %3168 = vmatprep.subr.mxu0 0.0
    %v3169 = vsub.f32 %v3016, %v3016
    %v3170 = vand.u32 %v3169, 4294901760
    %v3171 = vsub.f32 %v3169, %v3170
    %v3172 = vand.u32 %v3171, 4294901760
    %3173 = vmatpush1.msra.mxu0 %v3172
    %3174 = vmatprep.subr.mxu0 0.0
    %v3175 = vsub.f32 %v3017, %v3017
    %v3176 = vand.u32 %v3175, 4294901760
    %v3177 = vsub.f32 %v3175, %v3176
    %v3178 = vand.u32 %v3177, 4294901760
    %3179 = vmatpush1.msra.mxu0 %v3178
    %3180 = vmatprep.subr.mxu0 0.0
    %v3181 = vsub.f32 %v3018, %v3018
    %v3182 = vand.u32 %v3181, 4294901760
    %v3183 = vsub.f32 %v3181, %v3182
    %v3184 = vand.u32 %v3183, 4294901760
    %3185 = vmatpush1.msra.mxu0 %v3184
    %3186 = vmatprep.subr.mxu0 0.0
    %v3187 = vsub.f32 %v3019, %v3019
    %v3188 = vand.u32 %v3187, 4294901760
    %v3189 = vsub.f32 %v3187, %v3188
    %v3190 = vand.u32 %v3189, 4294901760
    %3191 = vmatpush1.msra.mxu0 %v3190
    %3192 = vmatprep.subr.mxu0 0.0
    %3193 = vmatpush1.msra.mxu0 0.0
    %3194 = vmatprep.subr.mxu0 0.0
    %3195 = vmatpush1.msra.mxu0 0.0
    %3196 = vmatprep.subr.mxu0 0.0
    %3197 = vmatpush1.msra.mxu0 0.0
    %3198 = vmatprep.subr.mxu0 0.0
    %3199 = vmatpush1.msra.mxu0 0.0
    %3200 = vmatprep.subr.mxu0 0.0
    %3201 = vmatpush1.msra.mxu0 0.0
    %3202 = vmatprep.subr.mxu0 0.0
    %3203 = vmatpush1.msra.mxu0 0.0
    %3204 = vmatprep.subr.mxu0 0.0
    %3205 = vmatpush1.msra.mxu0 0.0
    %3206 = vmatprep.subr.mxu0 0.0
    %3207 = vmatpush1.msra.mxu0 0.0
    %3208 = vmatprep.subr.mxu0 0.0
    %3209 = vmatpush1.msra.mxu0 0.0
    %3210 = vmatprep.subr.mxu0 0.0
    %3211 = vmatpush1.msra.mxu0 0.0
    %3212 = vmatprep.subr.mxu0 0.0
    %3213 = vmatpush1.msra.mxu0 0.0
    %3214 = vmatprep.subr.mxu0 0.0
    %3215 = vmatpush1.msra.mxu0 0.0
    %3216 = vmatprep.subr.mxu0 0.0
    %3217 = vmatpush1.msra.mxu0 0.0
    %3218 = vmatprep.subr.mxu0 0.0
    %3219 = vmatpush1.msra.mxu0 0.0
    %3220 = vmatprep.subr.mxu0 0.0
    %3221 = vmatpush1.msra.mxu0 0.0
    %3222 = vmatprep.subr.mxu0 0.0
    %3223 = vmatpush1.msra.mxu0 0.0
    %3224 = vmatprep.mubr.f32.mxu0 0.0
    %v3225 = vand.u32 %v2813, 4294901760
    %3226 = vmatmul.mubr.f32.gmra.mrb[0].mxu0 %v3225
    %v3227 = vpop.f32.mrb[0].mxu0
    %v3228 = vadd.f32 %v3093, %v3227
    %v3229 = vpop.f32.mrb[0].mxu0
    %3230 = vdwg.mxu0
    %3231 = vmatprep.subr.mxu0 0.0
    %v3232 = vsub.f32 %v3004, %v3004
    %3233 = vmatpush1.msra.mxu0 %v3232
    %3234 = vmatprep.subr.mxu0 0.0
    %v3235 = vsub.f32 %v3005, %v3005
    %3236 = vmatpush1.msra.mxu0 %v3235
    %3237 = vmatprep.subr.mxu0 0.0
    %v3238 = vsub.f32 %v3006, %v3006
    %3239 = vmatpush1.msra.mxu0 %v3238
    %3240 = vmatprep.subr.mxu0 0.0
    %v3241 = vsub.f32 %v3007, %v3007
    %3242 = vmatpush1.msra.mxu0 %v3241
    %3243 = vmatprep.subr.mxu0 0.0
    %v3244 = vsub.f32 %v3008, %v3008
    %3245 = vmatpush1.msra.mxu0 %v3244
    %3246 = vmatprep.subr.mxu0 0.0
    %v3247 = vsub.f32 %v3009, %v3009
    %3248 = vmatpush1.msra.mxu0 %v3247
    %3249 = vmatprep.subr.mxu0 0.0
    %v3250 = vsub.f32 %v3010, %v3010
    %3251 = vmatpush1.msra.mxu0 %v3250
    %3252 = vmatprep.subr.mxu0 0.0
    %v3253 = vsub.f32 %v3011, %v3011
    %3254 = vmatpush1.msra.mxu0 %v3253
    %3255 = vmatprep.subr.mxu0 0.0
    %v3256 = vsub.f32 %v3012, %v3012
    %3257 = vmatpush1.msra.mxu0 %v3256
    %3258 = vmatprep.subr.mxu0 0.0
    %v3259 = vsub.f32 %v3013, %v3013
    %3260 = vmatpush1.msra.mxu0 %v3259
    %3261 = vmatprep.subr.mxu0 0.0
    %v3262 = vsub.f32 %v3014, %v3014
    %3263 = vmatpush1.msra.mxu0 %v3262
    %3264 = vmatprep.subr.mxu0 0.0
    %v3265 = vsub.f32 %v3015, %v3015
    %3266 = vmatpush1.msra.mxu0 %v3265
    %3267 = vmatprep.subr.mxu0 0.0
    %v3268 = vsub.f32 %v3016, %v3016
    %3269 = vmatpush1.msra.mxu0 %v3268
    %3270 = vmatprep.subr.mxu0 0.0
    %v3271 = vsub.f32 %v3017, %v3017
    %3272 = vmatpush1.msra.mxu0 %v3271
    %3273 = vmatprep.subr.mxu0 0.0
    %v3274 = vsub.f32 %v3018, %v3018
    %3275 = vmatpush1.msra.mxu0 %v3274
    %3276 = vmatprep.subr.mxu0 0.0
    %v3277 = vsub.f32 %v3019, %v3019
    %3278 = vmatpush1.msra.mxu0 %v3277
    %3279 = vmatprep.subr.mxu0 0.0
    %3280 = vmatpush1.msra.mxu0 0.0
    %3281 = vmatprep.subr.mxu0 0.0
    %3282 = vmatpush1.msra.mxu0 0.0
    %3283 = vmatprep.subr.mxu0 0.0
    %3284 = vmatpush1.msra.mxu0 0.0
    %3285 = vmatprep.subr.mxu0 0.0
    %3286 = vmatpush1.msra.mxu0 0.0
    %3287 = vmatprep.subr.mxu0 0.0
    %3288 = vmatpush1.msra.mxu0 0.0
    %3289 = vmatprep.subr.mxu0 0.0
    %3290 = vmatpush1.msra.mxu0 0.0
    %3291 = vmatprep.subr.mxu0 0.0
    %3292 = vmatpush1.msra.mxu0 0.0
    %3293 = vmatprep.subr.mxu0 0.0
    %3294 = vmatpush1.msra.mxu0 0.0
    %3295 = vmatprep.subr.mxu0 0.0
    %3296 = vmatpush1.msra.mxu0 0.0
    %3297 = vmatprep.subr.mxu0 0.0
    %3298 = vmatpush1.msra.mxu0 0.0
    %3299 = vmatprep.subr.mxu0 0.0
    %3300 = vmatpush1.msra.mxu0 0.0
    %3301 = vmatprep.subr.mxu0 0.0
    %3302 = vmatpush1.msra.mxu0 0.0
    %3303 = vmatprep.subr.mxu0 0.0
    %3304 = vmatpush1.msra.mxu0 0.0
    %3305 = vmatprep.subr.mxu0 0.0
    %3306 = vmatpush1.msra.mxu0 0.0
    %3307 = vmatprep.subr.mxu0 0.0
    %3308 = vmatpush1.msra.mxu0 0.0
    %3309 = vmatprep.subr.mxu0 0.0
    %3310 = vmatpush1.msra.mxu0 0.0
    %3311 = vmatprep.mubr.f32.mxu0 0.0
    %v3312 = vand.u32 %v2813, 4294901760
    %v3313 = vsub.f32 %v2813, %v3312
    %3314 = vmatmul.mubr.f32.gmra.mrb[0].mxu0 %v3313
    %v3315 = vpop.f32.mrb[0].mxu0
    %v3316 = vadd.f32 %v3228, %v3315
    %v3317 = vpop.f32.mrb[0].mxu0
    %3318 = vdwg.mxu0
    %3319 = vmatprep.subr.mxu0 0.0
    %3320 = vmatpush1.msra.mxu0 %v3004
    %3321 = vmatprep.subr.mxu0 0.0
    %3322 = vmatpush1.msra.mxu0 %v3005
    %3323 = vmatprep.subr.mxu0 0.0
    %3324 = vmatpush1.msra.mxu0 %v3006
    %3325 = vmatprep.subr.mxu0 0.0
    %3326 = vmatpush1.msra.mxu0 %v3007
    %3327 = vmatprep.subr.mxu0 0.0
    %3328 = vmatpush1.msra.mxu0 %v3008
    %3329 = vmatprep.subr.mxu0 0.0
    %3330 = vmatpush1.msra.mxu0 %v3009
    %3331 = vmatprep.subr.mxu0 0.0
    %3332 = vmatpush1.msra.mxu0 %v3010
    %3333 = vmatprep.subr.mxu0 0.0
    %3334 = vmatpush1.msra.mxu0 %v3011
    %3335 = vmatprep.subr.mxu0 0.0
    %3336 = vmatpush1.msra.mxu0 %v3012
    %3337 = vmatprep.subr.mxu0 0.0
    %3338 = vmatpush1.msra.mxu0 %v3013
    %3339 = vmatprep.subr.mxu0 0.0
    %3340 = vmatpush1.msra.mxu0 %v3014
    %3341 = vmatprep.subr.mxu0 0.0
    %3342 = vmatpush1.msra.mxu0 %v3015
    %3343 = vmatprep.subr.mxu0 0.0
    %3344 = vmatpush1.msra.mxu0 %v3016
    %3345 = vmatprep.subr.mxu0 0.0
    %3346 = vmatpush1.msra.mxu0 %v3017
    %3347 = vmatprep.subr.mxu0 0.0
    %3348 = vmatpush1.msra.mxu0 %v3018
    %3349 = vmatprep.subr.mxu0 0.0
    %3350 = vmatpush1.msra.mxu0 %v3019
    %3351 = vmatprep.subr.mxu0 0.0
    %3352 = vmatpush1.msra.mxu0 0.0
    %3353 = vmatprep.subr.mxu0 0.0
    %3354 = vmatpush1.msra.mxu0 0.0
    %3355 = vmatprep.subr.mxu0 0.0
    %3356 = vmatpush1.msra.mxu0 0.0
    %3357 = vmatprep.subr.mxu0 0.0
    %3358 = vmatpush1.msra.mxu0 0.0
    %3359 = vmatprep.subr.mxu0 0.0
    %3360 = vmatpush1.msra.mxu0 0.0
    %3361 = vmatprep.subr.mxu0 0.0
    %3362 = vmatpush1.msra.mxu0 0.0
    %3363 = vmatprep.subr.mxu0 0.0
    %3364 = vmatpush1.msra.mxu0 0.0
    %3365 = vmatprep.subr.mxu0 0.0
    %3366 = vmatpush1.msra.mxu0 0.0
    %3367 = vmatprep.subr.mxu0 0.0
    %3368 = vmatpush1.msra.mxu0 0.0
    %3369 = vmatprep.subr.mxu0 0.0
    %3370 = vmatpush1.msra.mxu0 0.0
    %3371 = vmatprep.subr.mxu0 0.0
    %3372 = vmatpush1.msra.mxu0 0.0
    %3373 = vmatprep.subr.mxu0 0.0
    %3374 = vmatpush1.msra.mxu0 0.0
    %3375 = vmatprep.subr.mxu0 0.0
    %3376 = vmatpush1.msra.mxu0 0.0
    %3377 = vmatprep.subr.mxu0 0.0
    %3378 = vmatpush1.msra.mxu0 0.0
    %3379 = vmatprep.subr.mxu0 0.0
    %3380 = vmatpush1.msra.mxu0 0.0
    %3381 = vmatprep.subr.mxu0 0.0
    %3382 = vmatpush1.msra.mxu0 0.0
    %3383 = vmatprep.mubr.f32.mxu0 0.0
    %v3384 = vand.u32 %v2813, 4294901760
    %v3385 = vsub.f32 %v2813, %v3384
    %v3386 = vand.u32 %v3385, 4294901760
    %3387 = vmatmul.mubr.f32.gmra.mrb[0].mxu0 %v3386
    %v3388 = vpop.f32.mrb[0].mxu0
    %v3389 = vadd.f32 %v3316, %v3388
    %v3390 = vpop.f32.mrb[0].mxu0
    %3391 = vdwg.mxu0
    %3392 = vmatprep.subr.mxu0 0.0
    %v3393 = vsub.f32 %v3004, %v3004
    %v3394 = vand.u32 %v3393, 4294901760
    %3395 = vmatpush1.msra.mxu0 %v3394
    %3396 = vmatprep.subr.mxu0 0.0
    %v3397 = vsub.f32 %v3005, %v3005
    %v3398 = vand.u32 %v3397, 4294901760
    %3399 = vmatpush1.msra.mxu0 %v3398
    %3400 = vmatprep.subr.mxu0 0.0
    %v3401 = vsub.f32 %v3006, %v3006
    %v3402 = vand.u32 %v3401, 4294901760
    %3403 = vmatpush1.msra.mxu0 %v3402
    %3404 = vmatprep.subr.mxu0 0.0
    %v3405 = vsub.f32 %v3007, %v3007
    %v3406 = vand.u32 %v3405, 4294901760
    %3407 = vmatpush1.msra.mxu0 %v3406
    %3408 = vmatprep.subr.mxu0 0.0
    %v3409 = vsub.f32 %v3008, %v3008
    %v3410 = vand.u32 %v3409, 4294901760
    %3411 = vmatpush1.msra.mxu0 %v3410
    %3412 = vmatprep.subr.mxu0 0.0
    %v3413 = vsub.f32 %v3009, %v3009
    %v3414 = vand.u32 %v3413, 4294901760
    %3415 = vmatpush1.msra.mxu0 %v3414
    %3416 = vmatprep.subr.mxu0 0.0
    %v3417 = vsub.f32 %v3010, %v3010
    %v3418 = vand.u32 %v3417, 4294901760
    %3419 = vmatpush1.msra.mxu0 %v3418
    %3420 = vmatprep.subr.mxu0 0.0
    %v3421 = vsub.f32 %v3011, %v3011
    %v3422 = vand.u32 %v3421, 4294901760
    %3423 = vmatpush1.msra.mxu0 %v3422
    %3424 = vmatprep.subr.mxu0 0.0
    %v3425 = vsub.f32 %v3012, %v3012
    %v3426 = vand.u32 %v3425, 4294901760
    %3427 = vmatpush1.msra.mxu0 %v3426
    %3428 = vmatprep.subr.mxu0 0.0
    %v3429 = vsub.f32 %v3013, %v3013
    %v3430 = vand.u32 %v3429, 4294901760
    %3431 = vmatpush1.msra.mxu0 %v3430
    %3432 = vmatprep.subr.mxu0 0.0
    %v3433 = vsub.f32 %v3014, %v3014
    %v3434 = vand.u32 %v3433, 4294901760
    %3435 = vmatpush1.msra.mxu0 %v3434
    %3436 = vmatprep.subr.mxu0 0.0
    %v3437 = vsub.f32 %v3015, %v3015
    %v3438 = vand.u32 %v3437, 4294901760
    %3439 = vmatpush1.msra.mxu0 %v3438
    %3440 = vmatprep.subr.mxu0 0.0
    %v3441 = vsub.f32 %v3016, %v3016
    %v3442 = vand.u32 %v3441, 4294901760
    %3443 = vmatpush1.msra.mxu0 %v3442
    %3444 = vmatprep.subr.mxu0 0.0
    %v3445 = vsub.f32 %v3017, %v3017
    %v3446 = vand.u32 %v3445, 4294901760
    %3447 = vmatpush1.msra.mxu0 %v3446
    %3448 = vmatprep.subr.mxu0 0.0
    %v3449 = vsub.f32 %v3018, %v3018
    %v3450 = vand.u32 %v3449, 4294901760
    %3451 = vmatpush1.msra.mxu0 %v3450
    %3452 = vmatprep.subr.mxu0 0.0
    %v3453 = vsub.f32 %v3019, %v3019
    %v3454 = vand.u32 %v3453, 4294901760
    %3455 = vmatpush1.msra.mxu0 %v3454
    %3456 = vmatprep.subr.mxu0 0.0
    %3457 = vmatpush1.msra.mxu0 0.0
    %3458 = vmatprep.subr.mxu0 0.0
    %3459 = vmatpush1.msra.mxu0 0.0
    %3460 = vmatprep.subr.mxu0 0.0
    %3461 = vmatpush1.msra.mxu0 0.0
    %3462 = vmatprep.subr.mxu0 0.0
    %3463 = vmatpush1.msra.mxu0 0.0
    %3464 = vmatprep.subr.mxu0 0.0
    %3465 = vmatpush1.msra.mxu0 0.0
    %3466 = vmatprep.subr.mxu0 0.0
    %3467 = vmatpush1.msra.mxu0 0.0
    %3468 = vmatprep.subr.mxu0 0.0
    %3469 = vmatpush1.msra.mxu0 0.0
    %3470 = vmatprep.subr.mxu0 0.0
    %3471 = vmatpush1.msra.mxu0 0.0
    %3472 = vmatprep.subr.mxu0 0.0
    %3473 = vmatpush1.msra.mxu0 0.0
    %3474 = vmatprep.subr.mxu0 0.0
    %3475 = vmatpush1.msra.mxu0 0.0
    %3476 = vmatprep.subr.mxu0 0.0
    %3477 = vmatpush1.msra.mxu0 0.0
    %3478 = vmatprep.subr.mxu0 0.0
    %3479 = vmatpush1.msra.mxu0 0.0
    %3480 = vmatprep.subr.mxu0 0.0
    %3481 = vmatpush1.msra.mxu0 0.0
    %3482 = vmatprep.subr.mxu0 0.0
    %3483 = vmatpush1.msra.mxu0 0.0
    %3484 = vmatprep.subr.mxu0 0.0
    %3485 = vmatpush1.msra.mxu0 0.0
    %3486 = vmatprep.subr.mxu0 0.0
    %3487 = vmatpush1.msra.mxu0 0.0
    %3488 = vmatprep.mubr.f32.mxu0 0.0
    %v3489 = vand.u32 %v2813, 4294901760
    %3490 = vmatmul.mubr.f32.gmra.mrb[0].mxu0 %v3489
    %v3491 = vpop.f32.mrb[0].mxu0
    %v3492 = vadd.f32 %v3389, %v3491
    %v3493 = vpop.f32.mrb[0].mxu0
    %3494 = vdwg.mxu0
    %3495 = vmatprep.subr.mxu0 0.0
    %3496 = vmatpush1.msra.mxu0 %v3004
    %3497 = vmatprep.subr.mxu0 0.0
    %3498 = vmatpush1.msra.mxu0 %v3005
    %3499 = vmatprep.subr.mxu0 0.0
    %3500 = vmatpush1.msra.mxu0 %v3006
    %3501 = vmatprep.subr.mxu0 0.0
    %3502 = vmatpush1.msra.mxu0 %v3007
    %3503 = vmatprep.subr.mxu0 0.0
    %3504 = vmatpush1.msra.mxu0 %v3008
    %3505 = vmatprep.subr.mxu0 0.0
    %3506 = vmatpush1.msra.mxu0 %v3009
    %3507 = vmatprep.subr.mxu0 0.0
    %3508 = vmatpush1.msra.mxu0 %v3010
    %3509 = vmatprep.subr.mxu0 0.0
    %3510 = vmatpush1.msra.mxu0 %v3011
    %3511 = vmatprep.subr.mxu0 0.0
    %3512 = vmatpush1.msra.mxu0 %v3012
    %3513 = vmatprep.subr.mxu0 0.0
    %3514 = vmatpush1.msra.mxu0 %v3013
    %3515 = vmatprep.subr.mxu0 0.0
    %3516 = vmatpush1.msra.mxu0 %v3014
    %3517 = vmatprep.subr.mxu0 0.0
    %3518 = vmatpush1.msra.mxu0 %v3015
    %3519 = vmatprep.subr.mxu0 0.0
    %3520 = vmatpush1.msra.mxu0 %v3016
    %3521 = vmatprep.subr.mxu0 0.0
    %3522 = vmatpush1.msra.mxu0 %v3017
    %3523 = vmatprep.subr.mxu0 0.0
    %3524 = vmatpush1.msra.mxu0 %v3018
    %3525 = vmatprep.subr.mxu0 0.0
    %3526 = vmatpush1.msra.mxu0 %v3019
    %3527 = vmatprep.subr.mxu0 0.0
    %3528 = vmatpush1.msra.mxu0 0.0
    %3529 = vmatprep.subr.mxu0 0.0
    %3530 = vmatpush1.msra.mxu0 0.0
    %3531 = vmatprep.subr.mxu0 0.0
    %3532 = vmatpush1.msra.mxu0 0.0
    %3533 = vmatprep.subr.mxu0 0.0
    %3534 = vmatpush1.msra.mxu0 0.0
    %3535 = vmatprep.subr.mxu0 0.0
    %3536 = vmatpush1.msra.mxu0 0.0
    %3537 = vmatprep.subr.mxu0 0.0
    %3538 = vmatpush1.msra.mxu0 0.0
    %3539 = vmatprep.subr.mxu0 0.0
    %3540 = vmatpush1.msra.mxu0 0.0
    %3541 = vmatprep.subr.mxu0 0.0
    %3542 = vmatpush1.msra.mxu0 0.0
    %3543 = vmatprep.subr.mxu0 0.0
    %3544 = vmatpush1.msra.mxu0 0.0
    %3545 = vmatprep.subr.mxu0 0.0
    %3546 = vmatpush1.msra.mxu0 0.0
    %3547 = vmatprep.subr.mxu0 0.0
    %3548 = vmatpush1.msra.mxu0 0.0
    %3549 = vmatprep.subr.mxu0 0.0
    %3550 = vmatpush1.msra.mxu0 0.0
    %3551 = vmatprep.subr.mxu0 0.0
    %3552 = vmatpush1.msra.mxu0 0.0
    %3553 = vmatprep.subr.mxu0 0.0
    %3554 = vmatpush1.msra.mxu0 0.0
    %3555 = vmatprep.subr.mxu0 0.0
    %3556 = vmatpush1.msra.mxu0 0.0
    %3557 = vmatprep.subr.mxu0 0.0
    %3558 = vmatpush1.msra.mxu0 0.0
    %3559 = vmatprep.mubr.f32.mxu0 0.0
    %v3560 = vand.u32 %v2813, 4294901760
    %3561 = vmatmul.mubr.f32.gmra.mrb[0].mxu0 %v3560
    %v3562 = vpop.f32.mrb[0].mxu0
    %v3563 = vadd.f32 %v3492, %v3562
    %v3564 = vpop.f32.mrb[0].mxu0
    %3565 = vdwg.mxu0
    %v3566 = vadd.f32 %v3020, %v3563
    %3567 = vst [vmem:[%s10] sm:$0xff] %v3566
    // Predicated region
    $region54: #{mynet_forward.1} parent=1 // pred_check
      _
    $region55: #{mynet_forward.1} parent=1 // pred_check_branch
      %3569 = sbr.rel (0) target = $region57
    $region56: #{mynet_forward.1} parent=1 // pred_region
      _
    $region57: #{mynet_forward.1} parent=1 // pred_fallthru
      _
    // Predicated region
    $region58: #{mynet_forward.1} parent=1 // pred_check
      _
    $region59: #{mynet_forward.1} parent=1 // pred_check_branch
      %3571 = sbr.rel (0) target = $region61
    $region60: #{mynet_forward.1} parent=1 // pred_region
      _
    $region61: #{mynet_forward.1} parent=1 // pred_fallthru
      _
    %3572 = vsyncpa [#allocation3], 1
    %3573 = vsyncpa [#allocation5], 1

</llo_original>
